<compile_context>
chip_gen: v5e
topology: v5e:2x2
jax: 0.10.0
libtpu: 0.0.40
codegen_flags: <defaults>
</compile_context>

<pallas_src>
import functools

import jax
import jax.numpy as jnp
from jax.experimental import pallas as pl
from jax.experimental.pallas import tpu as pltpu

INPUT_SIZE = 5
HIDDEN = 50
OUTPUT = 3
LAYERS = 3

HPAD = 128            # hidden padded to one full lane register
KPAD = 2 * HPAD       # fused [x_t ; h_{t-1}] contraction depth (256)
GPAD = 4 * HPAD       # packed gates (i, f, o, g), each 128-lane aligned
OUT_PAD = 128         # fc output lanes padded to 128

# packed slot -> PyTorch gate index; PyTorch order is (i, f, g, o), packed is (i, f, o, g)
GATE_PACK = (0, 1, 3, 2)


def lstm_fc_kernel(x_ref, w_ref, b_ref, w_fc_ref, b_fc_ref, out_ref,
                   *, seq_len, num_layers, hpad):
    """Whole model in one grid step, everything resident in VMEM.

    x_ref:    (T, Bp, HPAD)       f32, time-major, zero-padded features/batch
    w_ref:    (L, 2*HPAD, 4*HPAD) bf16, rows [0:HPAD)=W_ih^T, [HPAD:2*HPAD)=W_hh^T,
                                   packed gate order (i, f, o, g)
    b_ref:    (L, 1, 4*HPAD)      f32, b_ih + b_hh (zero in padded lanes)
    w_fc_ref: (HPAD, OUT_PAD)     bf16
    b_fc_ref: (1, OUT_PAD)        f32
    out_ref:  (Bp, OUT_PAD)       f32
    """
    T = seq_len
    Bp = x_ref.shape[1]
    g4 = 4 * hpad

    # Hoist bias broadcasts: JAX does not CSE broadcast_in_dim inside the unroll.
    b_bcast = [jnp.broadcast_to(b_ref[l], (Bp, g4)) for l in range(num_layers)]

    h = [jnp.zeros((Bp, hpad), jnp.float32) for _ in range(num_layers)]
    c = [jnp.zeros((Bp, hpad), jnp.float32) for _ in range(num_layers)]

    def cell(l, x_in):
        # One fused K=2*HPAD matmul: [x_t ; h_{t-1}] @ [W_ih ; W_hh] + b.
        xh = jnp.concatenate([x_in, h[l]], axis=-1).astype(jnp.bfloat16)   # (Bp, 2H)
        pre = (jnp.dot(xh, w_ref[l], preferred_element_type=jnp.float32)
               + b_bcast[l])                                               # (Bp, 4H) f32
        # Packed gate order (i, f, o, g): sigmoid via tanh on the lane-dense
        # (Bp, 3*HPAD) block (1 EUP op/elt), tanh on the last (Bp, HPAD) block.
        sig = 0.5 * jnp.tanh(0.5 * pre[:, :3 * hpad]) + 0.5
        i_g = sig[:, 0 * hpad:1 * hpad]
        f_g = sig[:, 1 * hpad:2 * hpad]
        o_g = sig[:, 2 * hpad:3 * hpad]
        g_g = jnp.tanh(pre[:, 3 * hpad:])
        c[l] = f_g * c[l] + i_g * g_g
        h[l] = o_g * jnp.tanh(c[l])

    # Wavefront (diagonal) schedule: cells with l + t = d are mutually independent,
    # so the MXU matmul of one cell can overlap the VPU/EUP gate math of another.
    # Decreasing-l order within a diagonal guarantees h[l-1] still holds its
    # timestep-t value when layer l consumes it.
    for d in range(T + num_layers - 1):
        for l in range(num_layers - 1, -1, -1):
            t = d - l
            if 0 <= t < T:
                x_in = x_ref[t] if l == 0 else h[l - 1]
                cell(l, x_in)

    # fc(lstm_out[:, -1, :]) : last-timestep hidden of the top layer (bf16 MXU op).
    h_top = h[num_layers - 1].astype(jnp.bfloat16)
    out_ref[...] = (jnp.dot(h_top, w_fc_ref[...], preferred_element_type=jnp.float32)
                    + b_fc_ref[...])


def lstm_forward(x, packed):
    w_p, b_p, w_fc_p, b_fc_p = packed
    B, T, I = x.shape
    Bp = ((B + 7) // 8) * 8                                 # pad batch to full sublanes
    # Time-major, zero-padded input: (T, Bp, HPAD).
    x_pad = jnp.zeros((T, Bp, HPAD), jnp.float32)
    x_pad = x_pad.at[:, :B, :I].set(jnp.transpose(x, (1, 0, 2)).astype(jnp.float32))

    kernel = functools.partial(lstm_fc_kernel, seq_len=T, num_layers=LAYERS, hpad=HPAD)
    out_pad = pl.pallas_call(
        kernel,
        out_shape=jax.ShapeDtypeStruct((Bp, OUT_PAD), jnp.float32),
        in_specs=[pl.BlockSpec(memory_space=pltpu.MemorySpace.VMEM)] * 5,
        out_specs=pl.BlockSpec(memory_space=pltpu.MemorySpace.VMEM),
    )(x_pad, w_p, b_p, w_fc_p, b_fc_p)
    return out_pad[:B, :OUTPUT]


def init_params(key):
    """Deterministic init matching PyTorch shapes (gate order i, f, g, o).

    Returns (packed_for_kernel, raw_for_reference).
    """
    k = 1.0 / jnp.sqrt(jnp.float32(HIDDEN))
    keys = jax.random.split(key, 4 * LAYERS + 2)
    ki = iter(range(len(keys)))

    raw_w_ih, raw_w_hh, raw_b_ih, raw_b_hh = [], [], [], []
    w_p = jnp.zeros((LAYERS, KPAD, GPAD), jnp.float32)
    b_p = jnp.zeros((LAYERS, 1, GPAD), jnp.float32)

    for l in range(LAYERS):
        in_dim = INPUT_SIZE if l == 0 else HIDDEN
        # PyTorch weight_ih_l{l}: (4H, in_dim) split per gate as (4, H, in_dim).
        wih = jax.random.uniform(keys[next(ki)], (4, HIDDEN, in_dim), jnp.float32, -k, k)
        whh = jax.random.uniform(keys[next(ki)], (4, HIDDEN, HIDDEN), jnp.float32, -k, k)
        bih = jax.random.uniform(keys[next(ki)], (4, HIDDEN), jnp.float32, -k, k)
        bhh = jax.random.uniform(keys[next(ki)], (4, HIDDEN), jnp.float32, -k, k)
        raw_w_ih.append(wih)
        raw_w_hh.append(whh)
        raw_b_ih.append(bih)
        raw_b_hh.append(bhh)

        for s, g in enumerate(GATE_PACK):
            c0 = s * HPAD
            # rows [0:HPAD)     : W_ih^T  (x_t half of the fused contraction)
            # rows [HPAD:2HPAD) : W_hh^T  (h_{t-1} half)
            w_p = w_p.at[l, :in_dim, c0:c0 + HIDDEN].set(wih[g].T)
            w_p = w_p.at[l, HPAD:HPAD + HIDDEN, c0:c0 + HIDDEN].set(whh[g].T)
            b_p = b_p.at[l, 0, c0:c0 + HIDDEN].set(bih[g] + bhh[g])

    w_fc = jax.random.uniform(keys[next(ki)], (HIDDEN, OUTPUT), jnp.float32, -k, k)
    b_fc = jax.random.uniform(keys[next(ki)], (1, OUTPUT), jnp.float32, -k, k)
    w_fc_p = jnp.zeros((HPAD, OUT_PAD), jnp.float32).at[:HIDDEN, :OUTPUT].set(w_fc)
    b_fc_p = jnp.zeros((1, OUT_PAD), jnp.float32).at[:, :OUTPUT].set(b_fc)

    packed = (w_p.astype(jnp.bfloat16), b_p, w_fc_p.astype(jnp.bfloat16), b_fc_p)
    raw = (raw_w_ih, raw_w_hh, raw_b_ih, raw_b_hh, w_fc, b_fc)
    return packed, raw


def ref_forward(x, raw):
    """Pure-JAX reference: PyTorch LSTM math with the same bf16 matmul operands
    (f32 accumulation / f32 gate math) as the kernel; matches f32 PyTorch to ~1e-2."""
    w_ih, w_hh, b_ih, b_hh, w_fc, b_fc = raw
    B, T, _ = x.shape
    layer_in = x.astype(jnp.float32)
    h = jnp.zeros((B, HIDDEN), jnp.float32)
    for l in range(LAYERS):
        h = jnp.zeros((B, HIDDEN), jnp.float32)
        c = jnp.zeros((B, HIDDEN), jnp.float32)
        outs = []
        for t in range(T):
            xt = layer_in[:, t, :]
            pre = []
            for g in range(4):                   # PyTorch gate order (i, f, g, o)
                pre.append(
                    jnp.dot(xt.astype(jnp.bfloat16), w_ih[l][g].T.astype(jnp.bfloat16),
                            preferred_element_type=jnp.float32)
                    + jnp.dot(h.astype(jnp.bfloat16), w_hh[l][g].T.astype(jnp.bfloat16),
                              preferred_element_type=jnp.float32)
                    + b_ih[l][g][None, :] + b_hh[l][g][None, :])
            i_g = jax.nn.sigmoid(pre[0])
            f_g = jax.nn.sigmoid(pre[1])
            g_g = jnp.tanh(pre[2])
            o_g = jax.nn.sigmoid(pre[3])
            c = f_g * c + i_g * g_g
            h = o_g * jnp.tanh(c)
            outs.append(h)
        layer_in = jnp.stack(outs, axis=1)
    return (jnp.dot(h.astype(jnp.bfloat16), w_fc.astype(jnp.bfloat16),
                    preferred_element_type=jnp.float32) + b_fc)


if __name__ == "__main__":
    key = jax.random.PRNGKey(0)
    pkey, xkey = jax.random.split(key)
    packed, raw = init_params(pkey)

    B, T = 2, 8
    x = jax.random.normal(xkey, (B, T, INPUT_SIZE), jnp.float32)

    out = jax.block_until_ready(lstm_forward(x, packed))
    ref = ref_forward(x, raw)

    assert out.shape == (B, OUTPUT), out.shape
    assert jnp.allclose(out, ref, atol=1e-3, rtol=1e-3), (out, ref)

    print("KERNEL_OK")
</pallas_src>

<mosaic_0001>
module attributes {stable_mosaic.version = 11 : i64} {
  func.func @lstm_fc_kernel(%arg0: memref<8x8x128xf32, #tpu.memory_space<vmem>>, %arg1: memref<3x256x512xbf16, #tpu.memory_space<vmem>>, %arg2: memref<3x1x512xf32, #tpu.memory_space<vmem>>, %arg3: memref<128x128xbf16, #tpu.memory_space<vmem>>, %arg4: memref<1x128xf32, #tpu.memory_space<vmem>>, %arg5: memref<8x128xf32, #tpu.memory_space<vmem>>) attributes {dimension_semantics = [], scalar_prefetch = 0 : i64, scratch_operands = 0 : i64, tpu.core_type = #tpu.core_type<tc>} {
    %c0 = arith.constant 0 : index
    %c0_0 = arith.constant 0 : index
    %c0_1 = arith.constant 0 : index
    %0 = vector.load %arg2[%c0, %c0_0, %c0_1] : memref<3x1x512xf32, #tpu.memory_space<vmem>>, vector<1x1x512xf32>
    %1 = vector.shape_cast %0 : vector<1x1x512xf32> to vector<1x512xf32>
    %2 = vector.shape_cast %1 : vector<1x512xf32> to vector<1x512xf32>
    %3 = vector.broadcast %2 : vector<1x512xf32> to vector<8x512xf32>
    %c1 = arith.constant 1 : index
    %c0_2 = arith.constant 0 : index
    %c0_3 = arith.constant 0 : index
    %4 = vector.load %arg2[%c1, %c0_2, %c0_3] : memref<3x1x512xf32, #tpu.memory_space<vmem>>, vector<1x1x512xf32>
    %5 = vector.shape_cast %4 : vector<1x1x512xf32> to vector<1x512xf32>
    %6 = vector.shape_cast %5 : vector<1x512xf32> to vector<1x512xf32>
    %7 = vector.broadcast %6 : vector<1x512xf32> to vector<8x512xf32>
    %c2 = arith.constant 2 : index
    %c0_4 = arith.constant 0 : index
    %c0_5 = arith.constant 0 : index
    %8 = vector.load %arg2[%c2, %c0_4, %c0_5] : memref<3x1x512xf32, #tpu.memory_space<vmem>>, vector<1x1x512xf32>
    %9 = vector.shape_cast %8 : vector<1x1x512xf32> to vector<1x512xf32>
    %10 = vector.shape_cast %9 : vector<1x512xf32> to vector<1x512xf32>
    %11 = vector.broadcast %10 : vector<1x512xf32> to vector<8x512xf32>
    %cst = arith.constant 0.000000e+00 : f32
    %12 = vector.broadcast %cst : f32 to vector<8x128xf32>
    %cst_6 = arith.constant 0.000000e+00 : f32
    %13 = vector.broadcast %cst_6 : f32 to vector<8x128xf32>
    %cst_7 = arith.constant 0.000000e+00 : f32
    %14 = vector.broadcast %cst_7 : f32 to vector<8x128xf32>
    %cst_8 = arith.constant 0.000000e+00 : f32
    %15 = vector.broadcast %cst_8 : f32 to vector<8x128xf32>
    %cst_9 = arith.constant 0.000000e+00 : f32
    %16 = vector.broadcast %cst_9 : f32 to vector<8x128xf32>
    %cst_10 = arith.constant 0.000000e+00 : f32
    %17 = vector.broadcast %cst_10 : f32 to vector<8x128xf32>
    %c0_11 = arith.constant 0 : index
    %c0_12 = arith.constant 0 : index
    %c0_13 = arith.constant 0 : index
    %18 = vector.load %arg0[%c0_11, %c0_12, %c0_13] : memref<8x8x128xf32, #tpu.memory_space<vmem>>, vector<1x8x128xf32>
    %19 = vector.shape_cast %18 : vector<1x8x128xf32> to vector<8x128xf32>
    %20 = tpu.concatenate %19, %12 in 1 : vector<8x128xf32>, vector<8x128xf32> -> vector<8x256xf32>
    %21 = arith.truncf %20 : vector<8x256xf32> to vector<8x256xbf16>
    %c0_14 = arith.constant 0 : index
    %c0_15 = arith.constant 0 : index
    %c0_16 = arith.constant 0 : index
    %22 = vector.load %arg1[%c0_14, %c0_15, %c0_16] : memref<3x256x512xbf16, #tpu.memory_space<vmem>>, vector<1x256x512xbf16>
    %23 = vector.shape_cast %22 : vector<1x256x512xbf16> to vector<256x512xbf16>
    %cst_17 = arith.constant dense<0.000000e+00> : vector<8x512xf32>
    %24 = tpu.matmul %21, %23, %cst_17 {dimension_numbers = #tpu.dot_dimension_numbers<[1], [0], [0], [1], [0, 0, 1, 1], [], []>} : vector<8x256xbf16>, vector<256x512xbf16>, vector<8x512xf32> -> vector<8x512xf32>
    %25 = arith.addf %24, %3 : vector<8x512xf32>
    %26 = vector.extract_strided_slice %25 {offsets = [0, 0], sizes = [8, 384], strides = [1, 1]} : vector<8x512xf32> to vector<8x384xf32>
    %cst_18 = arith.constant 5.000000e-01 : f32
    %27 = vector.broadcast %cst_18 : f32 to vector<8x384xf32>
    %28 = arith.mulf %27, %26 : vector<8x384xf32>
    %29 = math.tanh %28 : vector<8x384xf32>
    %cst_19 = arith.constant 5.000000e-01 : f32
    %30 = vector.broadcast %cst_19 : f32 to vector<8x384xf32>
    %31 = arith.mulf %30, %29 : vector<8x384xf32>
    %cst_20 = arith.constant 5.000000e-01 : f32
    %32 = vector.broadcast %cst_20 : f32 to vector<8x384xf32>
    %33 = arith.addf %31, %32 : vector<8x384xf32>
    %34 = vector.extract_strided_slice %33 {offsets = [0, 0], sizes = [8, 128], strides = [1, 1]} : vector<8x384xf32> to vector<8x128xf32>
    %35 = vector.extract_strided_slice %33 {offsets = [0, 128], sizes = [8, 128], strides = [1, 1]} : vector<8x384xf32> to vector<8x128xf32>
    %36 = vector.extract_strided_slice %33 {offsets = [0, 256], sizes = [8, 128], strides = [1, 1]} : vector<8x384xf32> to vector<8x128xf32>
    %37 = vector.extract_strided_slice %25 {offsets = [0, 384], sizes = [8, 128], strides = [1, 1]} : vector<8x512xf32> to vector<8x128xf32>
    %38 = math.tanh %37 : vector<8x128xf32>
    %39 = arith.mulf %35, %15 : vector<8x128xf32>
    %40 = arith.mulf %34, %38 : vector<8x128xf32>
    %41 = arith.addf %39, %40 : vector<8x128xf32>
    %42 = math.tanh %41 : vector<8x128xf32>
    %43 = arith.mulf %36, %42 : vector<8x128xf32>
    %44 = tpu.concatenate %43, %13 in 1 : vector<8x128xf32>, vector<8x128xf32> -> vector<8x256xf32>
    %45 = arith.truncf %44 : vector<8x256xf32> to vector<8x256xbf16>
    %c1_21 = arith.constant 1 : index
    %c0_22 = arith.constant 0 : index
    %c0_23 = arith.constant 0 : index
    %46 = vector.load %arg1[%c1_21, %c0_22, %c0_23] : memref<3x256x512xbf16, #tpu.memory_space<vmem>>, vector<1x256x512xbf16>
    %47 = vector.shape_cast %46 : vector<1x256x512xbf16> to vector<256x512xbf16>
    %cst_24 = arith.constant dense<0.000000e+00> : vector<8x512xf32>
    %48 = tpu.matmul %45, %47, %cst_24 {dimension_numbers = #tpu.dot_dimension_numbers<[1], [0], [0], [1], [0, 0, 1, 1], [], []>} : vector<8x256xbf16>, vector<256x512xbf16>, vector<8x512xf32> -> vector<8x512xf32>
    %49 = arith.addf %48, %7 : vector<8x512xf32>
    %50 = vector.extract_strided_slice %49 {offsets = [0, 0], sizes = [8, 384], strides = [1, 1]} : vector<8x512xf32> to vector<8x384xf32>
    %cst_25 = arith.constant 5.000000e-01 : f32
    %51 = vector.broadcast %cst_25 : f32 to vector<8x384xf32>
    %52 = arith.mulf %51, %50 : vector<8x384xf32>
    %53 = math.tanh %52 : vector<8x384xf32>
    %cst_26 = arith.constant 5.000000e-01 : f32
    %54 = vector.broadcast %cst_26 : f32 to vector<8x384xf32>
    %55 = arith.mulf %54, %53 : vector<8x384xf32>
    %cst_27 = arith.constant 5.000000e-01 : f32
    %56 = vector.broadcast %cst_27 : f32 to vector<8x384xf32>
    %57 = arith.addf %55, %56 : vector<8x384xf32>
    %58 = vector.extract_strided_slice %57 {offsets = [0, 0], sizes = [8, 128], strides = [1, 1]} : vector<8x384xf32> to vector<8x128xf32>
    %59 = vector.extract_strided_slice %57 {offsets = [0, 128], sizes = [8, 128], strides = [1, 1]} : vector<8x384xf32> to vector<8x128xf32>
    %60 = vector.extract_strided_slice %57 {offsets = [0, 256], sizes = [8, 128], strides = [1, 1]} : vector<8x384xf32> to vector<8x128xf32>
    %61 = vector.extract_strided_slice %49 {offsets = [0, 384], sizes = [8, 128], strides = [1, 1]} : vector<8x512xf32> to vector<8x128xf32>
    %62 = math.tanh %61 : vector<8x128xf32>
    %63 = arith.mulf %59, %16 : vector<8x128xf32>
    %64 = arith.mulf %58, %62 : vector<8x128xf32>
    %65 = arith.addf %63, %64 : vector<8x128xf32>
    %66 = math.tanh %65 : vector<8x128xf32>
    %67 = arith.mulf %60, %66 : vector<8x128xf32>
    %c1_28 = arith.constant 1 : index
    %c0_29 = arith.constant 0 : index
    %c0_30 = arith.constant 0 : index
    %68 = vector.load %arg0[%c1_28, %c0_29, %c0_30] : memref<8x8x128xf32, #tpu.memory_space<vmem>>, vector<1x8x128xf32>
    %69 = vector.shape_cast %68 : vector<1x8x128xf32> to vector<8x128xf32>
    %70 = tpu.concatenate %69, %43 in 1 : vector<8x128xf32>, vector<8x128xf32> -> vector<8x256xf32>
    %71 = arith.truncf %70 : vector<8x256xf32> to vector<8x256xbf16>
    %c0_31 = arith.constant 0 : index
    %c0_32 = arith.constant 0 : index
    %c0_33 = arith.constant 0 : index
    %72 = vector.load %arg1[%c0_31, %c0_32, %c0_33] : memref<3x256x512xbf16, #tpu.memory_space<vmem>>, vector<1x256x512xbf16>
    %73 = vector.shape_cast %72 : vector<1x256x512xbf16> to vector<256x512xbf16>
    %cst_34 = arith.constant dense<0.000000e+00> : vector<8x512xf32>
    %74 = tpu.matmul %71, %73, %cst_34 {dimension_numbers = #tpu.dot_dimension_numbers<[1], [0], [0], [1], [0, 0, 1, 1], [], []>} : vector<8x256xbf16>, vector<256x512xbf16>, vector<8x512xf32> -> vector<8x512xf32>
    %75 = arith.addf %74, %3 : vector<8x512xf32>
    %76 = vector.extract_strided_slice %75 {offsets = [0, 0], sizes = [8, 384], strides = [1, 1]} : vector<8x512xf32> to vector<8x384xf32>
    %cst_35 = arith.constant 5.000000e-01 : f32
    %77 = vector.broadcast %cst_35 : f32 to vector<8x384xf32>
    %78 = arith.mulf %77, %76 : vector<8x384xf32>
    %79 = math.tanh %78 : vector<8x384xf32>
    %cst_36 = arith.constant 5.000000e-01 : f32
    %80 = vector.broadcast %cst_36 : f32 to vector<8x384xf32>
    %81 = arith.mulf %80, %79 : vector<8x384xf32>
    %cst_37 = arith.constant 5.000000e-01 : f32
    %82 = vector.broadcast %cst_37 : f32 to vector<8x384xf32>
    %83 = arith.addf %81, %82 : vector<8x384xf32>
    %84 = vector.extract_strided_slice %83 {offsets = [0, 0], sizes = [8, 128], strides = [1, 1]} : vector<8x384xf32> to vector<8x128xf32>
    %85 = vector.extract_strided_slice %83 {offsets = [0, 128], sizes = [8, 128], strides = [1, 1]} : vector<8x384xf32> to vector<8x128xf32>
    %86 = vector.extract_strided_slice %83 {offsets = [0, 256], sizes = [8, 128], strides = [1, 1]} : vector<8x384xf32> to vector<8x128xf32>
    %87 = vector.extract_strided_slice %75 {offsets = [0, 384], sizes = [8, 128], strides = [1, 1]} : vector<8x512xf32> to vector<8x128xf32>
    %88 = math.tanh %87 : vector<8x128xf32>
    %89 = arith.mulf %85, %41 : vector<8x128xf32>
    %90 = arith.mulf %84, %88 : vector<8x128xf32>
    %91 = arith.addf %89, %90 : vector<8x128xf32>
    %92 = math.tanh %91 : vector<8x128xf32>
    %93 = arith.mulf %86, %92 : vector<8x128xf32>
    %94 = tpu.concatenate %67, %14 in 1 : vector<8x128xf32>, vector<8x128xf32> -> vector<8x256xf32>
    %95 = arith.truncf %94 : vector<8x256xf32> to vector<8x256xbf16>
    %c2_38 = arith.constant 2 : index
    %c0_39 = arith.constant 0 : index
    %c0_40 = arith.constant 0 : index
    %96 = vector.load %arg1[%c2_38, %c0_39, %c0_40] : memref<3x256x512xbf16, #tpu.memory_space<vmem>>, vector<1x256x512xbf16>
    %97 = vector.shape_cast %96 : vector<1x256x512xbf16> to vector<256x512xbf16>
    %cst_41 = arith.constant dense<0.000000e+00> : vector<8x512xf32>
    %98 = tpu.matmul %95, %97, %cst_41 {dimension_numbers = #tpu.dot_dimension_numbers<[1], [0], [0], [1], [0, 0, 1, 1], [], []>} : vector<8x256xbf16>, vector<256x512xbf16>, vector<8x512xf32> -> vector<8x512xf32>
    %99 = arith.addf %98, %11 : vector<8x512xf32>
    %100 = vector.extract_strided_slice %99 {offsets = [0, 0], sizes = [8, 384], strides = [1, 1]} : vector<8x512xf32> to vector<8x384xf32>
    %cst_42 = arith.constant 5.000000e-01 : f32
    %101 = vector.broadcast %cst_42 : f32 to vector<8x384xf32>
    %102 = arith.mulf %101, %100 : vector<8x384xf32>
    %103 = math.tanh %102 : vector<8x384xf32>
    %cst_43 = arith.constant 5.000000e-01 : f32
    %104 = vector.broadcast %cst_43 : f32 to vector<8x384xf32>
    %105 = arith.mulf %104, %103 : vector<8x384xf32>
    %cst_44 = arith.constant 5.000000e-01 : f32
    %106 = vector.broadcast %cst_44 : f32 to vector<8x384xf32>
    %107 = arith.addf %105, %106 : vector<8x384xf32>
    %108 = vector.extract_strided_slice %107 {offsets = [0, 0], sizes = [8, 128], strides = [1, 1]} : vector<8x384xf32> to vector<8x128xf32>
    %109 = vector.extract_strided_slice %107 {offsets = [0, 128], sizes = [8, 128], strides = [1, 1]} : vector<8x384xf32> to vector<8x128xf32>
    %110 = vector.extract_strided_slice %107 {offsets = [0, 256], sizes = [8, 128], strides = [1, 1]} : vector<8x384xf32> to vector<8x128xf32>
    %111 = vector.extract_strided_slice %99 {offsets = [0, 384], sizes = [8, 128], strides = [1, 1]} : vector<8x512xf32> to vector<8x128xf32>
    %112 = math.tanh %111 : vector<8x128xf32>
    %113 = arith.mulf %109, %17 : vector<8x128xf32>
    %114 = arith.mulf %108, %112 : vector<8x128xf32>
    %115 = arith.addf %113, %114 : vector<8x128xf32>
    %116 = math.tanh %115 : vector<8x128xf32>
    %117 = arith.mulf %110, %116 : vector<8x128xf32>
    %118 = tpu.concatenate %93, %67 in 1 : vector<8x128xf32>, vector<8x128xf32> -> vector<8x256xf32>
    %119 = arith.truncf %118 : vector<8x256xf32> to vector<8x256xbf16>
    %c1_45 = arith.constant 1 : index
    %c0_46 = arith.constant 0 : index
    %c0_47 = arith.constant 0 : index
    %120 = vector.load %arg1[%c1_45, %c0_46, %c0_47] : memref<3x256x512xbf16, #tpu.memory_space<vmem>>, vector<1x256x512xbf16>
    %121 = vector.shape_cast %120 : vector<1x256x512xbf16> to vector<256x512xbf16>
    %cst_48 = arith.constant dense<0.000000e+00> : vector<8x512xf32>
    %122 = tpu.matmul %119, %121, %cst_48 {dimension_numbers = #tpu.dot_dimension_numbers<[1], [0], [0], [1], [0, 0, 1, 1], [], []>} : vector<8x256xbf16>, vector<256x512xbf16>, vector<8x512xf32> -> vector<8x512xf32>
    %123 = arith.addf %122, %7 : vector<8x512xf32>
    %124 = vector.extract_strided_slice %123 {offsets = [0, 0], sizes = [8, 384], strides = [1, 1]} : vector<8x512xf32> to vector<8x384xf32>
    %cst_49 = arith.constant 5.000000e-01 : f32
    %125 = vector.broadcast %cst_49 : f32 to vector<8x384xf32>
    %126 = arith.mulf %125, %124 : vector<8x384xf32>
    %127 = math.tanh %126 : vector<8x384xf32>
    %cst_50 = arith.constant 5.000000e-01 : f32
    %128 = vector.broadcast %cst_50 : f32 to vector<8x384xf32>
    %129 = arith.mulf %128, %127 : vector<8x384xf32>
    %cst_51 = arith.constant 5.000000e-01 : f32
    %130 = vector.broadcast %cst_51 : f32 to vector<8x384xf32>
    %131 = arith.addf %129, %130 : vector<8x384xf32>
    %132 = vector.extract_strided_slice %131 {offsets = [0, 0], sizes = [8, 128], strides = [1, 1]} : vector<8x384xf32> to vector<8x128xf32>
    %133 = vector.extract_strided_slice %131 {offsets = [0, 128], sizes = [8, 128], strides = [1, 1]} : vector<8x384xf32> to vector<8x128xf32>
    %134 = vector.extract_strided_slice %131 {offsets = [0, 256], sizes = [8, 128], strides = [1, 1]} : vector<8x384xf32> to vector<8x128xf32>
    %135 = vector.extract_strided_slice %123 {offsets = [0, 384], sizes = [8, 128], strides = [1, 1]} : vector<8x512xf32> to vector<8x128xf32>
    %136 = math.tanh %135 : vector<8x128xf32>
    %137 = arith.mulf %133, %65 : vector<8x128xf32>
    %138 = arith.mulf %132, %136 : vector<8x128xf32>
    %139 = arith.addf %137, %138 : vector<8x128xf32>
    %140 = math.tanh %139 : vector<8x128xf32>
    %141 = arith.mulf %134, %140 : vector<8x128xf32>
    %c2_52 = arith.constant 2 : index
    %c0_53 = arith.constant 0 : index
    %c0_54 = arith.constant 0 : index
    %142 = vector.load %arg0[%c2_52, %c0_53, %c0_54] : memref<8x8x128xf32, #tpu.memory_space<vmem>>, vector<1x8x128xf32>
    %143 = vector.shape_cast %142 : vector<1x8x128xf32> to vector<8x128xf32>
    %144 = tpu.concatenate %143, %93 in 1 : vector<8x128xf32>, vector<8x128xf32> -> vector<8x256xf32>
    %145 = arith.truncf %144 : vector<8x256xf32> to vector<8x256xbf16>
    %c0_55 = arith.constant 0 : index
    %c0_56 = arith.constant 0 : index
    %c0_57 = arith.constant 0 : index
    %146 = vector.load %arg1[%c0_55, %c0_56, %c0_57] : memref<3x256x512xbf16, #tpu.memory_space<vmem>>, vector<1x256x512xbf16>
    %147 = vector.shape_cast %146 : vector<1x256x512xbf16> to vector<256x512xbf16>
    %cst_58 = arith.constant dense<0.000000e+00> : vector<8x512xf32>
    %148 = tpu.matmul %145, %147, %cst_58 {dimension_numbers = #tpu.dot_dimension_numbers<[1], [0], [0], [1], [0, 0, 1, 1], [], []>} : vector<8x256xbf16>, vector<256x512xbf16>, vector<8x512xf32> -> vector<8x512xf32>
    %149 = arith.addf %148, %3 : vector<8x512xf32>
    %150 = vector.extract_strided_slice %149 {offsets = [0, 0], sizes = [8, 384], strides = [1, 1]} : vector<8x512xf32> to vector<8x384xf32>
    %cst_59 = arith.constant 5.000000e-01 : f32
    %151 = vector.broadcast %cst_59 : f32 to vector<8x384xf32>
    %152 = arith.mulf %151, %150 : vector<8x384xf32>
    %153 = math.tanh %152 : vector<8x384xf32>
    %cst_60 = arith.constant 5.000000e-01 : f32
    %154 = vector.broadcast %cst_60 : f32 to vector<8x384xf32>
    %155 = arith.mulf %154, %153 : vector<8x384xf32>
    %cst_61 = arith.constant 5.000000e-01 : f32
    %156 = vector.broadcast %cst_61 : f32 to vector<8x384xf32>
    %157 = arith.addf %155, %156 : vector<8x384xf32>
    %158 = vector.extract_strided_slice %157 {offsets = [0, 0], sizes = [8, 128], strides = [1, 1]} : vector<8x384xf32> to vector<8x128xf32>
    %159 = vector.extract_strided_slice %157 {offsets = [0, 128], sizes = [8, 128], strides = [1, 1]} : vector<8x384xf32> to vector<8x128xf32>
    %160 = vector.extract_strided_slice %157 {offsets = [0, 256], sizes = [8, 128], strides = [1, 1]} : vector<8x384xf32> to vector<8x128xf32>
    %161 = vector.extract_strided_slice %149 {offsets = [0, 384], sizes = [8, 128], strides = [1, 1]} : vector<8x512xf32> to vector<8x128xf32>
    %162 = math.tanh %161 : vector<8x128xf32>
    %163 = arith.mulf %159, %91 : vector<8x128xf32>
    %164 = arith.mulf %158, %162 : vector<8x128xf32>
    %165 = arith.addf %163, %164 : vector<8x128xf32>
    %166 = math.tanh %165 : vector<8x128xf32>
    %167 = arith.mulf %160, %166 : vector<8x128xf32>
    %168 = tpu.concatenate %141, %117 in 1 : vector<8x128xf32>, vector<8x128xf32> -> vector<8x256xf32>
    %169 = arith.truncf %168 : vector<8x256xf32> to vector<8x256xbf16>
    %c2_62 = arith.constant 2 : index
    %c0_63 = arith.constant 0 : index
    %c0_64 = arith.constant 0 : index
    %170 = vector.load %arg1[%c2_62, %c0_63, %c0_64] : memref<3x256x512xbf16, #tpu.memory_space<vmem>>, vector<1x256x512xbf16>
    %171 = vector.shape_cast %170 : vector<1x256x512xbf16> to vector<256x512xbf16>
    %cst_65 = arith.constant dense<0.000000e+00> : vector<8x512xf32>
    %172 = tpu.matmul %169, %171, %cst_65 {dimension_numbers = #tpu.dot_dimension_numbers<[1], [0], [0], [1], [0, 0, 1, 1], [], []>} : vector<8x256xbf16>, vector<256x512xbf16>, vector<8x512xf32> -> vector<8x512xf32>
    %173 = arith.addf %172, %11 : vector<8x512xf32>
    %174 = vector.extract_strided_slice %173 {offsets = [0, 0], sizes = [8, 384], strides = [1, 1]} : vector<8x512xf32> to vector<8x384xf32>
    %cst_66 = arith.constant 5.000000e-01 : f32
    %175 = vector.broadcast %cst_66 : f32 to vector<8x384xf32>
    %176 = arith.mulf %175, %174 : vector<8x384xf32>
    %177 = math.tanh %176 : vector<8x384xf32>
    %cst_67 = arith.constant 5.000000e-01 : f32
    %178 = vector.broadcast %cst_67 : f32 to vector<8x384xf32>
    %179 = arith.mulf %178, %177 : vector<8x384xf32>
    %cst_68 = arith.constant 5.000000e-01 : f32
    %180 = vector.broadcast %cst_68 : f32 to vector<8x384xf32>
    %181 = arith.addf %179, %180 : vector<8x384xf32>
    %182 = vector.extract_strided_slice %181 {offsets = [0, 0], sizes = [8, 128], strides = [1, 1]} : vector<8x384xf32> to vector<8x128xf32>
    %183 = vector.extract_strided_slice %181 {offsets = [0, 128], sizes = [8, 128], strides = [1, 1]} : vector<8x384xf32> to vector<8x128xf32>
    %184 = vector.extract_strided_slice %181 {offsets = [0, 256], sizes = [8, 128], strides = [1, 1]} : vector<8x384xf32> to vector<8x128xf32>
    %185 = vector.extract_strided_slice %173 {offsets = [0, 384], sizes = [8, 128], strides = [1, 1]} : vector<8x512xf32> to vector<8x128xf32>
    %186 = math.tanh %185 : vector<8x128xf32>
    %187 = arith.mulf %183, %115 : vector<8x128xf32>
    %188 = arith.mulf %182, %186 : vector<8x128xf32>
    %189 = arith.addf %187, %188 : vector<8x128xf32>
    %190 = math.tanh %189 : vector<8x128xf32>
    %191 = arith.mulf %184, %190 : vector<8x128xf32>
    %192 = tpu.concatenate %167, %141 in 1 : vector<8x128xf32>, vector<8x128xf32> -> vector<8x256xf32>
    %193 = arith.truncf %192 : vector<8x256xf32> to vector<8x256xbf16>
    %c1_69 = arith.constant 1 : index
    %c0_70 = arith.constant 0 : index
    %c0_71 = arith.constant 0 : index
    %194 = vector.load %arg1[%c1_69, %c0_70, %c0_71] : memref<3x256x512xbf16, #tpu.memory_space<vmem>>, vector<1x256x512xbf16>
    %195 = vector.shape_cast %194 : vector<1x256x512xbf16> to vector<256x512xbf16>
    %cst_72 = arith.constant dense<0.000000e+00> : vector<8x512xf32>
    %196 = tpu.matmul %193, %195, %cst_72 {dimension_numbers = #tpu.dot_dimension_numbers<[1], [0], [0], [1], [0, 0, 1, 1], [], []>} : vector<8x256xbf16>, vector<256x512xbf16>, vector<8x512xf32> -> vector<8x512xf32>
    %197 = arith.addf %196, %7 : vector<8x512xf32>
    %198 = vector.extract_strided_slice %197 {offsets = [0, 0], sizes = [8, 384], strides = [1, 1]} : vector<8x512xf32> to vector<8x384xf32>
    %cst_73 = arith.constant 5.000000e-01 : f32
    %199 = vector.broadcast %cst_73 : f32 to vector<8x384xf32>
    %200 = arith.mulf %199, %198 : vector<8x384xf32>
    %201 = math.tanh %200 : vector<8x384xf32>
    %cst_74 = arith.constant 5.000000e-01 : f32
    %202 = vector.broadcast %cst_74 : f32 to vector<8x384xf32>
    %203 = arith.mulf %202, %201 : vector<8x384xf32>
    %cst_75 = arith.constant 5.000000e-01 : f32
    %204 = vector.broadcast %cst_75 : f32 to vector<8x384xf32>
    %205 = arith.addf %203, %204 : vector<8x384xf32>
    %206 = vector.extract_strided_slice %205 {offsets = [0, 0], sizes = [8, 128], strides = [1, 1]} : vector<8x384xf32> to vector<8x128xf32>
    %207 = vector.extract_strided_slice %205 {offsets = [0, 128], sizes = [8, 128], strides = [1, 1]} : vector<8x384xf32> to vector<8x128xf32>
    %208 = vector.extract_strided_slice %205 {offsets = [0, 256], sizes = [8, 128], strides = [1, 1]} : vector<8x384xf32> to vector<8x128xf32>
    %209 = vector.extract_strided_slice %197 {offsets = [0, 384], sizes = [8, 128], strides = [1, 1]} : vector<8x512xf32> to vector<8x128xf32>
    %210 = math.tanh %209 : vector<8x128xf32>
    %211 = arith.mulf %207, %139 : vector<8x128xf32>
    %212 = arith.mulf %206, %210 : vector<8x128xf32>
    %213 = arith.addf %211, %212 : vector<8x128xf32>
    %214 = math.tanh %213 : vector<8x128xf32>
    %215 = arith.mulf %208, %214 : vector<8x128xf32>
    %c3 = arith.constant 3 : index
    %c0_76 = arith.constant 0 : index
    %c0_77 = arith.constant 0 : index
    %216 = vector.load %arg0[%c3, %c0_76, %c0_77] : memref<8x8x128xf32, #tpu.memory_space<vmem>>, vector<1x8x128xf32>
    %217 = vector.shape_cast %216 : vector<1x8x128xf32> to vector<8x128xf32>
    %218 = tpu.concatenate %217, %167 in 1 : vector<8x128xf32>, vector<8x128xf32> -> vector<8x256xf32>
    %219 = arith.truncf %218 : vector<8x256xf32> to vector<8x256xbf16>
    %c0_78 = arith.constant 0 : index
    %c0_79 = arith.constant 0 : index
    %c0_80 = arith.constant 0 : index
    %220 = vector.load %arg1[%c0_78, %c0_79, %c0_80] : memref<3x256x512xbf16, #tpu.memory_space<vmem>>, vector<1x256x512xbf16>
    %221 = vector.shape_cast %220 : vector<1x256x512xbf16> to vector<256x512xbf16>
    %cst_81 = arith.constant dense<0.000000e+00> : vector<8x512xf32>
    %222 = tpu.matmul %219, %221, %cst_81 {dimension_numbers = #tpu.dot_dimension_numbers<[1], [0], [0], [1], [0, 0, 1, 1], [], []>} : vector<8x256xbf16>, vector<256x512xbf16>, vector<8x512xf32> -> vector<8x512xf32>
    %223 = arith.addf %222, %3 : vector<8x512xf32>
    %224 = vector.extract_strided_slice %223 {offsets = [0, 0], sizes = [8, 384], strides = [1, 1]} : vector<8x512xf32> to vector<8x384xf32>
    %cst_82 = arith.constant 5.000000e-01 : f32
    %225 = vector.broadcast %cst_82 : f32 to vector<8x384xf32>
    %226 = arith.mulf %225, %224 : vector<8x384xf32>
    %227 = math.tanh %226 : vector<8x384xf32>
    %cst_83 = arith.constant 5.000000e-01 : f32
    %228 = vector.broadcast %cst_83 : f32 to vector<8x384xf32>
    %229 = arith.mulf %228, %227 : vector<8x384xf32>
    %cst_84 = arith.constant 5.000000e-01 : f32
    %230 = vector.broadcast %cst_84 : f32 to vector<8x384xf32>
    %231 = arith.addf %229, %230 : vector<8x384xf32>
    %232 = vector.extract_strided_slice %231 {offsets = [0, 0], sizes = [8, 128], strides = [1, 1]} : vector<8x384xf32> to vector<8x128xf32>
    %233 = vector.extract_strided_slice %231 {offsets = [0, 128], sizes = [8, 128], strides = [1, 1]} : vector<8x384xf32> to vector<8x128xf32>
    %234 = vector.extract_strided_slice %231 {offsets = [0, 256], sizes = [8, 128], strides = [1, 1]} : vector<8x384xf32> to vector<8x128xf32>
    %235 = vector.extract_strided_slice %223 {offsets = [0, 384], sizes = [8, 128], strides = [1, 1]} : vector<8x512xf32> to vector<8x128xf32>
    %236 = math.tanh %235 : vector<8x128xf32>
    %237 = arith.mulf %233, %165 : vector<8x128xf32>
    %238 = arith.mulf %232, %236 : vector<8x128xf32>
    %239 = arith.addf %237, %238 : vector<8x128xf32>
    %240 = math.tanh %239 : vector<8x128xf32>
    %241 = arith.mulf %234, %240 : vector<8x128xf32>
    %242 = tpu.concatenate %215, %191 in 1 : vector<8x128xf32>, vector<8x128xf32> -> vector<8x256xf32>
    %243 = arith.truncf %242 : vector<8x256xf32> to vector<8x256xbf16>
    %c2_85 = arith.constant 2 : index
    %c0_86 = arith.constant 0 : index
    %c0_87 = arith.constant 0 : index
    %244 = vector.load %arg1[%c2_85, %c0_86, %c0_87] : memref<3x256x512xbf16, #tpu.memory_space<vmem>>, vector<1x256x512xbf16>
    %245 = vector.shape_cast %244 : vector<1x256x512xbf16> to vector<256x512xbf16>
    %cst_88 = arith.constant dense<0.000000e+00> : vector<8x512xf32>
    %246 = tpu.matmul %243, %245, %cst_88 {dimension_numbers = #tpu.dot_dimension_numbers<[1], [0], [0], [1], [0, 0, 1, 1], [], []>} : vector<8x256xbf16>, vector<256x512xbf16>, vector<8x512xf32> -> vector<8x512xf32>
    %247 = arith.addf %246, %11 : vector<8x512xf32>
    %248 = vector.extract_strided_slice %247 {offsets = [0, 0], sizes = [8, 384], strides = [1, 1]} : vector<8x512xf32> to vector<8x384xf32>
    %cst_89 = arith.constant 5.000000e-01 : f32
    %249 = vector.broadcast %cst_89 : f32 to vector<8x384xf32>
    %250 = arith.mulf %249, %248 : vector<8x384xf32>
    %251 = math.tanh %250 : vector<8x384xf32>
    %cst_90 = arith.constant 5.000000e-01 : f32
    %252 = vector.broadcast %cst_90 : f32 to vector<8x384xf32>
    %253 = arith.mulf %252, %251 : vector<8x384xf32>
    %cst_91 = arith.constant 5.000000e-01 : f32
    %254 = vector.broadcast %cst_91 : f32 to vector<8x384xf32>
    %255 = arith.addf %253, %254 : vector<8x384xf32>
    %256 = vector.extract_strided_slice %255 {offsets = [0, 0], sizes = [8, 128], strides = [1, 1]} : vector<8x384xf32> to vector<8x128xf32>
    %257 = vector.extract_strided_slice %255 {offsets = [0, 128], sizes = [8, 128], strides = [1, 1]} : vector<8x384xf32> to vector<8x128xf32>
    %258 = vector.extract_strided_slice %255 {offsets = [0, 256], sizes = [8, 128], strides = [1, 1]} : vector<8x384xf32> to vector<8x128xf32>
    %259 = vector.extract_strided_slice %247 {offsets = [0, 384], sizes = [8, 128], strides = [1, 1]} : vector<8x512xf32> to vector<8x128xf32>
    %260 = math.tanh %259 : vector<8x128xf32>
    %261 = arith.mulf %257, %189 : vector<8x128xf32>
    %262 = arith.mulf %256, %260 : vector<8x128xf32>
    %263 = arith.addf %261, %262 : vector<8x128xf32>
    %264 = math.tanh %263 : vector<8x128xf32>
    %265 = arith.mulf %258, %264 : vector<8x128xf32>
    %266 = tpu.concatenate %241, %215 in 1 : vector<8x128xf32>, vector<8x128xf32> -> vector<8x256xf32>
    %267 = arith.truncf %266 : vector<8x256xf32> to vector<8x256xbf16>
    %c1_92 = arith.constant 1 : index
    %c0_93 = arith.constant 0 : index
    %c0_94 = arith.constant 0 : index
    %268 = vector.load %arg1[%c1_92, %c0_93, %c0_94] : memref<3x256x512xbf16, #tpu.memory_space<vmem>>, vector<1x256x512xbf16>
    %269 = vector.shape_cast %268 : vector<1x256x512xbf16> to vector<256x512xbf16>
    %cst_95 = arith.constant dense<0.000000e+00> : vector<8x512xf32>
    %270 = tpu.matmul %267, %269, %cst_95 {dimension_numbers = #tpu.dot_dimension_numbers<[1], [0], [0], [1], [0, 0, 1, 1], [], []>} : vector<8x256xbf16>, vector<256x512xbf16>, vector<8x512xf32> -> vector<8x512xf32>
    %271 = arith.addf %270, %7 : vector<8x512xf32>
    %272 = vector.extract_strided_slice %271 {offsets = [0, 0], sizes = [8, 384], strides = [1, 1]} : vector<8x512xf32> to vector<8x384xf32>
    %cst_96 = arith.constant 5.000000e-01 : f32
    %273 = vector.broadcast %cst_96 : f32 to vector<8x384xf32>
    %274 = arith.mulf %273, %272 : vector<8x384xf32>
    %275 = math.tanh %274 : vector<8x384xf32>
    %cst_97 = arith.constant 5.000000e-01 : f32
    %276 = vector.broadcast %cst_97 : f32 to vector<8x384xf32>
    %277 = arith.mulf %276, %275 : vector<8x384xf32>
    %cst_98 = arith.constant 5.000000e-01 : f32
    %278 = vector.broadcast %cst_98 : f32 to vector<8x384xf32>
    %279 = arith.addf %277, %278 : vector<8x384xf32>
    %280 = vector.extract_strided_slice %279 {offsets = [0, 0], sizes = [8, 128], strides = [1, 1]} : vector<8x384xf32> to vector<8x128xf32>
    %281 = vector.extract_strided_slice %279 {offsets = [0, 128], sizes = [8, 128], strides = [1, 1]} : vector<8x384xf32> to vector<8x128xf32>
    %282 = vector.extract_strided_slice %279 {offsets = [0, 256], sizes = [8, 128], strides = [1, 1]} : vector<8x384xf32> to vector<8x128xf32>
    %283 = vector.extract_strided_slice %271 {offsets = [0, 384], sizes = [8, 128], strides = [1, 1]} : vector<8x512xf32> to vector<8x128xf32>
    %284 = math.tanh %283 : vector<8x128xf32>
    %285 = arith.mulf %281, %213 : vector<8x128xf32>
    %286 = arith.mulf %280, %284 : vector<8x128xf32>
    %287 = arith.addf %285, %286 : vector<8x128xf32>
    %288 = math.tanh %287 : vector<8x128xf32>
    %289 = arith.mulf %282, %288 : vector<8x128xf32>
    %c4 = arith.constant 4 : index
    %c0_99 = arith.constant 0 : index
    %c0_100 = arith.constant 0 : index
    %290 = vector.load %arg0[%c4, %c0_99, %c0_100] : memref<8x8x128xf32, #tpu.memory_space<vmem>>, vector<1x8x128xf32>
    %291 = vector.shape_cast %290 : vector<1x8x128xf32> to vector<8x128xf32>
    %292 = tpu.concatenate %291, %241 in 1 : vector<8x128xf32>, vector<8x128xf32> -> vector<8x256xf32>
    %293 = arith.truncf %292 : vector<8x256xf32> to vector<8x256xbf16>
    %c0_101 = arith.constant 0 : index
    %c0_102 = arith.constant 0 : index
    %c0_103 = arith.constant 0 : index
    %294 = vector.load %arg1[%c0_101, %c0_102, %c0_103] : memref<3x256x512xbf16, #tpu.memory_space<vmem>>, vector<1x256x512xbf16>
    %295 = vector.shape_cast %294 : vector<1x256x512xbf16> to vector<256x512xbf16>
    %cst_104 = arith.constant dense<0.000000e+00> : vector<8x512xf32>
    %296 = tpu.matmul %293, %295, %cst_104 {dimension_numbers = #tpu.dot_dimension_numbers<[1], [0], [0], [1], [0, 0, 1, 1], [], []>} : vector<8x256xbf16>, vector<256x512xbf16>, vector<8x512xf32> -> vector<8x512xf32>
    %297 = arith.addf %296, %3 : vector<8x512xf32>
    %298 = vector.extract_strided_slice %297 {offsets = [0, 0], sizes = [8, 384], strides = [1, 1]} : vector<8x512xf32> to vector<8x384xf32>
    %cst_105 = arith.constant 5.000000e-01 : f32
    %299 = vector.broadcast %cst_105 : f32 to vector<8x384xf32>
    %300 = arith.mulf %299, %298 : vector<8x384xf32>
    %301 = math.tanh %300 : vector<8x384xf32>
    %cst_106 = arith.constant 5.000000e-01 : f32
    %302 = vector.broadcast %cst_106 : f32 to vector<8x384xf32>
    %303 = arith.mulf %302, %301 : vector<8x384xf32>
    %cst_107 = arith.constant 5.000000e-01 : f32
    %304 = vector.broadcast %cst_107 : f32 to vector<8x384xf32>
    %305 = arith.addf %303, %304 : vector<8x384xf32>
    %306 = vector.extract_strided_slice %305 {offsets = [0, 0], sizes = [8, 128], strides = [1, 1]} : vector<8x384xf32> to vector<8x128xf32>
    %307 = vector.extract_strided_slice %305 {offsets = [0, 128], sizes = [8, 128], strides = [1, 1]} : vector<8x384xf32> to vector<8x128xf32>
    %308 = vector.extract_strided_slice %305 {offsets = [0, 256], sizes = [8, 128], strides = [1, 1]} : vector<8x384xf32> to vector<8x128xf32>
    %309 = vector.extract_strided_slice %297 {offsets = [0, 384], sizes = [8, 128], strides = [1, 1]} : vector<8x512xf32> to vector<8x128xf32>
    %310 = math.tanh %309 : vector<8x128xf32>
    %311 = arith.mulf %307, %239 : vector<8x128xf32>
    %312 = arith.mulf %306, %310 : vector<8x128xf32>
    %313 = arith.addf %311, %312 : vector<8x128xf32>
    %314 = math.tanh %313 : vector<8x128xf32>
    %315 = arith.mulf %308, %314 : vector<8x128xf32>
    %316 = tpu.concatenate %289, %265 in 1 : vector<8x128xf32>, vector<8x128xf32> -> vector<8x256xf32>
    %317 = arith.truncf %316 : vector<8x256xf32> to vector<8x256xbf16>
    %c2_108 = arith.constant 2 : index
    %c0_109 = arith.constant 0 : index
    %c0_110 = arith.constant 0 : index
    %318 = vector.load %arg1[%c2_108, %c0_109, %c0_110] : memref<3x256x512xbf16, #tpu.memory_space<vmem>>, vector<1x256x512xbf16>
    %319 = vector.shape_cast %318 : vector<1x256x512xbf16> to vector<256x512xbf16>
    %cst_111 = arith.constant dense<0.000000e+00> : vector<8x512xf32>
    %320 = tpu.matmul %317, %319, %cst_111 {dimension_numbers = #tpu.dot_dimension_numbers<[1], [0], [0], [1], [0, 0, 1, 1], [], []>} : vector<8x256xbf16>, vector<256x512xbf16>, vector<8x512xf32> -> vector<8x512xf32>
    %321 = arith.addf %320, %11 : vector<8x512xf32>
    %322 = vector.extract_strided_slice %321 {offsets = [0, 0], sizes = [8, 384], strides = [1, 1]} : vector<8x512xf32> to vector<8x384xf32>
    %cst_112 = arith.constant 5.000000e-01 : f32
    %323 = vector.broadcast %cst_112 : f32 to vector<8x384xf32>
    %324 = arith.mulf %323, %322 : vector<8x384xf32>
    %325 = math.tanh %324 : vector<8x384xf32>
    %cst_113 = arith.constant 5.000000e-01 : f32
    %326 = vector.broadcast %cst_113 : f32 to vector<8x384xf32>
    %327 = arith.mulf %326, %325 : vector<8x384xf32>
    %cst_114 = arith.constant 5.000000e-01 : f32
    %328 = vector.broadcast %cst_114 : f32 to vector<8x384xf32>
    %329 = arith.addf %327, %328 : vector<8x384xf32>
    %330 = vector.extract_strided_slice %329 {offsets = [0, 0], sizes = [8, 128], strides = [1, 1]} : vector<8x384xf32> to vector<8x128xf32>
    %331 = vector.extract_strided_slice %329 {offsets = [0, 128], sizes = [8, 128], strides = [1, 1]} : vector<8x384xf32> to vector<8x128xf32>
    %332 = vector.extract_strided_slice %329 {offsets = [0, 256], sizes = [8, 128], strides = [1, 1]} : vector<8x384xf32> to vector<8x128xf32>
    %333 = vector.extract_strided_slice %321 {offsets = [0, 384], sizes = [8, 128], strides = [1, 1]} : vector<8x512xf32> to vector<8x128xf32>
    %334 = math.tanh %333 : vector<8x128xf32>
    %335 = arith.mulf %331, %263 : vector<8x128xf32>
    %336 = arith.mulf %330, %334 : vector<8x128xf32>
    %337 = arith.addf %335, %336 : vector<8x128xf32>
    %338 = math.tanh %337 : vector<8x128xf32>
    %339 = arith.mulf %332, %338 : vector<8x128xf32>
    %340 = tpu.concatenate %315, %289 in 1 : vector<8x128xf32>, vector<8x128xf32> -> vector<8x256xf32>
    %341 = arith.truncf %340 : vector<8x256xf32> to vector<8x256xbf16>
    %c1_115 = arith.constant 1 : index
    %c0_116 = arith.constant 0 : index
    %c0_117 = arith.constant 0 : index
    %342 = vector.load %arg1[%c1_115, %c0_116, %c0_117] : memref<3x256x512xbf16, #tpu.memory_space<vmem>>, vector<1x256x512xbf16>
    %343 = vector.shape_cast %342 : vector<1x256x512xbf16> to vector<256x512xbf16>
    %cst_118 = arith.constant dense<0.000000e+00> : vector<8x512xf32>
    %344 = tpu.matmul %341, %343, %cst_118 {dimension_numbers = #tpu.dot_dimension_numbers<[1], [0], [0], [1], [0, 0, 1, 1], [], []>} : vector<8x256xbf16>, vector<256x512xbf16>, vector<8x512xf32> -> vector<8x512xf32>
    %345 = arith.addf %344, %7 : vector<8x512xf32>
    %346 = vector.extract_strided_slice %345 {offsets = [0, 0], sizes = [8, 384], strides = [1, 1]} : vector<8x512xf32> to vector<8x384xf32>
    %cst_119 = arith.constant 5.000000e-01 : f32
    %347 = vector.broadcast %cst_119 : f32 to vector<8x384xf32>
    %348 = arith.mulf %347, %346 : vector<8x384xf32>
    %349 = math.tanh %348 : vector<8x384xf32>
    %cst_120 = arith.constant 5.000000e-01 : f32
    %350 = vector.broadcast %cst_120 : f32 to vector<8x384xf32>
    %351 = arith.mulf %350, %349 : vector<8x384xf32>
    %cst_121 = arith.constant 5.000000e-01 : f32
    %352 = vector.broadcast %cst_121 : f32 to vector<8x384xf32>
    %353 = arith.addf %351, %352 : vector<8x384xf32>
    %354 = vector.extract_strided_slice %353 {offsets = [0, 0], sizes = [8, 128], strides = [1, 1]} : vector<8x384xf32> to vector<8x128xf32>
    %355 = vector.extract_strided_slice %353 {offsets = [0, 128], sizes = [8, 128], strides = [1, 1]} : vector<8x384xf32> to vector<8x128xf32>
    %356 = vector.extract_strided_slice %353 {offsets = [0, 256], sizes = [8, 128], strides = [1, 1]} : vector<8x384xf32> to vector<8x128xf32>
    %357 = vector.extract_strided_slice %345 {offsets = [0, 384], sizes = [8, 128], strides = [1, 1]} : vector<8x512xf32> to vector<8x128xf32>
    %358 = math.tanh %357 : vector<8x128xf32>
    %359 = arith.mulf %355, %287 : vector<8x128xf32>
    %360 = arith.mulf %354, %358 : vector<8x128xf32>
    %361 = arith.addf %359, %360 : vector<8x128xf32>
    %362 = math.tanh %361 : vector<8x128xf32>
    %363 = arith.mulf %356, %362 : vector<8x128xf32>
    %c5 = arith.constant 5 : index
    %c0_122 = arith.constant 0 : index
    %c0_123 = arith.constant 0 : index
    %364 = vector.load %arg0[%c5, %c0_122, %c0_123] : memref<8x8x128xf32, #tpu.memory_space<vmem>>, vector<1x8x128xf32>
    %365 = vector.shape_cast %364 : vector<1x8x128xf32> to vector<8x128xf32>
    %366 = tpu.concatenate %365, %315 in 1 : vector<8x128xf32>, vector<8x128xf32> -> vector<8x256xf32>
    %367 = arith.truncf %366 : vector<8x256xf32> to vector<8x256xbf16>
    %c0_124 = arith.constant 0 : index
    %c0_125 = arith.constant 0 : index
    %c0_126 = arith.constant 0 : index
    %368 = vector.load %arg1[%c0_124, %c0_125, %c0_126] : memref<3x256x512xbf16, #tpu.memory_space<vmem>>, vector<1x256x512xbf16>
    %369 = vector.shape_cast %368 : vector<1x256x512xbf16> to vector<256x512xbf16>
    %cst_127 = arith.constant dense<0.000000e+00> : vector<8x512xf32>
    %370 = tpu.matmul %367, %369, %cst_127 {dimension_numbers = #tpu.dot_dimension_numbers<[1], [0], [0], [1], [0, 0, 1, 1], [], []>} : vector<8x256xbf16>, vector<256x512xbf16>, vector<8x512xf32> -> vector<8x512xf32>
    %371 = arith.addf %370, %3 : vector<8x512xf32>
    %372 = vector.extract_strided_slice %371 {offsets = [0, 0], sizes = [8, 384], strides = [1, 1]} : vector<8x512xf32> to vector<8x384xf32>
    %cst_128 = arith.constant 5.000000e-01 : f32
    %373 = vector.broadcast %cst_128 : f32 to vector<8x384xf32>
    %374 = arith.mulf %373, %372 : vector<8x384xf32>
    %375 = math.tanh %374 : vector<8x384xf32>
    %cst_129 = arith.constant 5.000000e-01 : f32
    %376 = vector.broadcast %cst_129 : f32 to vector<8x384xf32>
    %377 = arith.mulf %376, %375 : vector<8x384xf32>
    %cst_130 = arith.constant 5.000000e-01 : f32
    %378 = vector.broadcast %cst_130 : f32 to vector<8x384xf32>
    %379 = arith.addf %377, %378 : vector<8x384xf32>
    %380 = vector.extract_strided_slice %379 {offsets = [0, 0], sizes = [8, 128], strides = [1, 1]} : vector<8x384xf32> to vector<8x128xf32>
    %381 = vector.extract_strided_slice %379 {offsets = [0, 128], sizes = [8, 128], strides = [1, 1]} : vector<8x384xf32> to vector<8x128xf32>
    %382 = vector.extract_strided_slice %379 {offsets = [0, 256], sizes = [8, 128], strides = [1, 1]} : vector<8x384xf32> to vector<8x128xf32>
    %383 = vector.extract_strided_slice %371 {offsets = [0, 384], sizes = [8, 128], strides = [1, 1]} : vector<8x512xf32> to vector<8x128xf32>
    %384 = math.tanh %383 : vector<8x128xf32>
    %385 = arith.mulf %381, %313 : vector<8x128xf32>
    %386 = arith.mulf %380, %384 : vector<8x128xf32>
    %387 = arith.addf %385, %386 : vector<8x128xf32>
    %388 = math.tanh %387 : vector<8x128xf32>
    %389 = arith.mulf %382, %388 : vector<8x128xf32>
    %390 = tpu.concatenate %363, %339 in 1 : vector<8x128xf32>, vector<8x128xf32> -> vector<8x256xf32>
    %391 = arith.truncf %390 : vector<8x256xf32> to vector<8x256xbf16>
    %c2_131 = arith.constant 2 : index
    %c0_132 = arith.constant 0 : index
    %c0_133 = arith.constant 0 : index
    %392 = vector.load %arg1[%c2_131, %c0_132, %c0_133] : memref<3x256x512xbf16, #tpu.memory_space<vmem>>, vector<1x256x512xbf16>
    %393 = vector.shape_cast %392 : vector<1x256x512xbf16> to vector<256x512xbf16>
    %cst_134 = arith.constant dense<0.000000e+00> : vector<8x512xf32>
    %394 = tpu.matmul %391, %393, %cst_134 {dimension_numbers = #tpu.dot_dimension_numbers<[1], [0], [0], [1], [0, 0, 1, 1], [], []>} : vector<8x256xbf16>, vector<256x512xbf16>, vector<8x512xf32> -> vector<8x512xf32>
    %395 = arith.addf %394, %11 : vector<8x512xf32>
    %396 = vector.extract_strided_slice %395 {offsets = [0, 0], sizes = [8, 384], strides = [1, 1]} : vector<8x512xf32> to vector<8x384xf32>
    %cst_135 = arith.constant 5.000000e-01 : f32
    %397 = vector.broadcast %cst_135 : f32 to vector<8x384xf32>
    %398 = arith.mulf %397, %396 : vector<8x384xf32>
    %399 = math.tanh %398 : vector<8x384xf32>
    %cst_136 = arith.constant 5.000000e-01 : f32
    %400 = vector.broadcast %cst_136 : f32 to vector<8x384xf32>
    %401 = arith.mulf %400, %399 : vector<8x384xf32>
    %cst_137 = arith.constant 5.000000e-01 : f32
    %402 = vector.broadcast %cst_137 : f32 to vector<8x384xf32>
    %403 = arith.addf %401, %402 : vector<8x384xf32>
    %404 = vector.extract_strided_slice %403 {offsets = [0, 0], sizes = [8, 128], strides = [1, 1]} : vector<8x384xf32> to vector<8x128xf32>
    %405 = vector.extract_strided_slice %403 {offsets = [0, 128], sizes = [8, 128], strides = [1, 1]} : vector<8x384xf32> to vector<8x128xf32>
    %406 = vector.extract_strided_slice %403 {offsets = [0, 256], sizes = [8, 128], strides = [1, 1]} : vector<8x384xf32> to vector<8x128xf32>
    %407 = vector.extract_strided_slice %395 {offsets = [0, 384], sizes = [8, 128], strides = [1, 1]} : vector<8x512xf32> to vector<8x128xf32>
    %408 = math.tanh %407 : vector<8x128xf32>
    %409 = arith.mulf %405, %337 : vector<8x128xf32>
    %410 = arith.mulf %404, %408 : vector<8x128xf32>
    %411 = arith.addf %409, %410 : vector<8x128xf32>
    %412 = math.tanh %411 : vector<8x128xf32>
    %413 = arith.mulf %406, %412 : vector<8x128xf32>
    %414 = tpu.concatenate %389, %363 in 1 : vector<8x128xf32>, vector<8x128xf32> -> vector<8x256xf32>
    %415 = arith.truncf %414 : vector<8x256xf32> to vector<8x256xbf16>
    %c1_138 = arith.constant 1 : index
    %c0_139 = arith.constant 0 : index
    %c0_140 = arith.constant 0 : index
    %416 = vector.load %arg1[%c1_138, %c0_139, %c0_140] : memref<3x256x512xbf16, #tpu.memory_space<vmem>>, vector<1x256x512xbf16>
    %417 = vector.shape_cast %416 : vector<1x256x512xbf16> to vector<256x512xbf16>
    %cst_141 = arith.constant dense<0.000000e+00> : vector<8x512xf32>
    %418 = tpu.matmul %415, %417, %cst_141 {dimension_numbers = #tpu.dot_dimension_numbers<[1], [0], [0], [1], [0, 0, 1, 1], [], []>} : vector<8x256xbf16>, vector<256x512xbf16>, vector<8x512xf32> -> vector<8x512xf32>
    %419 = arith.addf %418, %7 : vector<8x512xf32>
    %420 = vector.extract_strided_slice %419 {offsets = [0, 0], sizes = [8, 384], strides = [1, 1]} : vector<8x512xf32> to vector<8x384xf32>
    %cst_142 = arith.constant 5.000000e-01 : f32
    %421 = vector.broadcast %cst_142 : f32 to vector<8x384xf32>
    %422 = arith.mulf %421, %420 : vector<8x384xf32>
    %423 = math.tanh %422 : vector<8x384xf32>
    %cst_143 = arith.constant 5.000000e-01 : f32
    %424 = vector.broadcast %cst_143 : f32 to vector<8x384xf32>
    %425 = arith.mulf %424, %423 : vector<8x384xf32>
    %cst_144 = arith.constant 5.000000e-01 : f32
    %426 = vector.broadcast %cst_144 : f32 to vector<8x384xf32>
    %427 = arith.addf %425, %426 : vector<8x384xf32>
    %428 = vector.extract_strided_slice %427 {offsets = [0, 0], sizes = [8, 128], strides = [1, 1]} : vector<8x384xf32> to vector<8x128xf32>
    %429 = vector.extract_strided_slice %427 {offsets = [0, 128], sizes = [8, 128], strides = [1, 1]} : vector<8x384xf32> to vector<8x128xf32>
    %430 = vector.extract_strided_slice %427 {offsets = [0, 256], sizes = [8, 128], strides = [1, 1]} : vector<8x384xf32> to vector<8x128xf32>
    %431 = vector.extract_strided_slice %419 {offsets = [0, 384], sizes = [8, 128], strides = [1, 1]} : vector<8x512xf32> to vector<8x128xf32>
    %432 = math.tanh %431 : vector<8x128xf32>
    %433 = arith.mulf %429, %361 : vector<8x128xf32>
    %434 = arith.mulf %428, %432 : vector<8x128xf32>
    %435 = arith.addf %433, %434 : vector<8x128xf32>
    %436 = math.tanh %435 : vector<8x128xf32>
    %437 = arith.mulf %430, %436 : vector<8x128xf32>
    %c6 = arith.constant 6 : index
    %c0_145 = arith.constant 0 : index
    %c0_146 = arith.constant 0 : index
    %438 = vector.load %arg0[%c6, %c0_145, %c0_146] : memref<8x8x128xf32, #tpu.memory_space<vmem>>, vector<1x8x128xf32>
    %439 = vector.shape_cast %438 : vector<1x8x128xf32> to vector<8x128xf32>
    %440 = tpu.concatenate %439, %389 in 1 : vector<8x128xf32>, vector<8x128xf32> -> vector<8x256xf32>
    %441 = arith.truncf %440 : vector<8x256xf32> to vector<8x256xbf16>
    %c0_147 = arith.constant 0 : index
    %c0_148 = arith.constant 0 : index
    %c0_149 = arith.constant 0 : index
    %442 = vector.load %arg1[%c0_147, %c0_148, %c0_149] : memref<3x256x512xbf16, #tpu.memory_space<vmem>>, vector<1x256x512xbf16>
    %443 = vector.shape_cast %442 : vector<1x256x512xbf16> to vector<256x512xbf16>
    %cst_150 = arith.constant dense<0.000000e+00> : vector<8x512xf32>
    %444 = tpu.matmul %441, %443, %cst_150 {dimension_numbers = #tpu.dot_dimension_numbers<[1], [0], [0], [1], [0, 0, 1, 1], [], []>} : vector<8x256xbf16>, vector<256x512xbf16>, vector<8x512xf32> -> vector<8x512xf32>
    %445 = arith.addf %444, %3 : vector<8x512xf32>
    %446 = vector.extract_strided_slice %445 {offsets = [0, 0], sizes = [8, 384], strides = [1, 1]} : vector<8x512xf32> to vector<8x384xf32>
    %cst_151 = arith.constant 5.000000e-01 : f32
    %447 = vector.broadcast %cst_151 : f32 to vector<8x384xf32>
    %448 = arith.mulf %447, %446 : vector<8x384xf32>
    %449 = math.tanh %448 : vector<8x384xf32>
    %cst_152 = arith.constant 5.000000e-01 : f32
    %450 = vector.broadcast %cst_152 : f32 to vector<8x384xf32>
    %451 = arith.mulf %450, %449 : vector<8x384xf32>
    %cst_153 = arith.constant 5.000000e-01 : f32
    %452 = vector.broadcast %cst_153 : f32 to vector<8x384xf32>
    %453 = arith.addf %451, %452 : vector<8x384xf32>
    %454 = vector.extract_strided_slice %453 {offsets = [0, 0], sizes = [8, 128], strides = [1, 1]} : vector<8x384xf32> to vector<8x128xf32>
    %455 = vector.extract_strided_slice %453 {offsets = [0, 128], sizes = [8, 128], strides = [1, 1]} : vector<8x384xf32> to vector<8x128xf32>
    %456 = vector.extract_strided_slice %453 {offsets = [0, 256], sizes = [8, 128], strides = [1, 1]} : vector<8x384xf32> to vector<8x128xf32>
    %457 = vector.extract_strided_slice %445 {offsets = [0, 384], sizes = [8, 128], strides = [1, 1]} : vector<8x512xf32> to vector<8x128xf32>
    %458 = math.tanh %457 : vector<8x128xf32>
    %459 = arith.mulf %455, %387 : vector<8x128xf32>
    %460 = arith.mulf %454, %458 : vector<8x128xf32>
    %461 = arith.addf %459, %460 : vector<8x128xf32>
    %462 = math.tanh %461 : vector<8x128xf32>
    %463 = arith.mulf %456, %462 : vector<8x128xf32>
    %464 = tpu.concatenate %437, %413 in 1 : vector<8x128xf32>, vector<8x128xf32> -> vector<8x256xf32>
    %465 = arith.truncf %464 : vector<8x256xf32> to vector<8x256xbf16>
    %c2_154 = arith.constant 2 : index
    %c0_155 = arith.constant 0 : index
    %c0_156 = arith.constant 0 : index
    %466 = vector.load %arg1[%c2_154, %c0_155, %c0_156] : memref<3x256x512xbf16, #tpu.memory_space<vmem>>, vector<1x256x512xbf16>
    %467 = vector.shape_cast %466 : vector<1x256x512xbf16> to vector<256x512xbf16>
    %cst_157 = arith.constant dense<0.000000e+00> : vector<8x512xf32>
    %468 = tpu.matmul %465, %467, %cst_157 {dimension_numbers = #tpu.dot_dimension_numbers<[1], [0], [0], [1], [0, 0, 1, 1], [], []>} : vector<8x256xbf16>, vector<256x512xbf16>, vector<8x512xf32> -> vector<8x512xf32>
    %469 = arith.addf %468, %11 : vector<8x512xf32>
    %470 = vector.extract_strided_slice %469 {offsets = [0, 0], sizes = [8, 384], strides = [1, 1]} : vector<8x512xf32> to vector<8x384xf32>
    %cst_158 = arith.constant 5.000000e-01 : f32
    %471 = vector.broadcast %cst_158 : f32 to vector<8x384xf32>
    %472 = arith.mulf %471, %470 : vector<8x384xf32>
    %473 = math.tanh %472 : vector<8x384xf32>
    %cst_159 = arith.constant 5.000000e-01 : f32
    %474 = vector.broadcast %cst_159 : f32 to vector<8x384xf32>
    %475 = arith.mulf %474, %473 : vector<8x384xf32>
    %cst_160 = arith.constant 5.000000e-01 : f32
    %476 = vector.broadcast %cst_160 : f32 to vector<8x384xf32>
    %477 = arith.addf %475, %476 : vector<8x384xf32>
    %478 = vector.extract_strided_slice %477 {offsets = [0, 0], sizes = [8, 128], strides = [1, 1]} : vector<8x384xf32> to vector<8x128xf32>
    %479 = vector.extract_strided_slice %477 {offsets = [0, 128], sizes = [8, 128], strides = [1, 1]} : vector<8x384xf32> to vector<8x128xf32>
    %480 = vector.extract_strided_slice %477 {offsets = [0, 256], sizes = [8, 128], strides = [1, 1]} : vector<8x384xf32> to vector<8x128xf32>
    %481 = vector.extract_strided_slice %469 {offsets = [0, 384], sizes = [8, 128], strides = [1, 1]} : vector<8x512xf32> to vector<8x128xf32>
    %482 = math.tanh %481 : vector<8x128xf32>
    %483 = arith.mulf %479, %411 : vector<8x128xf32>
    %484 = arith.mulf %478, %482 : vector<8x128xf32>
    %485 = arith.addf %483, %484 : vector<8x128xf32>
    %486 = math.tanh %485 : vector<8x128xf32>
    %487 = arith.mulf %480, %486 : vector<8x128xf32>
    %488 = tpu.concatenate %463, %437 in 1 : vector<8x128xf32>, vector<8x128xf32> -> vector<8x256xf32>
    %489 = arith.truncf %488 : vector<8x256xf32> to vector<8x256xbf16>
    %c1_161 = arith.constant 1 : index
    %c0_162 = arith.constant 0 : index
    %c0_163 = arith.constant 0 : index
    %490 = vector.load %arg1[%c1_161, %c0_162, %c0_163] : memref<3x256x512xbf16, #tpu.memory_space<vmem>>, vector<1x256x512xbf16>
    %491 = vector.shape_cast %490 : vector<1x256x512xbf16> to vector<256x512xbf16>
    %cst_164 = arith.constant dense<0.000000e+00> : vector<8x512xf32>
    %492 = tpu.matmul %489, %491, %cst_164 {dimension_numbers = #tpu.dot_dimension_numbers<[1], [0], [0], [1], [0, 0, 1, 1], [], []>} : vector<8x256xbf16>, vector<256x512xbf16>, vector<8x512xf32> -> vector<8x512xf32>
    %493 = arith.addf %492, %7 : vector<8x512xf32>
    %494 = vector.extract_strided_slice %493 {offsets = [0, 0], sizes = [8, 384], strides = [1, 1]} : vector<8x512xf32> to vector<8x384xf32>
    %cst_165 = arith.constant 5.000000e-01 : f32
    %495 = vector.broadcast %cst_165 : f32 to vector<8x384xf32>
    %496 = arith.mulf %495, %494 : vector<8x384xf32>
    %497 = math.tanh %496 : vector<8x384xf32>
    %cst_166 = arith.constant 5.000000e-01 : f32
    %498 = vector.broadcast %cst_166 : f32 to vector<8x384xf32>
    %499 = arith.mulf %498, %497 : vector<8x384xf32>
    %cst_167 = arith.constant 5.000000e-01 : f32
    %500 = vector.broadcast %cst_167 : f32 to vector<8x384xf32>
    %501 = arith.addf %499, %500 : vector<8x384xf32>
    %502 = vector.extract_strided_slice %501 {offsets = [0, 0], sizes = [8, 128], strides = [1, 1]} : vector<8x384xf32> to vector<8x128xf32>
    %503 = vector.extract_strided_slice %501 {offsets = [0, 128], sizes = [8, 128], strides = [1, 1]} : vector<8x384xf32> to vector<8x128xf32>
    %504 = vector.extract_strided_slice %501 {offsets = [0, 256], sizes = [8, 128], strides = [1, 1]} : vector<8x384xf32> to vector<8x128xf32>
    %505 = vector.extract_strided_slice %493 {offsets = [0, 384], sizes = [8, 128], strides = [1, 1]} : vector<8x512xf32> to vector<8x128xf32>
    %506 = math.tanh %505 : vector<8x128xf32>
    %507 = arith.mulf %503, %435 : vector<8x128xf32>
    %508 = arith.mulf %502, %506 : vector<8x128xf32>
    %509 = arith.addf %507, %508 : vector<8x128xf32>
    %510 = math.tanh %509 : vector<8x128xf32>
    %511 = arith.mulf %504, %510 : vector<8x128xf32>
    %c7 = arith.constant 7 : index
    %c0_168 = arith.constant 0 : index
    %c0_169 = arith.constant 0 : index
    %512 = vector.load %arg0[%c7, %c0_168, %c0_169] : memref<8x8x128xf32, #tpu.memory_space<vmem>>, vector<1x8x128xf32>
    %513 = vector.shape_cast %512 : vector<1x8x128xf32> to vector<8x128xf32>
    %514 = tpu.concatenate %513, %463 in 1 : vector<8x128xf32>, vector<8x128xf32> -> vector<8x256xf32>
    %515 = arith.truncf %514 : vector<8x256xf32> to vector<8x256xbf16>
    %c0_170 = arith.constant 0 : index
    %c0_171 = arith.constant 0 : index
    %c0_172 = arith.constant 0 : index
    %516 = vector.load %arg1[%c0_170, %c0_171, %c0_172] : memref<3x256x512xbf16, #tpu.memory_space<vmem>>, vector<1x256x512xbf16>
    %517 = vector.shape_cast %516 : vector<1x256x512xbf16> to vector<256x512xbf16>
    %cst_173 = arith.constant dense<0.000000e+00> : vector<8x512xf32>
    %518 = tpu.matmul %515, %517, %cst_173 {dimension_numbers = #tpu.dot_dimension_numbers<[1], [0], [0], [1], [0, 0, 1, 1], [], []>} : vector<8x256xbf16>, vector<256x512xbf16>, vector<8x512xf32> -> vector<8x512xf32>
    %519 = arith.addf %518, %3 : vector<8x512xf32>
    %520 = vector.extract_strided_slice %519 {offsets = [0, 0], sizes = [8, 384], strides = [1, 1]} : vector<8x512xf32> to vector<8x384xf32>
    %cst_174 = arith.constant 5.000000e-01 : f32
    %521 = vector.broadcast %cst_174 : f32 to vector<8x384xf32>
    %522 = arith.mulf %521, %520 : vector<8x384xf32>
    %523 = math.tanh %522 : vector<8x384xf32>
    %cst_175 = arith.constant 5.000000e-01 : f32
    %524 = vector.broadcast %cst_175 : f32 to vector<8x384xf32>
    %525 = arith.mulf %524, %523 : vector<8x384xf32>
    %cst_176 = arith.constant 5.000000e-01 : f32
    %526 = vector.broadcast %cst_176 : f32 to vector<8x384xf32>
    %527 = arith.addf %525, %526 : vector<8x384xf32>
    %528 = vector.extract_strided_slice %527 {offsets = [0, 0], sizes = [8, 128], strides = [1, 1]} : vector<8x384xf32> to vector<8x128xf32>
    %529 = vector.extract_strided_slice %527 {offsets = [0, 128], sizes = [8, 128], strides = [1, 1]} : vector<8x384xf32> to vector<8x128xf32>
    %530 = vector.extract_strided_slice %527 {offsets = [0, 256], sizes = [8, 128], strides = [1, 1]} : vector<8x384xf32> to vector<8x128xf32>
    %531 = vector.extract_strided_slice %519 {offsets = [0, 384], sizes = [8, 128], strides = [1, 1]} : vector<8x512xf32> to vector<8x128xf32>
    %532 = math.tanh %531 : vector<8x128xf32>
    %533 = arith.mulf %529, %461 : vector<8x128xf32>
    %534 = arith.mulf %528, %532 : vector<8x128xf32>
    %535 = arith.addf %533, %534 : vector<8x128xf32>
    %536 = math.tanh %535 : vector<8x128xf32>
    %537 = arith.mulf %530, %536 : vector<8x128xf32>
    %538 = tpu.concatenate %511, %487 in 1 : vector<8x128xf32>, vector<8x128xf32> -> vector<8x256xf32>
    %539 = arith.truncf %538 : vector<8x256xf32> to vector<8x256xbf16>
    %c2_177 = arith.constant 2 : index
    %c0_178 = arith.constant 0 : index
    %c0_179 = arith.constant 0 : index
    %540 = vector.load %arg1[%c2_177, %c0_178, %c0_179] : memref<3x256x512xbf16, #tpu.memory_space<vmem>>, vector<1x256x512xbf16>
    %541 = vector.shape_cast %540 : vector<1x256x512xbf16> to vector<256x512xbf16>
    %cst_180 = arith.constant dense<0.000000e+00> : vector<8x512xf32>
    %542 = tpu.matmul %539, %541, %cst_180 {dimension_numbers = #tpu.dot_dimension_numbers<[1], [0], [0], [1], [0, 0, 1, 1], [], []>} : vector<8x256xbf16>, vector<256x512xbf16>, vector<8x512xf32> -> vector<8x512xf32>
    %543 = arith.addf %542, %11 : vector<8x512xf32>
    %544 = vector.extract_strided_slice %543 {offsets = [0, 0], sizes = [8, 384], strides = [1, 1]} : vector<8x512xf32> to vector<8x384xf32>
    %cst_181 = arith.constant 5.000000e-01 : f32
    %545 = vector.broadcast %cst_181 : f32 to vector<8x384xf32>
    %546 = arith.mulf %545, %544 : vector<8x384xf32>
    %547 = math.tanh %546 : vector<8x384xf32>
    %cst_182 = arith.constant 5.000000e-01 : f32
    %548 = vector.broadcast %cst_182 : f32 to vector<8x384xf32>
    %549 = arith.mulf %548, %547 : vector<8x384xf32>
    %cst_183 = arith.constant 5.000000e-01 : f32
    %550 = vector.broadcast %cst_183 : f32 to vector<8x384xf32>
    %551 = arith.addf %549, %550 : vector<8x384xf32>
    %552 = vector.extract_strided_slice %551 {offsets = [0, 0], sizes = [8, 128], strides = [1, 1]} : vector<8x384xf32> to vector<8x128xf32>
    %553 = vector.extract_strided_slice %551 {offsets = [0, 128], sizes = [8, 128], strides = [1, 1]} : vector<8x384xf32> to vector<8x128xf32>
    %554 = vector.extract_strided_slice %551 {offsets = [0, 256], sizes = [8, 128], strides = [1, 1]} : vector<8x384xf32> to vector<8x128xf32>
    %555 = vector.extract_strided_slice %543 {offsets = [0, 384], sizes = [8, 128], strides = [1, 1]} : vector<8x512xf32> to vector<8x128xf32>
    %556 = math.tanh %555 : vector<8x128xf32>
    %557 = arith.mulf %553, %485 : vector<8x128xf32>
    %558 = arith.mulf %552, %556 : vector<8x128xf32>
    %559 = arith.addf %557, %558 : vector<8x128xf32>
    %560 = math.tanh %559 : vector<8x128xf32>
    %561 = arith.mulf %554, %560 : vector<8x128xf32>
    %562 = tpu.concatenate %537, %511 in 1 : vector<8x128xf32>, vector<8x128xf32> -> vector<8x256xf32>
    %563 = arith.truncf %562 : vector<8x256xf32> to vector<8x256xbf16>
    %c1_184 = arith.constant 1 : index
    %c0_185 = arith.constant 0 : index
    %c0_186 = arith.constant 0 : index
    %564 = vector.load %arg1[%c1_184, %c0_185, %c0_186] : memref<3x256x512xbf16, #tpu.memory_space<vmem>>, vector<1x256x512xbf16>
    %565 = vector.shape_cast %564 : vector<1x256x512xbf16> to vector<256x512xbf16>
    %cst_187 = arith.constant dense<0.000000e+00> : vector<8x512xf32>
    %566 = tpu.matmul %563, %565, %cst_187 {dimension_numbers = #tpu.dot_dimension_numbers<[1], [0], [0], [1], [0, 0, 1, 1], [], []>} : vector<8x256xbf16>, vector<256x512xbf16>, vector<8x512xf32> -> vector<8x512xf32>
    %567 = arith.addf %566, %7 : vector<8x512xf32>
    %568 = vector.extract_strided_slice %567 {offsets = [0, 0], sizes = [8, 384], strides = [1, 1]} : vector<8x512xf32> to vector<8x384xf32>
    %cst_188 = arith.constant 5.000000e-01 : f32
    %569 = vector.broadcast %cst_188 : f32 to vector<8x384xf32>
    %570 = arith.mulf %569, %568 : vector<8x384xf32>
    %571 = math.tanh %570 : vector<8x384xf32>
    %cst_189 = arith.constant 5.000000e-01 : f32
    %572 = vector.broadcast %cst_189 : f32 to vector<8x384xf32>
    %573 = arith.mulf %572, %571 : vector<8x384xf32>
    %cst_190 = arith.constant 5.000000e-01 : f32
    %574 = vector.broadcast %cst_190 : f32 to vector<8x384xf32>
    %575 = arith.addf %573, %574 : vector<8x384xf32>
    %576 = vector.extract_strided_slice %575 {offsets = [0, 0], sizes = [8, 128], strides = [1, 1]} : vector<8x384xf32> to vector<8x128xf32>
    %577 = vector.extract_strided_slice %575 {offsets = [0, 128], sizes = [8, 128], strides = [1, 1]} : vector<8x384xf32> to vector<8x128xf32>
    %578 = vector.extract_strided_slice %575 {offsets = [0, 256], sizes = [8, 128], strides = [1, 1]} : vector<8x384xf32> to vector<8x128xf32>
    %579 = vector.extract_strided_slice %567 {offsets = [0, 384], sizes = [8, 128], strides = [1, 1]} : vector<8x512xf32> to vector<8x128xf32>
    %580 = math.tanh %579 : vector<8x128xf32>
    %581 = arith.mulf %577, %509 : vector<8x128xf32>
    %582 = arith.mulf %576, %580 : vector<8x128xf32>
    %583 = arith.addf %581, %582 : vector<8x128xf32>
    %584 = math.tanh %583 : vector<8x128xf32>
    %585 = arith.mulf %578, %584 : vector<8x128xf32>
    %586 = tpu.concatenate %585, %561 in 1 : vector<8x128xf32>, vector<8x128xf32> -> vector<8x256xf32>
    %587 = arith.truncf %586 : vector<8x256xf32> to vector<8x256xbf16>
    %c2_191 = arith.constant 2 : index
    %c0_192 = arith.constant 0 : index
    %c0_193 = arith.constant 0 : index
    %588 = vector.load %arg1[%c2_191, %c0_192, %c0_193] : memref<3x256x512xbf16, #tpu.memory_space<vmem>>, vector<1x256x512xbf16>
    %589 = vector.shape_cast %588 : vector<1x256x512xbf16> to vector<256x512xbf16>
    %cst_194 = arith.constant dense<0.000000e+00> : vector<8x512xf32>
    %590 = tpu.matmul %587, %589, %cst_194 {dimension_numbers = #tpu.dot_dimension_numbers<[1], [0], [0], [1], [0, 0, 1, 1], [], []>} : vector<8x256xbf16>, vector<256x512xbf16>, vector<8x512xf32> -> vector<8x512xf32>
    %591 = arith.addf %590, %11 : vector<8x512xf32>
    %592 = vector.extract_strided_slice %591 {offsets = [0, 0], sizes = [8, 384], strides = [1, 1]} : vector<8x512xf32> to vector<8x384xf32>
    %cst_195 = arith.constant 5.000000e-01 : f32
    %593 = vector.broadcast %cst_195 : f32 to vector<8x384xf32>
    %594 = arith.mulf %593, %592 : vector<8x384xf32>
    %595 = math.tanh %594 : vector<8x384xf32>
    %cst_196 = arith.constant 5.000000e-01 : f32
    %596 = vector.broadcast %cst_196 : f32 to vector<8x384xf32>
    %597 = arith.mulf %596, %595 : vector<8x384xf32>
    %cst_197 = arith.constant 5.000000e-01 : f32
    %598 = vector.broadcast %cst_197 : f32 to vector<8x384xf32>
    %599 = arith.addf %597, %598 : vector<8x384xf32>
    %600 = vector.extract_strided_slice %599 {offsets = [0, 0], sizes = [8, 128], strides = [1, 1]} : vector<8x384xf32> to vector<8x128xf32>
    %601 = vector.extract_strided_slice %599 {offsets = [0, 128], sizes = [8, 128], strides = [1, 1]} : vector<8x384xf32> to vector<8x128xf32>
    %602 = vector.extract_strided_slice %599 {offsets = [0, 256], sizes = [8, 128], strides = [1, 1]} : vector<8x384xf32> to vector<8x128xf32>
    %603 = vector.extract_strided_slice %591 {offsets = [0, 384], sizes = [8, 128], strides = [1, 1]} : vector<8x512xf32> to vector<8x128xf32>
    %604 = math.tanh %603 : vector<8x128xf32>
    %605 = arith.mulf %601, %559 : vector<8x128xf32>
    %606 = arith.mulf %600, %604 : vector<8x128xf32>
    %607 = arith.addf %605, %606 : vector<8x128xf32>
    %608 = math.tanh %607 : vector<8x128xf32>
    %609 = arith.mulf %602, %608 : vector<8x128xf32>
    %610 = arith.truncf %609 : vector<8x128xf32> to vector<8x128xbf16>
    %c0_198 = arith.constant 0 : index
    %c0_199 = arith.constant 0 : index
    %611 = vector.load %arg3[%c0_198, %c0_199] : memref<128x128xbf16, #tpu.memory_space<vmem>>, vector<128x128xbf16>
    %cst_200 = arith.constant dense<0.000000e+00> : vector<8x128xf32>
    %612 = tpu.matmul %610, %611, %cst_200 {dimension_numbers = #tpu.dot_dimension_numbers<[1], [0], [0], [1], [0, 0, 1, 1], [], []>} : vector<8x128xbf16>, vector<128x128xbf16>, vector<8x128xf32> -> vector<8x128xf32>
    %c0_201 = arith.constant 0 : index
    %c0_202 = arith.constant 0 : index
    %613 = vector.load %arg4[%c0_201, %c0_202] : memref<1x128xf32, #tpu.memory_space<vmem>>, vector<1x128xf32>
    %614 = vector.broadcast %613 : vector<1x128xf32> to vector<8x128xf32>
    %615 = arith.addf %612, %614 : vector<8x128xf32>
    %c0_203 = arith.constant 0 : index
    %c0_204 = arith.constant 0 : index
    %616 = vector.load %arg5[%c0_203, %c0_204] : memref<8x128xf32, #tpu.memory_space<vmem>>, vector<8x128xf32>
    tpu.vector_store %arg5[%c0_203, %c0_204], %615 {strides = array<i32>} : memref<8x128xf32, #tpu.memory_space<vmem>>, vector<8x128xf32>,
    return
  }
}

</mosaic_0001>

<llo_original>
// kernel: tpu_custom_call.1
$region0: #{tpu_custom_call.1}
  #allocation0 [shape = 'u32[]', space=smem, size = 0x4, offset = 0x4, fixed_abs, tag = 'smem constant byte address 0x4 - core index']
  #allocation1 [shape = 'u32[72,128]{1,0:T(1,128)}', space=vmem, size = 0x9000, scoped, tag = 'internal scratch']
  %s0 = inlined_call_operand.hbm [shape: f32[8,8,128], index: 0, kind: input, shape index: {}]
  %s1 = inlined_call_operand.hbm [shape: bf16[3,256,512], index: 1, kind: input, shape index: {}]
  %s2 = inlined_call_operand.hbm [shape: f32[3,1,512], index: 2, kind: input, shape index: {}]
  %s3 = inlined_call_operand.hbm [shape: bf16[128,128], index: 3, kind: input, shape index: {}]
  %s4 = inlined_call_operand.vmem [shape: f32[1,128], index: 4, kind: input, shape index: {}]
  %s5 = inlined_call_operand.hbm [shape: f32[8,128], index: 5, kind: output, shape index: {}]
  %s6 = sld [smem:[#allocation0]]
  $region46: #{tpu_custom_call.1} parent=0
    _
  %s8 = ssub.s32 1, %s6
  %s9 = scalar_select 0, %s8, %s6
  $region1: #{tpu_custom_call.1} parent=0
    #allocation2 [shape = 'u8[32768]{0}', space=vmem, size = 0x8000, scoped, tag = 'input window, operand 0, single buffered']
    #allocation3 [shape = 's32[1]{0}', space=sflag, size = 0x4, scoped, tag = 'scoped memory for tpu_custom_call.1']
    #allocation4 [shape = 's32[1]{0}', space=sflag, size = 0x4, scoped, tag = 'scoped memory for tpu_custom_call.1']
    #allocation5 [shape = 'u8[786432]{0}', space=vmem, size = 0xc0000, scoped, tag = 'input window, operand 1, single buffered']
    #allocation6 [shape = 's32[1]{0}', space=sflag, size = 0x4, scoped, tag = 'scoped memory for tpu_custom_call.1']
    #allocation7 [shape = 'u8[6144]{0}', space=vmem, size = 0x1800, scoped, tag = 'input window, operand 2, single buffered']
    #allocation8 [shape = 'u8[32768]{0}', space=vmem, size = 0x8000, scoped, tag = 'input window, operand 3, single buffered']
    #allocation9 [shape = 's32[1]{0}', space=sflag, size = 0x4, scoped, tag = 'scoped memory for tpu_custom_call.1']
    #allocation10 [shape = 'u8[4096]{0}', space=vmem, size = 0x1000, scoped, tag = 'output window, operand 0, single buffered']
    %10 = vsyncpa [#allocation3], 0
    %11 = vsyncpa [#allocation6], 0
    %12 = vsyncpa [#allocation9], 0
    %13 = vsyncpa [#allocation4], 0
    // Predicated region
    $region2: #{tpu_custom_call.1} parent=1 // pred_check
      _
    $region3: #{tpu_custom_call.1} parent=1 // pred_check_branch
      %15 = sbr.rel (0) target = $region5
    $region4: #{tpu_custom_call.1} parent=1 // pred_region
      %17 = vsyncadd [#allocation3], 0
      %s18 = sshll.u32 %s0, 4
      %s19 = int_to_ptr.hbm [resolvable:$true] %s18
      %s20 = sshll.u32 [#allocation2], 4
      %s21 = int_to_ptr.vmem [resolvable:$true] %s20
      %26 = dma.hbm_to_vmem [thread:$0]  %s19, 1024, %s21, [#allocation3], 128, 128, 8
    $region5: #{tpu_custom_call.1} parent=1 // pred_fallthru
      _
    // Predicated region
    $region6: #{tpu_custom_call.1} parent=1 // pred_check
      _
    $region7: #{tpu_custom_call.1} parent=1 // pred_check_branch
      %28 = sbr.rel (0) target = $region9
    $region8: #{tpu_custom_call.1} parent=1 // pred_region
      %30 = vsyncadd [#allocation6], 0
      %s31 = sshll.u32 %s1, 4
      %s32 = int_to_ptr.hbm [resolvable:$true] %s31
      %s33 = sshll.u32 [#allocation5], 4
      %s34 = int_to_ptr.vmem [resolvable:$true] %s33
      %39 = dma.hbm_to_vmem [thread:$0]  %s32, 24576, %s34, [#allocation6], 256, 256, 16
    $region9: #{tpu_custom_call.1} parent=1 // pred_fallthru
      _
    // Predicated region
    $region10: #{tpu_custom_call.1} parent=1 // pred_check
      _
    $region11: #{tpu_custom_call.1} parent=1 // pred_check_branch
      %41 = sbr.rel (0) target = $region13
    $region12: #{tpu_custom_call.1} parent=1 // pred_region
      %43 = vsyncadd [#allocation6], 0
      %s44 = sshll.u32 %s2, 4
      %s45 = int_to_ptr.hbm [resolvable:$true] %s44
      %s46 = sshll.u32 [#allocation7], 4
      %s47 = int_to_ptr.vmem [resolvable:$true] %s46
      %52 = dma.hbm_to_vmem [thread:$0]  %s45, 192, %s47, [#allocation6], 64, 64, 4
    $region13: #{tpu_custom_call.1} parent=1 // pred_fallthru
      _
    // Predicated region
    $region14: #{tpu_custom_call.1} parent=1 // pred_check
      _
    $region15: #{tpu_custom_call.1} parent=1 // pred_check_branch
      %54 = sbr.rel (0) target = $region17
    $region16: #{tpu_custom_call.1} parent=1 // pred_region
      %56 = vsyncadd [#allocation9], 0
      %s57 = sshll.u32 %s3, 4
      %s58 = int_to_ptr.hbm [resolvable:$true] %s57
      %s59 = sshll.u32 [#allocation8], 4
      %s60 = int_to_ptr.vmem [resolvable:$true] %s59
      %65 = dma.hbm_to_vmem [thread:$0]  %s58, 1024, %s60, [#allocation9], 64, 64, 4
    $region17: #{tpu_custom_call.1} parent=1 // pred_fallthru
      _
    // Predicated region
    $region18: #{tpu_custom_call.1} parent=1 // pred_check
      _
    $region19: #{tpu_custom_call.1} parent=1 // pred_check_branch
      %67 = sbr.rel (0) target = $region21
    $region20: #{tpu_custom_call.1} parent=1 // pred_region
      _
    $region21: #{tpu_custom_call.1} parent=1 // pred_fallthru
      _
    // Predicated region
    $region22: #{tpu_custom_call.1} parent=1 // pred_check
      _
    $region23: #{tpu_custom_call.1} parent=1 // pred_check_branch
      %69 = sbr.rel (0) target = $region25
    $region24: #{tpu_custom_call.1} parent=1 // pred_region
      %71 = dma.done [#allocation3], 1024
    $region25: #{tpu_custom_call.1} parent=1 // pred_fallthru
      _
    // Predicated region
    $region26: #{tpu_custom_call.1} parent=1 // pred_check
      _
    $region27: #{tpu_custom_call.1} parent=1 // pred_check_branch
      %73 = sbr.rel (0) target = $region29
    $region28: #{tpu_custom_call.1} parent=1 // pred_region
      %75 = dma.done [#allocation6], 24576
    $region29: #{tpu_custom_call.1} parent=1 // pred_fallthru
      _
    // Predicated region
    $region30: #{tpu_custom_call.1} parent=1 // pred_check
      _
    $region31: #{tpu_custom_call.1} parent=1 // pred_check_branch
      %77 = sbr.rel (0) target = $region33
    $region32: #{tpu_custom_call.1} parent=1 // pred_region
      %79 = dma.done [#allocation6], 192
    $region33: #{tpu_custom_call.1} parent=1 // pred_fallthru
      _
    // Predicated region
    $region34: #{tpu_custom_call.1} parent=1 // pred_check
      _
    $region35: #{tpu_custom_call.1} parent=1 // pred_check_branch
      %81 = sbr.rel (0) target = $region37
    $region36: #{tpu_custom_call.1} parent=1 // pred_region
      %83 = dma.done [#allocation9], 1024
    $region37: #{tpu_custom_call.1} parent=1 // pred_fallthru
      _
    %v84 = vld [vmem:[#allocation7] sm:$0xf]
    %v86 = vperm.slane %v84, 0
    %v87 = vperm.slane %v84, 1
    %v88 = vperm.slane %v84, 2
    %v89 = vperm.slane %v84, 3
    %s94 = scalar_lea.vmem [#allocation7], 4
    %v95 = vld [vmem:[%s94] sm:$0xf]
    %v97 = vperm.slane %v95, 0
    %v98 = vperm.slane %v95, 1
    %v99 = vperm.slane %v95, 2
    %v100 = vperm.slane %v95, 3
    %s105 = scalar_lea.vmem [#allocation7], 8
    %v106 = vld [vmem:[%s105] sm:$0xf]
    %v108 = vperm.slane %v106, 0
    %v109 = vperm.slane %v106, 1
    %v110 = vperm.slane %v106, 2
    %v111 = vperm.slane %v106, 3
    %v116 = vld [vmem:[#allocation2] sm:$0xff]
    %v117 = vpack.c.bf16 %v116, %v116
    %v118 = vpack.c.bf16 0.0, 0.0
    %v119 = vld [vmem:[#allocation5] sm:$0xff]
    %v120 = vld [vmem:[#allocation5 + $0x8] sm:$0xff]
    %v121 = vld [vmem:[#allocation5 + $0x10] sm:$0xff]
    %v122 = vld [vmem:[#allocation5 + $0x18] sm:$0xff]
    %v123 = vld [vmem:[#allocation5 + $0x20] sm:$0xff]
    %v124 = vld [vmem:[#allocation5 + $0x28] sm:$0xff]
    %v125 = vld [vmem:[#allocation5 + $0x30] sm:$0xff]
    %v126 = vld [vmem:[#allocation5 + $0x38] sm:$0xff]
    %v127 = vld [vmem:[#allocation5 + $0x40] sm:$0xff]
    %v128 = vld [vmem:[#allocation5 + $0x48] sm:$0xff]
    %v129 = vld [vmem:[#allocation5 + $0x50] sm:$0xff]
    %v130 = vld [vmem:[#allocation5 + $0x58] sm:$0xff]
    %v131 = vld [vmem:[#allocation5 + $0x60] sm:$0xff]
    %v132 = vld [vmem:[#allocation5 + $0x68] sm:$0xff]
    %v133 = vld [vmem:[#allocation5 + $0x70] sm:$0xff]
    %v134 = vld [vmem:[#allocation5 + $0x78] sm:$0xff]
    %v135 = vld [vmem:[#allocation5 + $0x80] sm:$0xff]
    %v136 = vld [vmem:[#allocation5 + $0x88] sm:$0xff]
    %v137 = vld [vmem:[#allocation5 + $0x90] sm:$0xff]
    %v138 = vld [vmem:[#allocation5 + $0x98] sm:$0xff]
    %v139 = vld [vmem:[#allocation5 + $0xa0] sm:$0xff]
    %v140 = vld [vmem:[#allocation5 + $0xa8] sm:$0xff]
    %v141 = vld [vmem:[#allocation5 + $0xb0] sm:$0xff]
    %v142 = vld [vmem:[#allocation5 + $0xb8] sm:$0xff]
    %v143 = vld [vmem:[#allocation5 + $0xc0] sm:$0xff]
    %v144 = vld [vmem:[#allocation5 + $0xc8] sm:$0xff]
    %v145 = vld [vmem:[#allocation5 + $0xd0] sm:$0xff]
    %v146 = vld [vmem:[#allocation5 + $0xd8] sm:$0xff]
    %v147 = vld [vmem:[#allocation5 + $0xe0] sm:$0xff]
    %v148 = vld [vmem:[#allocation5 + $0xe8] sm:$0xff]
    %v149 = vld [vmem:[#allocation5 + $0xf0] sm:$0xff]
    %v150 = vld [vmem:[#allocation5 + $0xf8] sm:$0xff]
    %v151 = vld [vmem:[#allocation5 + $0x100] sm:$0xff]
    %v152 = vld [vmem:[#allocation5 + $0x108] sm:$0xff]
    %v153 = vld [vmem:[#allocation5 + $0x110] sm:$0xff]
    %v154 = vld [vmem:[#allocation5 + $0x118] sm:$0xff]
    %v155 = vld [vmem:[#allocation5 + $0x120] sm:$0xff]
    %v156 = vld [vmem:[#allocation5 + $0x128] sm:$0xff]
    %v157 = vld [vmem:[#allocation5 + $0x130] sm:$0xff]
    %v158 = vld [vmem:[#allocation5 + $0x138] sm:$0xff]
    %v159 = vld [vmem:[#allocation5 + $0x140] sm:$0xff]
    %v160 = vld [vmem:[#allocation5 + $0x148] sm:$0xff]
    %v161 = vld [vmem:[#allocation5 + $0x150] sm:$0xff]
    %v162 = vld [vmem:[#allocation5 + $0x158] sm:$0xff]
    %v163 = vld [vmem:[#allocation5 + $0x160] sm:$0xff]
    %v164 = vld [vmem:[#allocation5 + $0x168] sm:$0xff]
    %v165 = vld [vmem:[#allocation5 + $0x170] sm:$0xff]
    %v166 = vld [vmem:[#allocation5 + $0x178] sm:$0xff]
    %v167 = vld [vmem:[#allocation5 + $0x180] sm:$0xff]
    %v168 = vld [vmem:[#allocation5 + $0x188] sm:$0xff]
    %v169 = vld [vmem:[#allocation5 + $0x190] sm:$0xff]
    %v170 = vld [vmem:[#allocation5 + $0x198] sm:$0xff]
    %v171 = vld [vmem:[#allocation5 + $0x1a0] sm:$0xff]
    %v172 = vld [vmem:[#allocation5 + $0x1a8] sm:$0xff]
    %v173 = vld [vmem:[#allocation5 + $0x1b0] sm:$0xff]
    %v174 = vld [vmem:[#allocation5 + $0x1b8] sm:$0xff]
    %v175 = vld [vmem:[#allocation5 + $0x1c0] sm:$0xff]
    %v176 = vld [vmem:[#allocation5 + $0x1c8] sm:$0xff]
    %v177 = vld [vmem:[#allocation5 + $0x1d0] sm:$0xff]
    %v178 = vld [vmem:[#allocation5 + $0x1d8] sm:$0xff]
    %v179 = vld [vmem:[#allocation5 + $0x1e0] sm:$0xff]
    %v180 = vld [vmem:[#allocation5 + $0x1e8] sm:$0xff]
    %v181 = vld [vmem:[#allocation5 + $0x1f0] sm:$0xff]
    %v182 = vld [vmem:[#allocation5 + $0x1f8] sm:$0xff]
    %v247 = vunpack.c.l.b16 %v119
    %v248 = vunpack.c.h.b16 %v119
    %v249 = vunpack.c.l.b16 %v120
    %v250 = vunpack.c.h.b16 %v120
    %v251 = vunpack.c.l.b16 %v121
    %v252 = vunpack.c.h.b16 %v121
    %v253 = vunpack.c.l.b16 %v122
    %v254 = vunpack.c.h.b16 %v122
    %v255 = vunpack.c.l.b16 %v123
    %v256 = vunpack.c.h.b16 %v123
    %v257 = vunpack.c.l.b16 %v124
    %v258 = vunpack.c.h.b16 %v124
    %v259 = vunpack.c.l.b16 %v125
    %v260 = vunpack.c.h.b16 %v125
    %v261 = vunpack.c.l.b16 %v126
    %v262 = vunpack.c.h.b16 %v126
    %v263 = vunpack.c.l.b16 %v127
    %v264 = vunpack.c.h.b16 %v127
    %v265 = vunpack.c.l.b16 %v128
    %v266 = vunpack.c.h.b16 %v128
    %v267 = vunpack.c.l.b16 %v129
    %v268 = vunpack.c.h.b16 %v129
    %v269 = vunpack.c.l.b16 %v130
    %v270 = vunpack.c.h.b16 %v130
    %v271 = vunpack.c.l.b16 %v131
    %v272 = vunpack.c.h.b16 %v131
    %v273 = vunpack.c.l.b16 %v132
    %v274 = vunpack.c.h.b16 %v132
    %v275 = vunpack.c.l.b16 %v133
    %v276 = vunpack.c.h.b16 %v133
    %v277 = vunpack.c.l.b16 %v134
    %v278 = vunpack.c.h.b16 %v134
    %v279 = vunpack.c.l.b16 %v135
    %v280 = vunpack.c.h.b16 %v135
    %v281 = vunpack.c.l.b16 %v136
    %v282 = vunpack.c.h.b16 %v136
    %v283 = vunpack.c.l.b16 %v137
    %v284 = vunpack.c.h.b16 %v137
    %v285 = vunpack.c.l.b16 %v138
    %v286 = vunpack.c.h.b16 %v138
    %v287 = vunpack.c.l.b16 %v139
    %v288 = vunpack.c.h.b16 %v139
    %v289 = vunpack.c.l.b16 %v140
    %v290 = vunpack.c.h.b16 %v140
    %v291 = vunpack.c.l.b16 %v141
    %v292 = vunpack.c.h.b16 %v141
    %v293 = vunpack.c.l.b16 %v142
    %v294 = vunpack.c.h.b16 %v142
    %v295 = vunpack.c.l.b16 %v143
    %v296 = vunpack.c.h.b16 %v143
    %v297 = vunpack.c.l.b16 %v144
    %v298 = vunpack.c.h.b16 %v144
    %v299 = vunpack.c.l.b16 %v145
    %v300 = vunpack.c.h.b16 %v145
    %v301 = vunpack.c.l.b16 %v146
    %v302 = vunpack.c.h.b16 %v146
    %v303 = vunpack.c.l.b16 %v147
    %v304 = vunpack.c.h.b16 %v147
    %v305 = vunpack.c.l.b16 %v148
    %v306 = vunpack.c.h.b16 %v148
    %v307 = vunpack.c.l.b16 %v149
    %v308 = vunpack.c.h.b16 %v149
    %v309 = vunpack.c.l.b16 %v150
    %v310 = vunpack.c.h.b16 %v150
    %v311 = vunpack.c.l.b16 %v151
    %v312 = vunpack.c.h.b16 %v151
    %v313 = vunpack.c.l.b16 %v152
    %v314 = vunpack.c.h.b16 %v152
    %v315 = vunpack.c.l.b16 %v153
    %v316 = vunpack.c.h.b16 %v153
    %v317 = vunpack.c.l.b16 %v154
    %v318 = vunpack.c.h.b16 %v154
    %v319 = vunpack.c.l.b16 %v155
    %v320 = vunpack.c.h.b16 %v155
    %v321 = vunpack.c.l.b16 %v156
    %v322 = vunpack.c.h.b16 %v156
    %v323 = vunpack.c.l.b16 %v157
    %v324 = vunpack.c.h.b16 %v157
    %v325 = vunpack.c.l.b16 %v158
    %v326 = vunpack.c.h.b16 %v158
    %v327 = vunpack.c.l.b16 %v159
    %v328 = vunpack.c.h.b16 %v159
    %v329 = vunpack.c.l.b16 %v160
    %v330 = vunpack.c.h.b16 %v160
    %v331 = vunpack.c.l.b16 %v161
    %v332 = vunpack.c.h.b16 %v161
    %v333 = vunpack.c.l.b16 %v162
    %v334 = vunpack.c.h.b16 %v162
    %v335 = vunpack.c.l.b16 %v163
    %v336 = vunpack.c.h.b16 %v163
    %v337 = vunpack.c.l.b16 %v164
    %v338 = vunpack.c.h.b16 %v164
    %v339 = vunpack.c.l.b16 %v165
    %v340 = vunpack.c.h.b16 %v165
    %v341 = vunpack.c.l.b16 %v166
    %v342 = vunpack.c.h.b16 %v166
    %v343 = vunpack.c.l.b16 %v167
    %v344 = vunpack.c.h.b16 %v167
    %v345 = vunpack.c.l.b16 %v168
    %v346 = vunpack.c.h.b16 %v168
    %v347 = vunpack.c.l.b16 %v169
    %v348 = vunpack.c.h.b16 %v169
    %v349 = vunpack.c.l.b16 %v170
    %v350 = vunpack.c.h.b16 %v170
    %v351 = vunpack.c.l.b16 %v171
    %v352 = vunpack.c.h.b16 %v171
    %v353 = vunpack.c.l.b16 %v172
    %v354 = vunpack.c.h.b16 %v172
    %v355 = vunpack.c.l.b16 %v173
    %v356 = vunpack.c.h.b16 %v173
    %v357 = vunpack.c.l.b16 %v174
    %v358 = vunpack.c.h.b16 %v174
    %v359 = vunpack.c.l.b16 %v175
    %v360 = vunpack.c.h.b16 %v175
    %v361 = vunpack.c.l.b16 %v176
    %v362 = vunpack.c.h.b16 %v176
    %v363 = vunpack.c.l.b16 %v177
    %v364 = vunpack.c.h.b16 %v177
    %v365 = vunpack.c.l.b16 %v178
    %v366 = vunpack.c.h.b16 %v178
    %v367 = vunpack.c.l.b16 %v179
    %v368 = vunpack.c.h.b16 %v179
    %v369 = vunpack.c.l.b16 %v180
    %v370 = vunpack.c.h.b16 %v180
    %v371 = vunpack.c.l.b16 %v181
    %v372 = vunpack.c.h.b16 %v181
    %v373 = vunpack.c.l.b16 %v182
    %v374 = vunpack.c.h.b16 %v182
    %v375 = vpack.c.b16 %v251, %v247
    %v376 = vpack.c.b16 %v252, %v248
    %v377 = vpack.c.b16 %v253, %v249
    %v378 = vpack.c.b16 %v254, %v250
    %v379 = vpack.c.b16 %v259, %v255
    %v380 = vpack.c.b16 %v260, %v256
    %v381 = vpack.c.b16 %v261, %v257
    %v382 = vpack.c.b16 %v262, %v258
    %v383 = vpack.c.b16 %v267, %v263
    %v384 = vpack.c.b16 %v268, %v264
    %v385 = vpack.c.b16 %v269, %v265
    %v386 = vpack.c.b16 %v270, %v266
    %v387 = vpack.c.b16 %v275, %v271
    %v388 = vpack.c.b16 %v276, %v272
    %v389 = vpack.c.b16 %v277, %v273
    %v390 = vpack.c.b16 %v278, %v274
    %v391 = vpack.c.b16 %v283, %v279
    %v392 = vpack.c.b16 %v284, %v280
    %v393 = vpack.c.b16 %v285, %v281
    %v394 = vpack.c.b16 %v286, %v282
    %v395 = vpack.c.b16 %v291, %v287
    %v396 = vpack.c.b16 %v292, %v288
    %v397 = vpack.c.b16 %v293, %v289
    %v398 = vpack.c.b16 %v294, %v290
    %v399 = vpack.c.b16 %v299, %v295
    %v400 = vpack.c.b16 %v300, %v296
    %v401 = vpack.c.b16 %v301, %v297
    %v402 = vpack.c.b16 %v302, %v298
    %v403 = vpack.c.b16 %v307, %v303
    %v404 = vpack.c.b16 %v308, %v304
    %v405 = vpack.c.b16 %v309, %v305
    %v406 = vpack.c.b16 %v310, %v306
    %v407 = vpack.c.b16 %v315, %v311
    %v408 = vpack.c.b16 %v316, %v312
    %v409 = vpack.c.b16 %v317, %v313
    %v410 = vpack.c.b16 %v318, %v314
    %v411 = vpack.c.b16 %v323, %v319
    %v412 = vpack.c.b16 %v324, %v320
    %v413 = vpack.c.b16 %v325, %v321
    %v414 = vpack.c.b16 %v326, %v322
    %v415 = vpack.c.b16 %v331, %v327
    %v416 = vpack.c.b16 %v332, %v328
    %v417 = vpack.c.b16 %v333, %v329
    %v418 = vpack.c.b16 %v334, %v330
    %v419 = vpack.c.b16 %v339, %v335
    %v420 = vpack.c.b16 %v340, %v336
    %v421 = vpack.c.b16 %v341, %v337
    %v422 = vpack.c.b16 %v342, %v338
    %v423 = vpack.c.b16 %v347, %v343
    %v424 = vpack.c.b16 %v348, %v344
    %v425 = vpack.c.b16 %v349, %v345
    %v426 = vpack.c.b16 %v350, %v346
    %v427 = vpack.c.b16 %v355, %v351
    %v428 = vpack.c.b16 %v356, %v352
    %v429 = vpack.c.b16 %v357, %v353
    %v430 = vpack.c.b16 %v358, %v354
    %v431 = vpack.c.b16 %v363, %v359
    %v432 = vpack.c.b16 %v364, %v360
    %v433 = vpack.c.b16 %v365, %v361
    %v434 = vpack.c.b16 %v366, %v362
    %v435 = vpack.c.b16 %v371, %v367
    %v436 = vpack.c.b16 %v372, %v368
    %v437 = vpack.c.b16 %v373, %v369
    %v438 = vpack.c.b16 %v374, %v370
    %503 = vmatpush.bf16.msra.mxu0 %v403
    %504 = vmatpush.bf16.msra.mxu0 %v399
    %505 = vmatpush.bf16.msra.mxu0 %v395
    %506 = vmatpush.bf16.msra.mxu0 %v391
    %507 = vmatpush.bf16.msra.mxu0 %v387
    %508 = vmatpush.bf16.msra.mxu0 %v383
    %509 = vmatpush.bf16.msra.mxu0 %v379
    %510 = vmatpush.bf16.msra.mxu0 %v375
    %511 = vmatmul.bf16.gmra.mxu0 %v117
    %v512 = vpop.f32.mrf.mxu0
    %v513 = vadd.f32 %v86, %v512
    %v514 = vpop.f32.mrf.mxu0
    %515 = vdwg.mxu0
    %516 = vmatpush.bf16.msra.mxu0 %v435
    %517 = vmatpush.bf16.msra.mxu0 %v431
    %518 = vmatpush.bf16.msra.mxu0 %v427
    %519 = vmatpush.bf16.msra.mxu0 %v423
    %520 = vmatpush.bf16.msra.mxu0 %v419
    %521 = vmatpush.bf16.msra.mxu0 %v415
    %522 = vmatpush.bf16.msra.mxu0 %v411
    %523 = vmatpush.bf16.msra.mxu0 %v407
    %524 = vmatmul.bf16.gmra.mxu0 %v118
    %v525 = vpop.f32.mrf.mxu0
    %v526 = vadd.f32 %v513, %v525
    %v527 = vpop.f32.mrf.mxu0
    %528 = vdwg.mxu0
    %529 = vmatpush.bf16.msra.mxu0 %v404
    %530 = vmatpush.bf16.msra.mxu0 %v400
    %531 = vmatpush.bf16.msra.mxu0 %v396
    %532 = vmatpush.bf16.msra.mxu0 %v392
    %533 = vmatpush.bf16.msra.mxu0 %v388
    %534 = vmatpush.bf16.msra.mxu0 %v384
    %535 = vmatpush.bf16.msra.mxu0 %v380
    %536 = vmatpush.bf16.msra.mxu0 %v376
    %537 = vmatmul.bf16.gmra.mxu0 %v117
    %v538 = vpop.f32.mrf.mxu0
    %v539 = vadd.f32 %v87, %v538
    %v540 = vpop.f32.mrf.mxu0
    %541 = vdwg.mxu0
    %542 = vmatpush.bf16.msra.mxu0 %v436
    %543 = vmatpush.bf16.msra.mxu0 %v432
    %544 = vmatpush.bf16.msra.mxu0 %v428
    %545 = vmatpush.bf16.msra.mxu0 %v424
    %546 = vmatpush.bf16.msra.mxu0 %v420
    %547 = vmatpush.bf16.msra.mxu0 %v416
    %548 = vmatpush.bf16.msra.mxu0 %v412
    %549 = vmatpush.bf16.msra.mxu0 %v408
    %550 = vmatmul.bf16.gmra.mxu0 %v118
    %v551 = vpop.f32.mrf.mxu0
    %v552 = vadd.f32 %v539, %v551
    %v553 = vpop.f32.mrf.mxu0
    %554 = vdwg.mxu0
    %555 = vmatpush.bf16.msra.mxu0 %v405
    %556 = vmatpush.bf16.msra.mxu0 %v401
    %557 = vmatpush.bf16.msra.mxu0 %v397
    %558 = vmatpush.bf16.msra.mxu0 %v393
    %559 = vmatpush.bf16.msra.mxu0 %v389
    %560 = vmatpush.bf16.msra.mxu0 %v385
    %561 = vmatpush.bf16.msra.mxu0 %v381
    %562 = vmatpush.bf16.msra.mxu0 %v377
    %563 = vmatmul.bf16.gmra.mxu0 %v117
    %v564 = vpop.f32.mrf.mxu0
    %v565 = vadd.f32 %v88, %v564
    %v566 = vpop.f32.mrf.mxu0
    %567 = vdwg.mxu0
    %568 = vmatpush.bf16.msra.mxu0 %v437
    %569 = vmatpush.bf16.msra.mxu0 %v433
    %570 = vmatpush.bf16.msra.mxu0 %v429
    %571 = vmatpush.bf16.msra.mxu0 %v425
    %572 = vmatpush.bf16.msra.mxu0 %v421
    %573 = vmatpush.bf16.msra.mxu0 %v417
    %574 = vmatpush.bf16.msra.mxu0 %v413
    %575 = vmatpush.bf16.msra.mxu0 %v409
    %576 = vmatmul.bf16.gmra.mxu0 %v118
    %v577 = vpop.f32.mrf.mxu0
    %v578 = vadd.f32 %v565, %v577
    %v579 = vpop.f32.mrf.mxu0
    %580 = vdwg.mxu0
    %581 = vmatpush.bf16.msra.mxu0 %v406
    %582 = vmatpush.bf16.msra.mxu0 %v402
    %583 = vmatpush.bf16.msra.mxu0 %v398
    %584 = vmatpush.bf16.msra.mxu0 %v394
    %585 = vmatpush.bf16.msra.mxu0 %v390
    %586 = vmatpush.bf16.msra.mxu0 %v386
    %587 = vmatpush.bf16.msra.mxu0 %v382
    %588 = vmatpush.bf16.msra.mxu0 %v378
    %589 = vmatmul.bf16.gmra.mxu0 %v117
    %v590 = vpop.f32.mrf.mxu0
    %v591 = vadd.f32 %v89, %v590
    %v592 = vpop.f32.mrf.mxu0
    %593 = vdwg.mxu0
    %594 = vmatpush.bf16.msra.mxu0 %v438
    %595 = vmatpush.bf16.msra.mxu0 %v434
    %596 = vmatpush.bf16.msra.mxu0 %v430
    %597 = vmatpush.bf16.msra.mxu0 %v426
    %598 = vmatpush.bf16.msra.mxu0 %v422
    %599 = vmatpush.bf16.msra.mxu0 %v418
    %600 = vmatpush.bf16.msra.mxu0 %v414
    %601 = vmatpush.bf16.msra.mxu0 %v410
    %602 = vmatmul.bf16.gmra.mxu0 %v118
    %v603 = vpop.f32.mrf.mxu0
    %v604 = vadd.f32 %v591, %v603
    %v605 = vpop.f32.mrf.mxu0
    %606 = vdwg.mxu0
    %v607 = vmul.f32 %v526, 0.5
    %v608 = vmul.f32 %v552, 0.5
    %v609 = vmul.f32 %v578, 0.5
    %v610 = vtanh.pop %v607
    %v611 = vtanh.pop %v608
    %v612 = vtanh.pop %v609
    %v613 = vmul.f32 %v610, 0.5
    %v614 = vmul.f32 %v611, 0.5
    %v615 = vmul.f32 %v612, 0.5
    %v616 = vadd.f32 %v613, 0.5
    %v617 = vadd.f32 %v614, 0.5
    %v618 = vadd.f32 %v615, 0.5
    %v619 = vtanh.pop %v604
    %v620 = vmul.f32 %v617, 0.0
    %v621 = vmul.f32 %v616, %v619
    %v622 = vadd.f32 %v620, %v621
    %v623 = vtanh.pop %v622
    %v624 = vmul.f32 %v618, %v623
    %v625 = vpack.c.bf16 %v624, %v624
    %s626 = scalar_lea.vmem [#allocation5], 512
    %v627 = vld [vmem:[%s626] sm:$0xff]
    %v628 = vld [vmem:[%s626 + $0x8] sm:$0xff]
    %v629 = vld [vmem:[%s626 + $0x10] sm:$0xff]
    %v630 = vld [vmem:[%s626 + $0x18] sm:$0xff]
    %v631 = vld [vmem:[%s626 + $0x20] sm:$0xff]
    %v632 = vld [vmem:[%s626 + $0x28] sm:$0xff]
    %v633 = vld [vmem:[%s626 + $0x30] sm:$0xff]
    %v634 = vld [vmem:[%s626 + $0x38] sm:$0xff]
    %v635 = vld [vmem:[%s626 + $0x40] sm:$0xff]
    %v636 = vld [vmem:[%s626 + $0x48] sm:$0xff]
    %v637 = vld [vmem:[%s626 + $0x50] sm:$0xff]
    %v638 = vld [vmem:[%s626 + $0x58] sm:$0xff]
    %v639 = vld [vmem:[%s626 + $0x60] sm:$0xff]
    %v640 = vld [vmem:[%s626 + $0x68] sm:$0xff]
    %v641 = vld [vmem:[%s626 + $0x70] sm:$0xff]
    %v642 = vld [vmem:[%s626 + $0x78] sm:$0xff]
    %v643 = vld [vmem:[%s626 + $0x80] sm:$0xff]
    %v644 = vld [vmem:[%s626 + $0x88] sm:$0xff]
    %v645 = vld [vmem:[%s626 + $0x90] sm:$0xff]
    %v646 = vld [vmem:[%s626 + $0x98] sm:$0xff]
    %v647 = vld [vmem:[%s626 + $0xa0] sm:$0xff]
    %v648 = vld [vmem:[%s626 + $0xa8] sm:$0xff]
    %v649 = vld [vmem:[%s626 + $0xb0] sm:$0xff]
    %v650 = vld [vmem:[%s626 + $0xb8] sm:$0xff]
    %v651 = vld [vmem:[%s626 + $0xc0] sm:$0xff]
    %v652 = vld [vmem:[%s626 + $0xc8] sm:$0xff]
    %v653 = vld [vmem:[%s626 + $0xd0] sm:$0xff]
    %v654 = vld [vmem:[%s626 + $0xd8] sm:$0xff]
    %v655 = vld [vmem:[%s626 + $0xe0] sm:$0xff]
    %v656 = vld [vmem:[%s626 + $0xe8] sm:$0xff]
    %v657 = vld [vmem:[%s626 + $0xf0] sm:$0xff]
    %v658 = vld [vmem:[%s626 + $0xf8] sm:$0xff]
    %v659 = vld [vmem:[%s626 + $0x100] sm:$0xff]
    %v660 = vld [vmem:[%s626 + $0x108] sm:$0xff]
    %v661 = vld [vmem:[%s626 + $0x110] sm:$0xff]
    %v662 = vld [vmem:[%s626 + $0x118] sm:$0xff]
    %v663 = vld [vmem:[%s626 + $0x120] sm:$0xff]
    %v664 = vld [vmem:[%s626 + $0x128] sm:$0xff]
    %v665 = vld [vmem:[%s626 + $0x130] sm:$0xff]
    %v666 = vld [vmem:[%s626 + $0x138] sm:$0xff]
    %v667 = vld [vmem:[%s626 + $0x140] sm:$0xff]
    %v668 = vld [vmem:[%s626 + $0x148] sm:$0xff]
    %v669 = vld [vmem:[%s626 + $0x150] sm:$0xff]
    %v670 = vld [vmem:[%s626 + $0x158] sm:$0xff]
    %v671 = vld [vmem:[%s626 + $0x160] sm:$0xff]
    %v672 = vld [vmem:[%s626 + $0x168] sm:$0xff]
    %v673 = vld [vmem:[%s626 + $0x170] sm:$0xff]
    %v674 = vld [vmem:[%s626 + $0x178] sm:$0xff]
    %v675 = vld [vmem:[%s626 + $0x180] sm:$0xff]
    %v676 = vld [vmem:[%s626 + $0x188] sm:$0xff]
    %v677 = vld [vmem:[%s626 + $0x190] sm:$0xff]
    %v678 = vld [vmem:[%s626 + $0x198] sm:$0xff]
    %v679 = vld [vmem:[%s626 + $0x1a0] sm:$0xff]
    %v680 = vld [vmem:[%s626 + $0x1a8] sm:$0xff]
    %v681 = vld [vmem:[%s626 + $0x1b0] sm:$0xff]
    %v682 = vld [vmem:[%s626 + $0x1b8] sm:$0xff]
    %v683 = vld [vmem:[%s626 + $0x1c0] sm:$0xff]
    %v684 = vld [vmem:[%s626 + $0x1c8] sm:$0xff]
    %v685 = vld [vmem:[%s626 + $0x1d0] sm:$0xff]
    %v686 = vld [vmem:[%s626 + $0x1d8] sm:$0xff]
    %v687 = vld [vmem:[%s626 + $0x1e0] sm:$0xff]
    %v688 = vld [vmem:[%s626 + $0x1e8] sm:$0xff]
    %v689 = vld [vmem:[%s626 + $0x1f0] sm:$0xff]
    %v690 = vld [vmem:[%s626 + $0x1f8] sm:$0xff]
    %v755 = vunpack.c.l.b16 %v627
    %v756 = vunpack.c.h.b16 %v627
    %v757 = vunpack.c.l.b16 %v628
    %v758 = vunpack.c.h.b16 %v628
    %v759 = vunpack.c.l.b16 %v629
    %v760 = vunpack.c.h.b16 %v629
    %v761 = vunpack.c.l.b16 %v630
    %v762 = vunpack.c.h.b16 %v630
    %v763 = vunpack.c.l.b16 %v631
    %v764 = vunpack.c.h.b16 %v631
    %v765 = vunpack.c.l.b16 %v632
    %v766 = vunpack.c.h.b16 %v632
    %v767 = vunpack.c.l.b16 %v633
    %v768 = vunpack.c.h.b16 %v633
    %v769 = vunpack.c.l.b16 %v634
    %v770 = vunpack.c.h.b16 %v634
    %v771 = vunpack.c.l.b16 %v635
    %v772 = vunpack.c.h.b16 %v635
    %v773 = vunpack.c.l.b16 %v636
    %v774 = vunpack.c.h.b16 %v636
    %v775 = vunpack.c.l.b16 %v637
    %v776 = vunpack.c.h.b16 %v637
    %v777 = vunpack.c.l.b16 %v638
    %v778 = vunpack.c.h.b16 %v638
    %v779 = vunpack.c.l.b16 %v639
    %v780 = vunpack.c.h.b16 %v639
    %v781 = vunpack.c.l.b16 %v640
    %v782 = vunpack.c.h.b16 %v640
    %v783 = vunpack.c.l.b16 %v641
    %v784 = vunpack.c.h.b16 %v641
    %v785 = vunpack.c.l.b16 %v642
    %v786 = vunpack.c.h.b16 %v642
    %v787 = vunpack.c.l.b16 %v643
    %v788 = vunpack.c.h.b16 %v643
    %v789 = vunpack.c.l.b16 %v644
    %v790 = vunpack.c.h.b16 %v644
    %v791 = vunpack.c.l.b16 %v645
    %v792 = vunpack.c.h.b16 %v645
    %v793 = vunpack.c.l.b16 %v646
    %v794 = vunpack.c.h.b16 %v646
    %v795 = vunpack.c.l.b16 %v647
    %v796 = vunpack.c.h.b16 %v647
    %v797 = vunpack.c.l.b16 %v648
    %v798 = vunpack.c.h.b16 %v648
    %v799 = vunpack.c.l.b16 %v649
    %v800 = vunpack.c.h.b16 %v649
    %v801 = vunpack.c.l.b16 %v650
    %v802 = vunpack.c.h.b16 %v650
    %v803 = vunpack.c.l.b16 %v651
    %v804 = vunpack.c.h.b16 %v651
    %v805 = vunpack.c.l.b16 %v652
    %v806 = vunpack.c.h.b16 %v652
    %v807 = vunpack.c.l.b16 %v653
    %v808 = vunpack.c.h.b16 %v653
    %v809 = vunpack.c.l.b16 %v654
    %v810 = vunpack.c.h.b16 %v654
    %v811 = vunpack.c.l.b16 %v655
    %v812 = vunpack.c.h.b16 %v655
    %v813 = vunpack.c.l.b16 %v656
    %v814 = vunpack.c.h.b16 %v656
    %v815 = vunpack.c.l.b16 %v657
    %v816 = vunpack.c.h.b16 %v657
    %v817 = vunpack.c.l.b16 %v658
    %v818 = vunpack.c.h.b16 %v658
    %v819 = vunpack.c.l.b16 %v659
    %v820 = vunpack.c.h.b16 %v659
    %v821 = vunpack.c.l.b16 %v660
    %v822 = vunpack.c.h.b16 %v660
    %v823 = vunpack.c.l.b16 %v661
    %v824 = vunpack.c.h.b16 %v661
    %v825 = vunpack.c.l.b16 %v662
    %v826 = vunpack.c.h.b16 %v662
    %v827 = vunpack.c.l.b16 %v663
    %v828 = vunpack.c.h.b16 %v663
    %v829 = vunpack.c.l.b16 %v664
    %v830 = vunpack.c.h.b16 %v664
    %v831 = vunpack.c.l.b16 %v665
    %v832 = vunpack.c.h.b16 %v665
    %v833 = vunpack.c.l.b16 %v666
    %v834 = vunpack.c.h.b16 %v666
    %v835 = vunpack.c.l.b16 %v667
    %v836 = vunpack.c.h.b16 %v667
    %v837 = vunpack.c.l.b16 %v668
    %v838 = vunpack.c.h.b16 %v668
    %v839 = vunpack.c.l.b16 %v669
    %v840 = vunpack.c.h.b16 %v669
    %v841 = vunpack.c.l.b16 %v670
    %v842 = vunpack.c.h.b16 %v670
    %v843 = vunpack.c.l.b16 %v671
    %v844 = vunpack.c.h.b16 %v671
    %v845 = vunpack.c.l.b16 %v672
    %v846 = vunpack.c.h.b16 %v672
    %v847 = vunpack.c.l.b16 %v673
    %v848 = vunpack.c.h.b16 %v673
    %v849 = vunpack.c.l.b16 %v674
    %v850 = vunpack.c.h.b16 %v674
    %v851 = vunpack.c.l.b16 %v675
    %v852 = vunpack.c.h.b16 %v675
    %v853 = vunpack.c.l.b16 %v676
    %v854 = vunpack.c.h.b16 %v676
    %v855 = vunpack.c.l.b16 %v677
    %v856 = vunpack.c.h.b16 %v677
    %v857 = vunpack.c.l.b16 %v678
    %v858 = vunpack.c.h.b16 %v678
    %v859 = vunpack.c.l.b16 %v679
    %v860 = vunpack.c.h.b16 %v679
    %v861 = vunpack.c.l.b16 %v680
    %v862 = vunpack.c.h.b16 %v680
    %v863 = vunpack.c.l.b16 %v681
    %v864 = vunpack.c.h.b16 %v681
    %v865 = vunpack.c.l.b16 %v682
    %v866 = vunpack.c.h.b16 %v682
    %v867 = vunpack.c.l.b16 %v683
    %v868 = vunpack.c.h.b16 %v683
    %v869 = vunpack.c.l.b16 %v684
    %v870 = vunpack.c.h.b16 %v684
    %v871 = vunpack.c.l.b16 %v685
    %v872 = vunpack.c.h.b16 %v685
    %v873 = vunpack.c.l.b16 %v686
    %v874 = vunpack.c.h.b16 %v686
    %v875 = vunpack.c.l.b16 %v687
    %v876 = vunpack.c.h.b16 %v687
    %v877 = vunpack.c.l.b16 %v688
    %v878 = vunpack.c.h.b16 %v688
    %v879 = vunpack.c.l.b16 %v689
    %v880 = vunpack.c.h.b16 %v689
    %v881 = vunpack.c.l.b16 %v690
    %v882 = vunpack.c.h.b16 %v690
    %v883 = vpack.c.b16 %v759, %v755
    %v884 = vpack.c.b16 %v760, %v756
    %v885 = vpack.c.b16 %v761, %v757
    %v886 = vpack.c.b16 %v762, %v758
    %v887 = vpack.c.b16 %v767, %v763
    %v888 = vpack.c.b16 %v768, %v764
    %v889 = vpack.c.b16 %v769, %v765
    %v890 = vpack.c.b16 %v770, %v766
    %v891 = vpack.c.b16 %v775, %v771
    %v892 = vpack.c.b16 %v776, %v772
    %v893 = vpack.c.b16 %v777, %v773
    %v894 = vpack.c.b16 %v778, %v774
    %v895 = vpack.c.b16 %v783, %v779
    %v896 = vpack.c.b16 %v784, %v780
    %v897 = vpack.c.b16 %v785, %v781
    %v898 = vpack.c.b16 %v786, %v782
    %v899 = vpack.c.b16 %v791, %v787
    %v900 = vpack.c.b16 %v792, %v788
    %v901 = vpack.c.b16 %v793, %v789
    %v902 = vpack.c.b16 %v794, %v790
    %v903 = vpack.c.b16 %v799, %v795
    %v904 = vpack.c.b16 %v800, %v796
    %v905 = vpack.c.b16 %v801, %v797
    %v906 = vpack.c.b16 %v802, %v798
    %v907 = vpack.c.b16 %v807, %v803
    %v908 = vpack.c.b16 %v808, %v804
    %v909 = vpack.c.b16 %v809, %v805
    %v910 = vpack.c.b16 %v810, %v806
    %v911 = vpack.c.b16 %v815, %v811
    %v912 = vpack.c.b16 %v816, %v812
    %v913 = vpack.c.b16 %v817, %v813
    %v914 = vpack.c.b16 %v818, %v814
    %v915 = vpack.c.b16 %v823, %v819
    %v916 = vpack.c.b16 %v824, %v820
    %v917 = vpack.c.b16 %v825, %v821
    %v918 = vpack.c.b16 %v826, %v822
    %v919 = vpack.c.b16 %v831, %v827
    %v920 = vpack.c.b16 %v832, %v828
    %v921 = vpack.c.b16 %v833, %v829
    %v922 = vpack.c.b16 %v834, %v830
    %v923 = vpack.c.b16 %v839, %v835
    %v924 = vpack.c.b16 %v840, %v836
    %v925 = vpack.c.b16 %v841, %v837
    %v926 = vpack.c.b16 %v842, %v838
    %v927 = vpack.c.b16 %v847, %v843
    %v928 = vpack.c.b16 %v848, %v844
    %v929 = vpack.c.b16 %v849, %v845
    %v930 = vpack.c.b16 %v850, %v846
    %v931 = vpack.c.b16 %v855, %v851
    %v932 = vpack.c.b16 %v856, %v852
    %v933 = vpack.c.b16 %v857, %v853
    %v934 = vpack.c.b16 %v858, %v854
    %v935 = vpack.c.b16 %v863, %v859
    %v936 = vpack.c.b16 %v864, %v860
    %v937 = vpack.c.b16 %v865, %v861
    %v938 = vpack.c.b16 %v866, %v862
    %v939 = vpack.c.b16 %v871, %v867
    %v940 = vpack.c.b16 %v872, %v868
    %v941 = vpack.c.b16 %v873, %v869
    %v942 = vpack.c.b16 %v874, %v870
    %v943 = vpack.c.b16 %v879, %v875
    %v944 = vpack.c.b16 %v880, %v876
    %v945 = vpack.c.b16 %v881, %v877
    %v946 = vpack.c.b16 %v882, %v878
    %1011 = vmatpush.bf16.msra.mxu0 %v911
    %1012 = vmatpush.bf16.msra.mxu0 %v907
    %1013 = vmatpush.bf16.msra.mxu0 %v903
    %1014 = vmatpush.bf16.msra.mxu0 %v899
    %1015 = vmatpush.bf16.msra.mxu0 %v895
    %1016 = vmatpush.bf16.msra.mxu0 %v891
    %1017 = vmatpush.bf16.msra.mxu0 %v887
    %1018 = vmatpush.bf16.msra.mxu0 %v883
    %1019 = vmatmul.bf16.gmra.mxu0 %v625
    %v1020 = vpop.f32.mrf.mxu0
    %v1021 = vadd.f32 %v97, %v1020
    %v1022 = vpop.f32.mrf.mxu0
    %1023 = vdwg.mxu0
    %1024 = vmatpush.bf16.msra.mxu0 %v943
    %1025 = vmatpush.bf16.msra.mxu0 %v939
    %1026 = vmatpush.bf16.msra.mxu0 %v935
    %1027 = vmatpush.bf16.msra.mxu0 %v931
    %1028 = vmatpush.bf16.msra.mxu0 %v927
    %1029 = vmatpush.bf16.msra.mxu0 %v923
    %1030 = vmatpush.bf16.msra.mxu0 %v919
    %1031 = vmatpush.bf16.msra.mxu0 %v915
    %1032 = vmatmul.bf16.gmra.mxu0 %v118
    %v1033 = vpop.f32.mrf.mxu0
    %v1034 = vadd.f32 %v1021, %v1033
    %v1035 = vpop.f32.mrf.mxu0
    %1036 = vdwg.mxu0
    %1037 = vmatpush.bf16.msra.mxu0 %v912
    %1038 = vmatpush.bf16.msra.mxu0 %v908
    %1039 = vmatpush.bf16.msra.mxu0 %v904
    %1040 = vmatpush.bf16.msra.mxu0 %v900
    %1041 = vmatpush.bf16.msra.mxu0 %v896
    %1042 = vmatpush.bf16.msra.mxu0 %v892
    %1043 = vmatpush.bf16.msra.mxu0 %v888
    %1044 = vmatpush.bf16.msra.mxu0 %v884
    %1045 = vmatmul.bf16.gmra.mxu0 %v625
    %v1046 = vpop.f32.mrf.mxu0
    %v1047 = vadd.f32 %v98, %v1046
    %v1048 = vpop.f32.mrf.mxu0
    %1049 = vdwg.mxu0
    %1050 = vmatpush.bf16.msra.mxu0 %v944
    %1051 = vmatpush.bf16.msra.mxu0 %v940
    %1052 = vmatpush.bf16.msra.mxu0 %v936
    %1053 = vmatpush.bf16.msra.mxu0 %v932
    %1054 = vmatpush.bf16.msra.mxu0 %v928
    %1055 = vmatpush.bf16.msra.mxu0 %v924
    %1056 = vmatpush.bf16.msra.mxu0 %v920
    %1057 = vmatpush.bf16.msra.mxu0 %v916
    %1058 = vmatmul.bf16.gmra.mxu0 %v118
    %v1059 = vpop.f32.mrf.mxu0
    %v1060 = vadd.f32 %v1047, %v1059
    %v1061 = vpop.f32.mrf.mxu0
    %1062 = vdwg.mxu0
    %1063 = vmatpush.bf16.msra.mxu0 %v913
    %1064 = vmatpush.bf16.msra.mxu0 %v909
    %1065 = vmatpush.bf16.msra.mxu0 %v905
    %1066 = vmatpush.bf16.msra.mxu0 %v901
    %1067 = vmatpush.bf16.msra.mxu0 %v897
    %1068 = vmatpush.bf16.msra.mxu0 %v893
    %1069 = vmatpush.bf16.msra.mxu0 %v889
    %1070 = vmatpush.bf16.msra.mxu0 %v885
    %1071 = vmatmul.bf16.gmra.mxu0 %v625
    %v1072 = vpop.f32.mrf.mxu0
    %v1073 = vadd.f32 %v99, %v1072
    %v1074 = vpop.f32.mrf.mxu0
    %1075 = vdwg.mxu0
    %1076 = vmatpush.bf16.msra.mxu0 %v945
    %1077 = vmatpush.bf16.msra.mxu0 %v941
    %1078 = vmatpush.bf16.msra.mxu0 %v937
    %1079 = vmatpush.bf16.msra.mxu0 %v933
    %1080 = vmatpush.bf16.msra.mxu0 %v929
    %1081 = vmatpush.bf16.msra.mxu0 %v925
    %1082 = vmatpush.bf16.msra.mxu0 %v921
    %1083 = vmatpush.bf16.msra.mxu0 %v917
    %1084 = vmatmul.bf16.gmra.mxu0 %v118
    %v1085 = vpop.f32.mrf.mxu0
    %v1086 = vadd.f32 %v1073, %v1085
    %v1087 = vpop.f32.mrf.mxu0
    %1088 = vdwg.mxu0
    %1089 = vmatpush.bf16.msra.mxu0 %v914
    %1090 = vmatpush.bf16.msra.mxu0 %v910
    %1091 = vmatpush.bf16.msra.mxu0 %v906
    %1092 = vmatpush.bf16.msra.mxu0 %v902
    %1093 = vmatpush.bf16.msra.mxu0 %v898
    %1094 = vmatpush.bf16.msra.mxu0 %v894
    %1095 = vmatpush.bf16.msra.mxu0 %v890
    %1096 = vmatpush.bf16.msra.mxu0 %v886
    %1097 = vmatmul.bf16.gmra.mxu0 %v625
    %v1098 = vpop.f32.mrf.mxu0
    %v1099 = vadd.f32 %v100, %v1098
    %v1100 = vpop.f32.mrf.mxu0
    %1101 = vdwg.mxu0
    %1102 = vmatpush.bf16.msra.mxu0 %v946
    %1103 = vmatpush.bf16.msra.mxu0 %v942
    %1104 = vmatpush.bf16.msra.mxu0 %v938
    %1105 = vmatpush.bf16.msra.mxu0 %v934
    %1106 = vmatpush.bf16.msra.mxu0 %v930
    %1107 = vmatpush.bf16.msra.mxu0 %v926
    %1108 = vmatpush.bf16.msra.mxu0 %v922
    %1109 = vmatpush.bf16.msra.mxu0 %v918
    %1110 = vmatmul.bf16.gmra.mxu0 %v118
    %v1111 = vpop.f32.mrf.mxu0
    %v1112 = vadd.f32 %v1099, %v1111
    %v1113 = vpop.f32.mrf.mxu0
    %1114 = vdwg.mxu0
    %v1115 = vmul.f32 %v1034, 0.5
    %v1116 = vmul.f32 %v1060, 0.5
    %v1117 = vmul.f32 %v1086, 0.5
    %v1118 = vtanh.pop %v1115
    %v1119 = vtanh.pop %v1116
    %v1120 = vtanh.pop %v1117
    %v1121 = vmul.f32 %v1118, 0.5
    %v1122 = vmul.f32 %v1119, 0.5
    %v1123 = vmul.f32 %v1120, 0.5
    %v1124 = vadd.f32 %v1121, 0.5
    %v1125 = vadd.f32 %v1122, 0.5
    %v1126 = vadd.f32 %v1123, 0.5
    %v1127 = vtanh.pop %v1112
    %v1128 = vmul.f32 %v1125, 0.0
    %v1129 = vmul.f32 %v1124, %v1127
    %v1130 = vadd.f32 %v1128, %v1129
    %v1131 = vtanh.pop %v1130
    %v1132 = vmul.f32 %v1126, %v1131
    %s1133 = scalar_lea.vmem [#allocation2], 8
    %v1134 = vld [vmem:[%s1133] sm:$0xff]
    %v1135 = vpack.c.bf16 %v1134, %v1134
    %1136 = vmatpush.bf16.msra.mxu0 %v403
    %1137 = vmatpush.bf16.msra.mxu0 %v399
    %1138 = vmatpush.bf16.msra.mxu0 %v395
    %1139 = vmatpush.bf16.msra.mxu0 %v391
    %1140 = vmatpush.bf16.msra.mxu0 %v387
    %1141 = vmatpush.bf16.msra.mxu0 %v383
    %1142 = vmatpush.bf16.msra.mxu0 %v379
    %1143 = vmatpush.bf16.msra.mxu0 %v375
    %1144 = vmatmul.bf16.gmra.mxu0 %v1135
    %v1145 = vpop.f32.mrf.mxu0
    %v1146 = vadd.f32 %v86, %v1145
    %v1147 = vpop.f32.mrf.mxu0
    %1148 = vdwg.mxu0
    %1149 = vmatpush.bf16.msra.mxu0 %v435
    %1150 = vmatpush.bf16.msra.mxu0 %v431
    %1151 = vmatpush.bf16.msra.mxu0 %v427
    %1152 = vmatpush.bf16.msra.mxu0 %v423
    %1153 = vmatpush.bf16.msra.mxu0 %v419
    %1154 = vmatpush.bf16.msra.mxu0 %v415
    %1155 = vmatpush.bf16.msra.mxu0 %v411
    %1156 = vmatpush.bf16.msra.mxu0 %v407
    %1157 = vmatmul.bf16.gmra.mxu0 %v625
    %v1158 = vpop.f32.mrf.mxu0
    %v1159 = vadd.f32 %v1146, %v1158
    %v1160 = vpop.f32.mrf.mxu0
    %1161 = vdwg.mxu0
    %1162 = vmatpush.bf16.msra.mxu0 %v404
    %1163 = vmatpush.bf16.msra.mxu0 %v400
    %1164 = vmatpush.bf16.msra.mxu0 %v396
    %1165 = vmatpush.bf16.msra.mxu0 %v392
    %1166 = vmatpush.bf16.msra.mxu0 %v388
    %1167 = vmatpush.bf16.msra.mxu0 %v384
    %1168 = vmatpush.bf16.msra.mxu0 %v380
    %1169 = vmatpush.bf16.msra.mxu0 %v376
    %1170 = vmatmul.bf16.gmra.mxu0 %v1135
    %v1171 = vpop.f32.mrf.mxu0
    %v1172 = vadd.f32 %v87, %v1171
    %v1173 = vpop.f32.mrf.mxu0
    %1174 = vdwg.mxu0
    %1175 = vmatpush.bf16.msra.mxu0 %v436
    %1176 = vmatpush.bf16.msra.mxu0 %v432
    %1177 = vmatpush.bf16.msra.mxu0 %v428
    %1178 = vmatpush.bf16.msra.mxu0 %v424
    %1179 = vmatpush.bf16.msra.mxu0 %v420
    %1180 = vmatpush.bf16.msra.mxu0 %v416
    %1181 = vmatpush.bf16.msra.mxu0 %v412
    %1182 = vmatpush.bf16.msra.mxu0 %v408
    %1183 = vmatmul.bf16.gmra.mxu0 %v625
    %v1184 = vpop.f32.mrf.mxu0
    %v1185 = vadd.f32 %v1172, %v1184
    %v1186 = vpop.f32.mrf.mxu0
    %1187 = vdwg.mxu0
    %1188 = vmatpush.bf16.msra.mxu0 %v405
    %1189 = vmatpush.bf16.msra.mxu0 %v401
    %1190 = vmatpush.bf16.msra.mxu0 %v397
    %1191 = vmatpush.bf16.msra.mxu0 %v393
    %1192 = vmatpush.bf16.msra.mxu0 %v389
    %1193 = vmatpush.bf16.msra.mxu0 %v385
    %1194 = vmatpush.bf16.msra.mxu0 %v381
    %1195 = vmatpush.bf16.msra.mxu0 %v377
    %1196 = vmatmul.bf16.gmra.mxu0 %v1135
    %v1197 = vpop.f32.mrf.mxu0
    %v1198 = vadd.f32 %v88, %v1197
    %v1199 = vpop.f32.mrf.mxu0
    %1200 = vdwg.mxu0
    %1201 = vmatpush.bf16.msra.mxu0 %v437
    %1202 = vmatpush.bf16.msra.mxu0 %v433
    %1203 = vmatpush.bf16.msra.mxu0 %v429
    %1204 = vmatpush.bf16.msra.mxu0 %v425
    %1205 = vmatpush.bf16.msra.mxu0 %v421
    %1206 = vmatpush.bf16.msra.mxu0 %v417
    %1207 = vmatpush.bf16.msra.mxu0 %v413
    %1208 = vmatpush.bf16.msra.mxu0 %v409
    %1209 = vmatmul.bf16.gmra.mxu0 %v625
    %v1210 = vpop.f32.mrf.mxu0
    %v1211 = vadd.f32 %v1198, %v1210
    %v1212 = vpop.f32.mrf.mxu0
    %1213 = vdwg.mxu0
    %1214 = vmatpush.bf16.msra.mxu0 %v406
    %1215 = vmatpush.bf16.msra.mxu0 %v402
    %1216 = vmatpush.bf16.msra.mxu0 %v398
    %1217 = vmatpush.bf16.msra.mxu0 %v394
    %1218 = vmatpush.bf16.msra.mxu0 %v390
    %1219 = vmatpush.bf16.msra.mxu0 %v386
    %1220 = vmatpush.bf16.msra.mxu0 %v382
    %1221 = vmatpush.bf16.msra.mxu0 %v378
    %1222 = vmatmul.bf16.gmra.mxu0 %v1135
    %v1223 = vpop.f32.mrf.mxu0
    %v1224 = vadd.f32 %v89, %v1223
    %v1225 = vpop.f32.mrf.mxu0
    %1226 = vdwg.mxu0
    %1227 = vmatpush.bf16.msra.mxu0 %v438
    %1228 = vmatpush.bf16.msra.mxu0 %v434
    %1229 = vmatpush.bf16.msra.mxu0 %v430
    %1230 = vmatpush.bf16.msra.mxu0 %v426
    %1231 = vmatpush.bf16.msra.mxu0 %v422
    %1232 = vmatpush.bf16.msra.mxu0 %v418
    %1233 = vmatpush.bf16.msra.mxu0 %v414
    %1234 = vmatpush.bf16.msra.mxu0 %v410
    %1235 = vmatmul.bf16.gmra.mxu0 %v625
    %v1236 = vpop.f32.mrf.mxu0
    %v1237 = vadd.f32 %v1224, %v1236
    %v1238 = vpop.f32.mrf.mxu0
    %1239 = vdwg.mxu0
    %v1240 = vmul.f32 %v1159, 0.5
    %v1241 = vmul.f32 %v1185, 0.5
    %v1242 = vmul.f32 %v1211, 0.5
    %v1243 = vtanh.pop %v1240
    %v1244 = vtanh.pop %v1241
    %v1245 = vtanh.pop %v1242
    %v1246 = vmul.f32 %v1243, 0.5
    %v1247 = vmul.f32 %v1244, 0.5
    %v1248 = vmul.f32 %v1245, 0.5
    %v1249 = vadd.f32 %v1246, 0.5
    %v1250 = vadd.f32 %v1247, 0.5
    %v1251 = vadd.f32 %v1248, 0.5
    %v1252 = vtanh.pop %v1237
    %v1253 = vmul.f32 %v1250, %v622
    %v1254 = vmul.f32 %v1249, %v1252
    %v1255 = vadd.f32 %v1253, %v1254
    %v1256 = vtanh.pop %v1255
    %v1257 = vmul.f32 %v1251, %v1256
    %v1258 = vpack.c.bf16 %v1132, %v1132
    %s1259 = scalar_lea.vmem [#allocation5], 1024
    %v1260 = vld [vmem:[%s1259] sm:$0xff]
    %v1261 = vld [vmem:[%s1259 + $0x8] sm:$0xff]
    %v1262 = vld [vmem:[%s1259 + $0x10] sm:$0xff]
    %v1263 = vld [vmem:[%s1259 + $0x18] sm:$0xff]
    %v1264 = vld [vmem:[%s1259 + $0x20] sm:$0xff]
    %v1265 = vld [vmem:[%s1259 + $0x28] sm:$0xff]
    %v1266 = vld [vmem:[%s1259 + $0x30] sm:$0xff]
    %v1267 = vld [vmem:[%s1259 + $0x38] sm:$0xff]
    %v1268 = vld [vmem:[%s1259 + $0x40] sm:$0xff]
    %v1269 = vld [vmem:[%s1259 + $0x48] sm:$0xff]
    %v1270 = vld [vmem:[%s1259 + $0x50] sm:$0xff]
    %v1271 = vld [vmem:[%s1259 + $0x58] sm:$0xff]
    %v1272 = vld [vmem:[%s1259 + $0x60] sm:$0xff]
    %v1273 = vld [vmem:[%s1259 + $0x68] sm:$0xff]
    %v1274 = vld [vmem:[%s1259 + $0x70] sm:$0xff]
    %v1275 = vld [vmem:[%s1259 + $0x78] sm:$0xff]
    %v1276 = vld [vmem:[%s1259 + $0x80] sm:$0xff]
    %v1277 = vld [vmem:[%s1259 + $0x88] sm:$0xff]
    %v1278 = vld [vmem:[%s1259 + $0x90] sm:$0xff]
    %v1279 = vld [vmem:[%s1259 + $0x98] sm:$0xff]
    %v1280 = vld [vmem:[%s1259 + $0xa0] sm:$0xff]
    %v1281 = vld [vmem:[%s1259 + $0xa8] sm:$0xff]
    %v1282 = vld [vmem:[%s1259 + $0xb0] sm:$0xff]
    %v1283 = vld [vmem:[%s1259 + $0xb8] sm:$0xff]
    %v1284 = vld [vmem:[%s1259 + $0xc0] sm:$0xff]
    %v1285 = vld [vmem:[%s1259 + $0xc8] sm:$0xff]
    %v1286 = vld [vmem:[%s1259 + $0xd0] sm:$0xff]
    %v1287 = vld [vmem:[%s1259 + $0xd8] sm:$0xff]
    %v1288 = vld [vmem:[%s1259 + $0xe0] sm:$0xff]
    %v1289 = vld [vmem:[%s1259 + $0xe8] sm:$0xff]
    %v1290 = vld [vmem:[%s1259 + $0xf0] sm:$0xff]
    %v1291 = vld [vmem:[%s1259 + $0xf8] sm:$0xff]
    %v1292 = vld [vmem:[%s1259 + $0x100] sm:$0xff]
    %v1293 = vld [vmem:[%s1259 + $0x108] sm:$0xff]
    %v1294 = vld [vmem:[%s1259 + $0x110] sm:$0xff]
    %v1295 = vld [vmem:[%s1259 + $0x118] sm:$0xff]
    %v1296 = vld [vmem:[%s1259 + $0x120] sm:$0xff]
    %v1297 = vld [vmem:[%s1259 + $0x128] sm:$0xff]
    %v1298 = vld [vmem:[%s1259 + $0x130] sm:$0xff]
    %v1299 = vld [vmem:[%s1259 + $0x138] sm:$0xff]
    %v1300 = vld [vmem:[%s1259 + $0x140] sm:$0xff]
    %v1301 = vld [vmem:[%s1259 + $0x148] sm:$0xff]
    %v1302 = vld [vmem:[%s1259 + $0x150] sm:$0xff]
    %v1303 = vld [vmem:[%s1259 + $0x158] sm:$0xff]
    %v1304 = vld [vmem:[%s1259 + $0x160] sm:$0xff]
    %v1305 = vld [vmem:[%s1259 + $0x168] sm:$0xff]
    %v1306 = vld [vmem:[%s1259 + $0x170] sm:$0xff]
    %v1307 = vld [vmem:[%s1259 + $0x178] sm:$0xff]
    %v1308 = vld [vmem:[%s1259 + $0x180] sm:$0xff]
    %v1309 = vld [vmem:[%s1259 + $0x188] sm:$0xff]
    %v1310 = vld [vmem:[%s1259 + $0x190] sm:$0xff]
    %v1311 = vld [vmem:[%s1259 + $0x198] sm:$0xff]
    %v1312 = vld [vmem:[%s1259 + $0x1a0] sm:$0xff]
    %v1313 = vld [vmem:[%s1259 + $0x1a8] sm:$0xff]
    %v1314 = vld [vmem:[%s1259 + $0x1b0] sm:$0xff]
    %v1315 = vld [vmem:[%s1259 + $0x1b8] sm:$0xff]
    %v1316 = vld [vmem:[%s1259 + $0x1c0] sm:$0xff]
    %v1317 = vld [vmem:[%s1259 + $0x1c8] sm:$0xff]
    %v1318 = vld [vmem:[%s1259 + $0x1d0] sm:$0xff]
    %v1319 = vld [vmem:[%s1259 + $0x1d8] sm:$0xff]
    %v1320 = vld [vmem:[%s1259 + $0x1e0] sm:$0xff]
    %v1321 = vld [vmem:[%s1259 + $0x1e8] sm:$0xff]
    %v1322 = vld [vmem:[%s1259 + $0x1f0] sm:$0xff]
    %v1323 = vld [vmem:[%s1259 + $0x1f8] sm:$0xff]
    %v1388 = vunpack.c.l.b16 %v1260
    %v1389 = vunpack.c.h.b16 %v1260
    %v1390 = vunpack.c.l.b16 %v1261
    %v1391 = vunpack.c.h.b16 %v1261
    %v1392 = vunpack.c.l.b16 %v1262
    %v1393 = vunpack.c.h.b16 %v1262
    %v1394 = vunpack.c.l.b16 %v1263
    %v1395 = vunpack.c.h.b16 %v1263
    %v1396 = vunpack.c.l.b16 %v1264
    %v1397 = vunpack.c.h.b16 %v1264
    %v1398 = vunpack.c.l.b16 %v1265
    %v1399 = vunpack.c.h.b16 %v1265
    %v1400 = vunpack.c.l.b16 %v1266
    %v1401 = vunpack.c.h.b16 %v1266
    %v1402 = vunpack.c.l.b16 %v1267
    %v1403 = vunpack.c.h.b16 %v1267
    %v1404 = vunpack.c.l.b16 %v1268
    %v1405 = vunpack.c.h.b16 %v1268
    %v1406 = vunpack.c.l.b16 %v1269
    %v1407 = vunpack.c.h.b16 %v1269
    %v1408 = vunpack.c.l.b16 %v1270
    %v1409 = vunpack.c.h.b16 %v1270
    %v1410 = vunpack.c.l.b16 %v1271
    %v1411 = vunpack.c.h.b16 %v1271
    %v1412 = vunpack.c.l.b16 %v1272
    %v1413 = vunpack.c.h.b16 %v1272
    %v1414 = vunpack.c.l.b16 %v1273
    %v1415 = vunpack.c.h.b16 %v1273
    %v1416 = vunpack.c.l.b16 %v1274
    %v1417 = vunpack.c.h.b16 %v1274
    %v1418 = vunpack.c.l.b16 %v1275
    %v1419 = vunpack.c.h.b16 %v1275
    %v1420 = vunpack.c.l.b16 %v1276
    %v1421 = vunpack.c.h.b16 %v1276
    %v1422 = vunpack.c.l.b16 %v1277
    %v1423 = vunpack.c.h.b16 %v1277
    %v1424 = vunpack.c.l.b16 %v1278
    %v1425 = vunpack.c.h.b16 %v1278
    %v1426 = vunpack.c.l.b16 %v1279
    %v1427 = vunpack.c.h.b16 %v1279
    %v1428 = vunpack.c.l.b16 %v1280
    %v1429 = vunpack.c.h.b16 %v1280
    %v1430 = vunpack.c.l.b16 %v1281
    %v1431 = vunpack.c.h.b16 %v1281
    %v1432 = vunpack.c.l.b16 %v1282
    %v1433 = vunpack.c.h.b16 %v1282
    %v1434 = vunpack.c.l.b16 %v1283
    %v1435 = vunpack.c.h.b16 %v1283
    %v1436 = vunpack.c.l.b16 %v1284
    %v1437 = vunpack.c.h.b16 %v1284
    %v1438 = vunpack.c.l.b16 %v1285
    %v1439 = vunpack.c.h.b16 %v1285
    %v1440 = vunpack.c.l.b16 %v1286
    %v1441 = vunpack.c.h.b16 %v1286
    %v1442 = vunpack.c.l.b16 %v1287
    %v1443 = vunpack.c.h.b16 %v1287
    %v1444 = vunpack.c.l.b16 %v1288
    %v1445 = vunpack.c.h.b16 %v1288
    %v1446 = vunpack.c.l.b16 %v1289
    %v1447 = vunpack.c.h.b16 %v1289
    %v1448 = vunpack.c.l.b16 %v1290
    %v1449 = vunpack.c.h.b16 %v1290
    %v1450 = vunpack.c.l.b16 %v1291
    %v1451 = vunpack.c.h.b16 %v1291
    %v1452 = vunpack.c.l.b16 %v1292
    %v1453 = vunpack.c.h.b16 %v1292
    %v1454 = vunpack.c.l.b16 %v1293
    %v1455 = vunpack.c.h.b16 %v1293
    %v1456 = vunpack.c.l.b16 %v1294
    %v1457 = vunpack.c.h.b16 %v1294
    %v1458 = vunpack.c.l.b16 %v1295
    %v1459 = vunpack.c.h.b16 %v1295
    %v1460 = vunpack.c.l.b16 %v1296
    %v1461 = vunpack.c.h.b16 %v1296
    %v1462 = vunpack.c.l.b16 %v1297
    %v1463 = vunpack.c.h.b16 %v1297
    %v1464 = vunpack.c.l.b16 %v1298
    %v1465 = vunpack.c.h.b16 %v1298
    %v1466 = vunpack.c.l.b16 %v1299
    %v1467 = vunpack.c.h.b16 %v1299
    %v1468 = vunpack.c.l.b16 %v1300
    %v1469 = vunpack.c.h.b16 %v1300
    %v1470 = vunpack.c.l.b16 %v1301
    %v1471 = vunpack.c.h.b16 %v1301
    %v1472 = vunpack.c.l.b16 %v1302
    %v1473 = vunpack.c.h.b16 %v1302
    %v1474 = vunpack.c.l.b16 %v1303
    %v1475 = vunpack.c.h.b16 %v1303
    %v1476 = vunpack.c.l.b16 %v1304
    %v1477 = vunpack.c.h.b16 %v1304
    %v1478 = vunpack.c.l.b16 %v1305
    %v1479 = vunpack.c.h.b16 %v1305
    %v1480 = vunpack.c.l.b16 %v1306
    %v1481 = vunpack.c.h.b16 %v1306
    %v1482 = vunpack.c.l.b16 %v1307
    %v1483 = vunpack.c.h.b16 %v1307
    %v1484 = vunpack.c.l.b16 %v1308
    %v1485 = vunpack.c.h.b16 %v1308
    %v1486 = vunpack.c.l.b16 %v1309
    %v1487 = vunpack.c.h.b16 %v1309
    %v1488 = vunpack.c.l.b16 %v1310
    %v1489 = vunpack.c.h.b16 %v1310
    %v1490 = vunpack.c.l.b16 %v1311
    %v1491 = vunpack.c.h.b16 %v1311
    %v1492 = vunpack.c.l.b16 %v1312
    %v1493 = vunpack.c.h.b16 %v1312
    %v1494 = vunpack.c.l.b16 %v1313
    %v1495 = vunpack.c.h.b16 %v1313
    %v1496 = vunpack.c.l.b16 %v1314
    %v1497 = vunpack.c.h.b16 %v1314
    %v1498 = vunpack.c.l.b16 %v1315
    %v1499 = vunpack.c.h.b16 %v1315
    %v1500 = vunpack.c.l.b16 %v1316
    %v1501 = vunpack.c.h.b16 %v1316
    %v1502 = vunpack.c.l.b16 %v1317
    %v1503 = vunpack.c.h.b16 %v1317
    %v1504 = vunpack.c.l.b16 %v1318
    %v1505 = vunpack.c.h.b16 %v1318
    %v1506 = vunpack.c.l.b16 %v1319
    %v1507 = vunpack.c.h.b16 %v1319
    %v1508 = vunpack.c.l.b16 %v1320
    %v1509 = vunpack.c.h.b16 %v1320
    %v1510 = vunpack.c.l.b16 %v1321
    %v1511 = vunpack.c.h.b16 %v1321
    %v1512 = vunpack.c.l.b16 %v1322
    %v1513 = vunpack.c.h.b16 %v1322
    %v1514 = vunpack.c.l.b16 %v1323
    %v1515 = vunpack.c.h.b16 %v1323
    %v1516 = vpack.c.b16 %v1392, %v1388
    %v1517 = vpack.c.b16 %v1393, %v1389
    %v1518 = vpack.c.b16 %v1394, %v1390
    %v1519 = vpack.c.b16 %v1395, %v1391
    %v1520 = vpack.c.b16 %v1400, %v1396
    %v1521 = vpack.c.b16 %v1401, %v1397
    %v1522 = vpack.c.b16 %v1402, %v1398
    %v1523 = vpack.c.b16 %v1403, %v1399
    %v1524 = vpack.c.b16 %v1408, %v1404
    %v1525 = vpack.c.b16 %v1409, %v1405
    %v1526 = vpack.c.b16 %v1410, %v1406
    %v1527 = vpack.c.b16 %v1411, %v1407
    %v1528 = vpack.c.b16 %v1416, %v1412
    %v1529 = vpack.c.b16 %v1417, %v1413
    %v1530 = vpack.c.b16 %v1418, %v1414
    %v1531 = vpack.c.b16 %v1419, %v1415
    %v1532 = vpack.c.b16 %v1424, %v1420
    %v1533 = vpack.c.b16 %v1425, %v1421
    %v1534 = vpack.c.b16 %v1426, %v1422
    %v1535 = vpack.c.b16 %v1427, %v1423
    %v1536 = vpack.c.b16 %v1432, %v1428
    %v1537 = vpack.c.b16 %v1433, %v1429
    %v1538 = vpack.c.b16 %v1434, %v1430
    %v1539 = vpack.c.b16 %v1435, %v1431
    %v1540 = vpack.c.b16 %v1440, %v1436
    %v1541 = vpack.c.b16 %v1441, %v1437
    %v1542 = vpack.c.b16 %v1442, %v1438
    %v1543 = vpack.c.b16 %v1443, %v1439
    %v1544 = vpack.c.b16 %v1448, %v1444
    %v1545 = vpack.c.b16 %v1449, %v1445
    %v1546 = vpack.c.b16 %v1450, %v1446
    %v1547 = vpack.c.b16 %v1451, %v1447
    %v1548 = vpack.c.b16 %v1456, %v1452
    %v1549 = vpack.c.b16 %v1457, %v1453
    %v1550 = vpack.c.b16 %v1458, %v1454
    %v1551 = vpack.c.b16 %v1459, %v1455
    %v1552 = vpack.c.b16 %v1464, %v1460
    %v1553 = vpack.c.b16 %v1465, %v1461
    %v1554 = vpack.c.b16 %v1466, %v1462
    %v1555 = vpack.c.b16 %v1467, %v1463
    %v1556 = vpack.c.b16 %v1472, %v1468
    %v1557 = vpack.c.b16 %v1473, %v1469
    %v1558 = vpack.c.b16 %v1474, %v1470
    %v1559 = vpack.c.b16 %v1475, %v1471
    %v1560 = vpack.c.b16 %v1480, %v1476
    %v1561 = vpack.c.b16 %v1481, %v1477
    %v1562 = vpack.c.b16 %v1482, %v1478
    %v1563 = vpack.c.b16 %v1483, %v1479
    %v1564 = vpack.c.b16 %v1488, %v1484
    %v1565 = vpack.c.b16 %v1489, %v1485
    %v1566 = vpack.c.b16 %v1490, %v1486
    %v1567 = vpack.c.b16 %v1491, %v1487
    %v1568 = vpack.c.b16 %v1496, %v1492
    %v1569 = vpack.c.b16 %v1497, %v1493
    %v1570 = vpack.c.b16 %v1498, %v1494
    %v1571 = vpack.c.b16 %v1499, %v1495
    %v1572 = vpack.c.b16 %v1504, %v1500
    %v1573 = vpack.c.b16 %v1505, %v1501
    %v1574 = vpack.c.b16 %v1506, %v1502
    %v1575 = vpack.c.b16 %v1507, %v1503
    %v1576 = vpack.c.b16 %v1512, %v1508
    %v1577 = vpack.c.b16 %v1513, %v1509
    %v1578 = vpack.c.b16 %v1514, %v1510
    %v1579 = vpack.c.b16 %v1515, %v1511
    %1644 = vmatpush.bf16.msra.mxu0 %v1544
    %1645 = vmatpush.bf16.msra.mxu0 %v1540
    %1646 = vmatpush.bf16.msra.mxu0 %v1536
    %1647 = vmatpush.bf16.msra.mxu0 %v1532
    %1648 = vmatpush.bf16.msra.mxu0 %v1528
    %1649 = vmatpush.bf16.msra.mxu0 %v1524
    %1650 = vmatpush.bf16.msra.mxu0 %v1520
    %1651 = vmatpush.bf16.msra.mxu0 %v1516
    %1652 = vmatmul.bf16.gmra.mxu0 %v1258
    %v1653 = vpop.f32.mrf.mxu0
    %v1654 = vadd.f32 %v108, %v1653
    %v1655 = vpop.f32.mrf.mxu0
    %1656 = vdwg.mxu0
    %1657 = vmatpush.bf16.msra.mxu0 %v1576
    %1658 = vmatpush.bf16.msra.mxu0 %v1572
    %1659 = vmatpush.bf16.msra.mxu0 %v1568
    %1660 = vmatpush.bf16.msra.mxu0 %v1564
    %1661 = vmatpush.bf16.msra.mxu0 %v1560
    %1662 = vmatpush.bf16.msra.mxu0 %v1556
    %1663 = vmatpush.bf16.msra.mxu0 %v1552
    %1664 = vmatpush.bf16.msra.mxu0 %v1548
    %1665 = vmatmul.bf16.gmra.mxu0 %v118
    %v1666 = vpop.f32.mrf.mxu0
    %v1667 = vadd.f32 %v1654, %v1666
    %v1668 = vpop.f32.mrf.mxu0
    %1669 = vdwg.mxu0
    %1670 = vmatpush.bf16.msra.mxu0 %v1545
    %1671 = vmatpush.bf16.msra.mxu0 %v1541
    %1672 = vmatpush.bf16.msra.mxu0 %v1537
    %1673 = vmatpush.bf16.msra.mxu0 %v1533
    %1674 = vmatpush.bf16.msra.mxu0 %v1529
    %1675 = vmatpush.bf16.msra.mxu0 %v1525
    %1676 = vmatpush.bf16.msra.mxu0 %v1521
    %1677 = vmatpush.bf16.msra.mxu0 %v1517
    %1678 = vmatmul.bf16.gmra.mxu0 %v1258
    %v1679 = vpop.f32.mrf.mxu0
    %v1680 = vadd.f32 %v109, %v1679
    %v1681 = vpop.f32.mrf.mxu0
    %1682 = vdwg.mxu0
    %1683 = vmatpush.bf16.msra.mxu0 %v1577
    %1684 = vmatpush.bf16.msra.mxu0 %v1573
    %1685 = vmatpush.bf16.msra.mxu0 %v1569
    %1686 = vmatpush.bf16.msra.mxu0 %v1565
    %1687 = vmatpush.bf16.msra.mxu0 %v1561
    %1688 = vmatpush.bf16.msra.mxu0 %v1557
    %1689 = vmatpush.bf16.msra.mxu0 %v1553
    %1690 = vmatpush.bf16.msra.mxu0 %v1549
    %1691 = vmatmul.bf16.gmra.mxu0 %v118
    %v1692 = vpop.f32.mrf.mxu0
    %v1693 = vadd.f32 %v1680, %v1692
    %v1694 = vpop.f32.mrf.mxu0
    %1695 = vdwg.mxu0
    %1696 = vmatpush.bf16.msra.mxu0 %v1546
    %1697 = vmatpush.bf16.msra.mxu0 %v1542
    %1698 = vmatpush.bf16.msra.mxu0 %v1538
    %1699 = vmatpush.bf16.msra.mxu0 %v1534
    %1700 = vmatpush.bf16.msra.mxu0 %v1530
    %1701 = vmatpush.bf16.msra.mxu0 %v1526
    %1702 = vmatpush.bf16.msra.mxu0 %v1522
    %1703 = vmatpush.bf16.msra.mxu0 %v1518
    %1704 = vmatmul.bf16.gmra.mxu0 %v1258
    %v1705 = vpop.f32.mrf.mxu0
    %v1706 = vadd.f32 %v110, %v1705
    %v1707 = vpop.f32.mrf.mxu0
    %1708 = vdwg.mxu0
    %1709 = vmatpush.bf16.msra.mxu0 %v1578
    %1710 = vmatpush.bf16.msra.mxu0 %v1574
    %1711 = vmatpush.bf16.msra.mxu0 %v1570
    %1712 = vmatpush.bf16.msra.mxu0 %v1566
    %1713 = vmatpush.bf16.msra.mxu0 %v1562
    %1714 = vmatpush.bf16.msra.mxu0 %v1558
    %1715 = vmatpush.bf16.msra.mxu0 %v1554
    %1716 = vmatpush.bf16.msra.mxu0 %v1550
    %1717 = vmatmul.bf16.gmra.mxu0 %v118
    %v1718 = vpop.f32.mrf.mxu0
    %v1719 = vadd.f32 %v1706, %v1718
    %v1720 = vpop.f32.mrf.mxu0
    %1721 = vdwg.mxu0
    %1722 = vmatpush.bf16.msra.mxu0 %v1547
    %1723 = vmatpush.bf16.msra.mxu0 %v1543
    %1724 = vmatpush.bf16.msra.mxu0 %v1539
    %1725 = vmatpush.bf16.msra.mxu0 %v1535
    %1726 = vmatpush.bf16.msra.mxu0 %v1531
    %1727 = vmatpush.bf16.msra.mxu0 %v1527
    %1728 = vmatpush.bf16.msra.mxu0 %v1523
    %1729 = vmatpush.bf16.msra.mxu0 %v1519
    %1730 = vmatmul.bf16.gmra.mxu0 %v1258
    %v1731 = vpop.f32.mrf.mxu0
    %v1732 = vadd.f32 %v111, %v1731
    %v1733 = vpop.f32.mrf.mxu0
    %1734 = vdwg.mxu0
    %1735 = vmatpush.bf16.msra.mxu0 %v1579
    %1736 = vmatpush.bf16.msra.mxu0 %v1575
    %1737 = vmatpush.bf16.msra.mxu0 %v1571
    %1738 = vmatpush.bf16.msra.mxu0 %v1567
    %1739 = vmatpush.bf16.msra.mxu0 %v1563
    %1740 = vmatpush.bf16.msra.mxu0 %v1559
    %1741 = vmatpush.bf16.msra.mxu0 %v1555
    %1742 = vmatpush.bf16.msra.mxu0 %v1551
    %1743 = vmatmul.bf16.gmra.mxu0 %v118
    %v1744 = vpop.f32.mrf.mxu0
    %v1745 = vadd.f32 %v1732, %v1744
    %v1746 = vpop.f32.mrf.mxu0
    %1747 = vdwg.mxu0
    %v1748 = vmul.f32 %v1667, 0.5
    %v1749 = vmul.f32 %v1693, 0.5
    %v1750 = vmul.f32 %v1719, 0.5
    %v1751 = vtanh.pop %v1748
    %v1752 = vtanh.pop %v1749
    %v1753 = vtanh.pop %v1750
    %v1754 = vmul.f32 %v1751, 0.5
    %v1755 = vmul.f32 %v1752, 0.5
    %v1756 = vmul.f32 %v1753, 0.5
    %v1757 = vadd.f32 %v1754, 0.5
    %v1758 = vadd.f32 %v1755, 0.5
    %v1759 = vadd.f32 %v1756, 0.5
    %v1760 = vtanh.pop %v1745
    %v1761 = vmul.f32 %v1758, 0.0
    %v1762 = vmul.f32 %v1757, %v1760
    %v1763 = vadd.f32 %v1761, %v1762
    %v1764 = vtanh.pop %v1763
    %v1765 = vmul.f32 %v1759, %v1764
    %v1766 = vpack.c.bf16 %v1257, %v1257
    %1767 = vmatpush.bf16.msra.mxu0 %v911
    %1768 = vmatpush.bf16.msra.mxu0 %v907
    %1769 = vmatpush.bf16.msra.mxu0 %v903
    %1770 = vmatpush.bf16.msra.mxu0 %v899
    %1771 = vmatpush.bf16.msra.mxu0 %v895
    %1772 = vmatpush.bf16.msra.mxu0 %v891
    %1773 = vmatpush.bf16.msra.mxu0 %v887
    %1774 = vmatpush.bf16.msra.mxu0 %v883
    %1775 = vmatmul.bf16.gmra.mxu0 %v1766
    %v1776 = vpop.f32.mrf.mxu0
    %v1777 = vadd.f32 %v97, %v1776
    %v1778 = vpop.f32.mrf.mxu0
    %1779 = vdwg.mxu0
    %1780 = vmatpush.bf16.msra.mxu0 %v943
    %1781 = vmatpush.bf16.msra.mxu0 %v939
    %1782 = vmatpush.bf16.msra.mxu0 %v935
    %1783 = vmatpush.bf16.msra.mxu0 %v931
    %1784 = vmatpush.bf16.msra.mxu0 %v927
    %1785 = vmatpush.bf16.msra.mxu0 %v923
    %1786 = vmatpush.bf16.msra.mxu0 %v919
    %1787 = vmatpush.bf16.msra.mxu0 %v915
    %1788 = vmatmul.bf16.gmra.mxu0 %v1258
    %v1789 = vpop.f32.mrf.mxu0
    %v1790 = vadd.f32 %v1777, %v1789
    %v1791 = vpop.f32.mrf.mxu0
    %1792 = vdwg.mxu0
    %1793 = vmatpush.bf16.msra.mxu0 %v912
    %1794 = vmatpush.bf16.msra.mxu0 %v908
    %1795 = vmatpush.bf16.msra.mxu0 %v904
    %1796 = vmatpush.bf16.msra.mxu0 %v900
    %1797 = vmatpush.bf16.msra.mxu0 %v896
    %1798 = vmatpush.bf16.msra.mxu0 %v892
    %1799 = vmatpush.bf16.msra.mxu0 %v888
    %1800 = vmatpush.bf16.msra.mxu0 %v884
    %1801 = vmatmul.bf16.gmra.mxu0 %v1766
    %v1802 = vpop.f32.mrf.mxu0
    %v1803 = vadd.f32 %v98, %v1802
    %v1804 = vpop.f32.mrf.mxu0
    %1805 = vdwg.mxu0
    %1806 = vmatpush.bf16.msra.mxu0 %v944
    %1807 = vmatpush.bf16.msra.mxu0 %v940
    %1808 = vmatpush.bf16.msra.mxu0 %v936
    %1809 = vmatpush.bf16.msra.mxu0 %v932
    %1810 = vmatpush.bf16.msra.mxu0 %v928
    %1811 = vmatpush.bf16.msra.mxu0 %v924
    %1812 = vmatpush.bf16.msra.mxu0 %v920
    %1813 = vmatpush.bf16.msra.mxu0 %v916
    %1814 = vmatmul.bf16.gmra.mxu0 %v1258
    %v1815 = vpop.f32.mrf.mxu0
    %v1816 = vadd.f32 %v1803, %v1815
    %v1817 = vpop.f32.mrf.mxu0
    %1818 = vdwg.mxu0
    %1819 = vmatpush.bf16.msra.mxu0 %v913
    %1820 = vmatpush.bf16.msra.mxu0 %v909
    %1821 = vmatpush.bf16.msra.mxu0 %v905
    %1822 = vmatpush.bf16.msra.mxu0 %v901
    %1823 = vmatpush.bf16.msra.mxu0 %v897
    %1824 = vmatpush.bf16.msra.mxu0 %v893
    %1825 = vmatpush.bf16.msra.mxu0 %v889
    %1826 = vmatpush.bf16.msra.mxu0 %v885
    %1827 = vmatmul.bf16.gmra.mxu0 %v1766
    %v1828 = vpop.f32.mrf.mxu0
    %v1829 = vadd.f32 %v99, %v1828
    %v1830 = vpop.f32.mrf.mxu0
    %1831 = vdwg.mxu0
    %1832 = vmatpush.bf16.msra.mxu0 %v945
    %1833 = vmatpush.bf16.msra.mxu0 %v941
    %1834 = vmatpush.bf16.msra.mxu0 %v937
    %1835 = vmatpush.bf16.msra.mxu0 %v933
    %1836 = vmatpush.bf16.msra.mxu0 %v929
    %1837 = vmatpush.bf16.msra.mxu0 %v925
    %1838 = vmatpush.bf16.msra.mxu0 %v921
    %1839 = vmatpush.bf16.msra.mxu0 %v917
    %1840 = vmatmul.bf16.gmra.mxu0 %v1258
    %v1841 = vpop.f32.mrf.mxu0
    %v1842 = vadd.f32 %v1829, %v1841
    %v1843 = vpop.f32.mrf.mxu0
    %1844 = vdwg.mxu0
    %1845 = vmatpush.bf16.msra.mxu0 %v914
    %1846 = vmatpush.bf16.msra.mxu0 %v910
    %1847 = vmatpush.bf16.msra.mxu0 %v906
    %1848 = vmatpush.bf16.msra.mxu0 %v902
    %1849 = vmatpush.bf16.msra.mxu0 %v898
    %1850 = vmatpush.bf16.msra.mxu0 %v894
    %1851 = vmatpush.bf16.msra.mxu0 %v890
    %1852 = vmatpush.bf16.msra.mxu0 %v886
    %1853 = vmatmul.bf16.gmra.mxu0 %v1766
    %v1854 = vpop.f32.mrf.mxu0
    %v1855 = vadd.f32 %v100, %v1854
    %v1856 = vpop.f32.mrf.mxu0
    %1857 = vdwg.mxu0
    %1858 = vmatpush.bf16.msra.mxu0 %v946
    %1859 = vmatpush.bf16.msra.mxu0 %v942
    %1860 = vmatpush.bf16.msra.mxu0 %v938
    %1861 = vmatpush.bf16.msra.mxu0 %v934
    %1862 = vmatpush.bf16.msra.mxu0 %v930
    %1863 = vmatpush.bf16.msra.mxu0 %v926
    %1864 = vmatpush.bf16.msra.mxu0 %v922
    %1865 = vmatpush.bf16.msra.mxu0 %v918
    %1866 = vmatmul.bf16.gmra.mxu0 %v1258
    %v1867 = vpop.f32.mrf.mxu0
    %v1868 = vadd.f32 %v1855, %v1867
    %v1869 = vpop.f32.mrf.mxu0
    %1870 = vdwg.mxu0
    %v1871 = vmul.f32 %v1790, 0.5
    %v1872 = vmul.f32 %v1816, 0.5
    %v1873 = vmul.f32 %v1842, 0.5
    %v1874 = vtanh.pop %v1871
    %v1875 = vtanh.pop %v1872
    %v1876 = vtanh.pop %v1873
    %v1877 = vmul.f32 %v1874, 0.5
    %v1878 = vmul.f32 %v1875, 0.5
    %v1879 = vmul.f32 %v1876, 0.5
    %v1880 = vadd.f32 %v1877, 0.5
    %v1881 = vadd.f32 %v1878, 0.5
    %v1882 = vadd.f32 %v1879, 0.5
    %v1883 = vtanh.pop %v1868
    %v1884 = vmul.f32 %v1881, %v1130
    %v1885 = vmul.f32 %v1880, %v1883
    %v1886 = vadd.f32 %v1884, %v1885
    %v1887 = vtanh.pop %v1886
    %v1888 = vmul.f32 %v1882, %v1887
    %s1889 = scalar_lea.vmem [#allocation2], 16
    %v1890 = vld [vmem:[%s1889] sm:$0xff]
    %v1891 = vpack.c.bf16 %v1890, %v1890
    %1892 = vmatpush.bf16.msra.mxu0 %v403
    %1893 = vmatpush.bf16.msra.mxu0 %v399
    %1894 = vmatpush.bf16.msra.mxu0 %v395
    %1895 = vmatpush.bf16.msra.mxu0 %v391
    %1896 = vmatpush.bf16.msra.mxu0 %v387
    %1897 = vmatpush.bf16.msra.mxu0 %v383
    %1898 = vmatpush.bf16.msra.mxu0 %v379
    %1899 = vmatpush.bf16.msra.mxu0 %v375
    %1900 = vmatmul.bf16.gmra.mxu0 %v1891
    %v1901 = vpop.f32.mrf.mxu0
    %v1902 = vadd.f32 %v86, %v1901
    %v1903 = vpop.f32.mrf.mxu0
    %1904 = vdwg.mxu0
    %1905 = vmatpush.bf16.msra.mxu0 %v435
    %1906 = vmatpush.bf16.msra.mxu0 %v431
    %1907 = vmatpush.bf16.msra.mxu0 %v427
    %1908 = vmatpush.bf16.msra.mxu0 %v423
    %1909 = vmatpush.bf16.msra.mxu0 %v419
    %1910 = vmatpush.bf16.msra.mxu0 %v415
    %1911 = vmatpush.bf16.msra.mxu0 %v411
    %1912 = vmatpush.bf16.msra.mxu0 %v407
    %1913 = vmatmul.bf16.gmra.mxu0 %v1766
    %v1914 = vpop.f32.mrf.mxu0
    %v1915 = vadd.f32 %v1902, %v1914
    %v1916 = vpop.f32.mrf.mxu0
    %1917 = vdwg.mxu0
    %1918 = vmatpush.bf16.msra.mxu0 %v404
    %1919 = vmatpush.bf16.msra.mxu0 %v400
    %1920 = vmatpush.bf16.msra.mxu0 %v396
    %1921 = vmatpush.bf16.msra.mxu0 %v392
    %1922 = vmatpush.bf16.msra.mxu0 %v388
    %1923 = vmatpush.bf16.msra.mxu0 %v384
    %1924 = vmatpush.bf16.msra.mxu0 %v380
    %1925 = vmatpush.bf16.msra.mxu0 %v376
    %1926 = vmatmul.bf16.gmra.mxu0 %v1891
    %v1927 = vpop.f32.mrf.mxu0
    %v1928 = vadd.f32 %v87, %v1927
    %v1929 = vpop.f32.mrf.mxu0
    %1930 = vdwg.mxu0
    %1931 = vmatpush.bf16.msra.mxu0 %v436
    %1932 = vmatpush.bf16.msra.mxu0 %v432
    %1933 = vmatpush.bf16.msra.mxu0 %v428
    %1934 = vmatpush.bf16.msra.mxu0 %v424
    %1935 = vmatpush.bf16.msra.mxu0 %v420
    %1936 = vmatpush.bf16.msra.mxu0 %v416
    %1937 = vmatpush.bf16.msra.mxu0 %v412
    %1938 = vmatpush.bf16.msra.mxu0 %v408
    %1939 = vmatmul.bf16.gmra.mxu0 %v1766
    %v1940 = vpop.f32.mrf.mxu0
    %v1941 = vadd.f32 %v1928, %v1940
    %v1942 = vpop.f32.mrf.mxu0
    %1943 = vdwg.mxu0
    %1944 = vmatpush.bf16.msra.mxu0 %v405
    %1945 = vmatpush.bf16.msra.mxu0 %v401
    %1946 = vmatpush.bf16.msra.mxu0 %v397
    %1947 = vmatpush.bf16.msra.mxu0 %v393
    %1948 = vmatpush.bf16.msra.mxu0 %v389
    %1949 = vmatpush.bf16.msra.mxu0 %v385
    %1950 = vmatpush.bf16.msra.mxu0 %v381
    %1951 = vmatpush.bf16.msra.mxu0 %v377
    %1952 = vmatmul.bf16.gmra.mxu0 %v1891
    %v1953 = vpop.f32.mrf.mxu0
    %v1954 = vadd.f32 %v88, %v1953
    %v1955 = vpop.f32.mrf.mxu0
    %1956 = vdwg.mxu0
    %1957 = vmatpush.bf16.msra.mxu0 %v437
    %1958 = vmatpush.bf16.msra.mxu0 %v433
    %1959 = vmatpush.bf16.msra.mxu0 %v429
    %1960 = vmatpush.bf16.msra.mxu0 %v425
    %1961 = vmatpush.bf16.msra.mxu0 %v421
    %1962 = vmatpush.bf16.msra.mxu0 %v417
    %1963 = vmatpush.bf16.msra.mxu0 %v413
    %1964 = vmatpush.bf16.msra.mxu0 %v409
    %1965 = vmatmul.bf16.gmra.mxu0 %v1766
    %v1966 = vpop.f32.mrf.mxu0
    %v1967 = vadd.f32 %v1954, %v1966
    %v1968 = vpop.f32.mrf.mxu0
    %1969 = vdwg.mxu0
    %1970 = vmatpush.bf16.msra.mxu0 %v406
    %1971 = vmatpush.bf16.msra.mxu0 %v402
    %1972 = vmatpush.bf16.msra.mxu0 %v398
    %1973 = vmatpush.bf16.msra.mxu0 %v394
    %1974 = vmatpush.bf16.msra.mxu0 %v390
    %1975 = vmatpush.bf16.msra.mxu0 %v386
    %1976 = vmatpush.bf16.msra.mxu0 %v382
    %1977 = vmatpush.bf16.msra.mxu0 %v378
    %1978 = vmatmul.bf16.gmra.mxu0 %v1891
    %v1979 = vpop.f32.mrf.mxu0
    %v1980 = vadd.f32 %v89, %v1979
    %v1981 = vpop.f32.mrf.mxu0
    %1982 = vdwg.mxu0
    %1983 = vmatpush.bf16.msra.mxu0 %v438
    %1984 = vmatpush.bf16.msra.mxu0 %v434
    %1985 = vmatpush.bf16.msra.mxu0 %v430
    %1986 = vmatpush.bf16.msra.mxu0 %v426
    %1987 = vmatpush.bf16.msra.mxu0 %v422
    %1988 = vmatpush.bf16.msra.mxu0 %v418
    %1989 = vmatpush.bf16.msra.mxu0 %v414
    %1990 = vmatpush.bf16.msra.mxu0 %v410
    %1991 = vmatmul.bf16.gmra.mxu0 %v1766
    %v1992 = vpop.f32.mrf.mxu0
    %v1993 = vadd.f32 %v1980, %v1992
    %v1994 = vpop.f32.mrf.mxu0
    %1995 = vdwg.mxu0
    %v1996 = vmul.f32 %v1915, 0.5
    %v1997 = vmul.f32 %v1941, 0.5
    %v1998 = vmul.f32 %v1967, 0.5
    %v1999 = vtanh.pop %v1996
    %v2000 = vtanh.pop %v1997
    %v2001 = vtanh.pop %v1998
    %v2002 = vmul.f32 %v1999, 0.5
    %v2003 = vmul.f32 %v2000, 0.5
    %v2004 = vmul.f32 %v2001, 0.5
    %v2005 = vadd.f32 %v2002, 0.5
    %v2006 = vadd.f32 %v2003, 0.5
    %v2007 = vadd.f32 %v2004, 0.5
    %v2008 = vtanh.pop %v1993
    %v2009 = vmul.f32 %v2006, %v1255
    %v2010 = vmul.f32 %v2005, %v2008
    %v2011 = vadd.f32 %v2009, %v2010
    %v2012 = vtanh.pop %v2011
    %v2013 = vmul.f32 %v2007, %v2012
    %v2014 = vpack.c.bf16 %v1888, %v1888
    %v2015 = vpack.c.bf16 %v1765, %v1765
    %2016 = vmatpush.bf16.msra.mxu0 %v1544
    %2017 = vmatpush.bf16.msra.mxu0 %v1540
    %2018 = vmatpush.bf16.msra.mxu0 %v1536
    %2019 = vmatpush.bf16.msra.mxu0 %v1532
    %2020 = vmatpush.bf16.msra.mxu0 %v1528
    %2021 = vmatpush.bf16.msra.mxu0 %v1524
    %2022 = vmatpush.bf16.msra.mxu0 %v1520
    %2023 = vmatpush.bf16.msra.mxu0 %v1516
    %2024 = vmatmul.bf16.gmra.mxu0 %v2014
    %v2025 = vpop.f32.mrf.mxu0
    %v2026 = vadd.f32 %v108, %v2025
    %v2027 = vpop.f32.mrf.mxu0
    %2028 = vdwg.mxu0
    %2029 = vmatpush.bf16.msra.mxu0 %v1576
    %2030 = vmatpush.bf16.msra.mxu0 %v1572
    %2031 = vmatpush.bf16.msra.mxu0 %v1568
    %2032 = vmatpush.bf16.msra.mxu0 %v1564
    %2033 = vmatpush.bf16.msra.mxu0 %v1560
    %2034 = vmatpush.bf16.msra.mxu0 %v1556
    %2035 = vmatpush.bf16.msra.mxu0 %v1552
    %2036 = vmatpush.bf16.msra.mxu0 %v1548
    %2037 = vmatmul.bf16.gmra.mxu0 %v2015
    %v2038 = vpop.f32.mrf.mxu0
    %v2039 = vadd.f32 %v2026, %v2038
    %v2040 = vpop.f32.mrf.mxu0
    %2041 = vdwg.mxu0
    %2042 = vmatpush.bf16.msra.mxu0 %v1545
    %2043 = vmatpush.bf16.msra.mxu0 %v1541
    %2044 = vmatpush.bf16.msra.mxu0 %v1537
    %2045 = vmatpush.bf16.msra.mxu0 %v1533
    %2046 = vmatpush.bf16.msra.mxu0 %v1529
    %2047 = vmatpush.bf16.msra.mxu0 %v1525
    %2048 = vmatpush.bf16.msra.mxu0 %v1521
    %2049 = vmatpush.bf16.msra.mxu0 %v1517
    %2050 = vmatmul.bf16.gmra.mxu0 %v2014
    %v2051 = vpop.f32.mrf.mxu0
    %v2052 = vadd.f32 %v109, %v2051
    %v2053 = vpop.f32.mrf.mxu0
    %2054 = vdwg.mxu0
    %2055 = vmatpush.bf16.msra.mxu0 %v1577
    %2056 = vmatpush.bf16.msra.mxu0 %v1573
    %2057 = vmatpush.bf16.msra.mxu0 %v1569
    %2058 = vmatpush.bf16.msra.mxu0 %v1565
    %2059 = vmatpush.bf16.msra.mxu0 %v1561
    %2060 = vmatpush.bf16.msra.mxu0 %v1557
    %2061 = vmatpush.bf16.msra.mxu0 %v1553
    %2062 = vmatpush.bf16.msra.mxu0 %v1549
    %2063 = vmatmul.bf16.gmra.mxu0 %v2015
    %v2064 = vpop.f32.mrf.mxu0
    %v2065 = vadd.f32 %v2052, %v2064
    %v2066 = vpop.f32.mrf.mxu0
    %2067 = vdwg.mxu0
    %2068 = vmatpush.bf16.msra.mxu0 %v1546
    %2069 = vmatpush.bf16.msra.mxu0 %v1542
    %2070 = vmatpush.bf16.msra.mxu0 %v1538
    %2071 = vmatpush.bf16.msra.mxu0 %v1534
    %2072 = vmatpush.bf16.msra.mxu0 %v1530
    %2073 = vmatpush.bf16.msra.mxu0 %v1526
    %2074 = vmatpush.bf16.msra.mxu0 %v1522
    %2075 = vmatpush.bf16.msra.mxu0 %v1518
    %2076 = vmatmul.bf16.gmra.mxu0 %v2014
    %v2077 = vpop.f32.mrf.mxu0
    %v2078 = vadd.f32 %v110, %v2077
    %v2079 = vpop.f32.mrf.mxu0
    %2080 = vdwg.mxu0
    %2081 = vmatpush.bf16.msra.mxu0 %v1578
    %2082 = vmatpush.bf16.msra.mxu0 %v1574
    %2083 = vmatpush.bf16.msra.mxu0 %v1570
    %2084 = vmatpush.bf16.msra.mxu0 %v1566
    %2085 = vmatpush.bf16.msra.mxu0 %v1562
    %2086 = vmatpush.bf16.msra.mxu0 %v1558
    %2087 = vmatpush.bf16.msra.mxu0 %v1554
    %2088 = vmatpush.bf16.msra.mxu0 %v1550
    %2089 = vmatmul.bf16.gmra.mxu0 %v2015
    %v2090 = vpop.f32.mrf.mxu0
    %v2091 = vadd.f32 %v2078, %v2090
    %v2092 = vpop.f32.mrf.mxu0
    %2093 = vdwg.mxu0
    %2094 = vmatpush.bf16.msra.mxu0 %v1547
    %2095 = vmatpush.bf16.msra.mxu0 %v1543
    %2096 = vmatpush.bf16.msra.mxu0 %v1539
    %2097 = vmatpush.bf16.msra.mxu0 %v1535
    %2098 = vmatpush.bf16.msra.mxu0 %v1531
    %2099 = vmatpush.bf16.msra.mxu0 %v1527
    %2100 = vmatpush.bf16.msra.mxu0 %v1523
    %2101 = vmatpush.bf16.msra.mxu0 %v1519
    %2102 = vmatmul.bf16.gmra.mxu0 %v2014
    %v2103 = vpop.f32.mrf.mxu0
    %v2104 = vadd.f32 %v111, %v2103
    %v2105 = vpop.f32.mrf.mxu0
    %2106 = vdwg.mxu0
    %2107 = vmatpush.bf16.msra.mxu0 %v1579
    %2108 = vmatpush.bf16.msra.mxu0 %v1575
    %2109 = vmatpush.bf16.msra.mxu0 %v1571
    %2110 = vmatpush.bf16.msra.mxu0 %v1567
    %2111 = vmatpush.bf16.msra.mxu0 %v1563
    %2112 = vmatpush.bf16.msra.mxu0 %v1559
    %2113 = vmatpush.bf16.msra.mxu0 %v1555
    %2114 = vmatpush.bf16.msra.mxu0 %v1551
    %2115 = vmatmul.bf16.gmra.mxu0 %v2015
    %v2116 = vpop.f32.mrf.mxu0
    %v2117 = vadd.f32 %v2104, %v2116
    %v2118 = vpop.f32.mrf.mxu0
    %2119 = vdwg.mxu0
    %v2120 = vmul.f32 %v2039, 0.5
    %v2121 = vmul.f32 %v2065, 0.5
    %v2122 = vmul.f32 %v2091, 0.5
    %v2123 = vtanh.pop %v2120
    %v2124 = vtanh.pop %v2121
    %v2125 = vtanh.pop %v2122
    %v2126 = vmul.f32 %v2123, 0.5
    %v2127 = vmul.f32 %v2124, 0.5
    %v2128 = vmul.f32 %v2125, 0.5
    %v2129 = vadd.f32 %v2126, 0.5
    %v2130 = vadd.f32 %v2127, 0.5
    %v2131 = vadd.f32 %v2128, 0.5
    %v2132 = vtanh.pop %v2117
    %v2133 = vmul.f32 %v2130, %v1763
    %v2134 = vmul.f32 %v2129, %v2132
    %v2135 = vadd.f32 %v2133, %v2134
    %v2136 = vtanh.pop %v2135
    %v2137 = vmul.f32 %v2131, %v2136
    %v2138 = vpack.c.bf16 %v2013, %v2013
    %2139 = vmatpush.bf16.msra.mxu0 %v911
    %2140 = vmatpush.bf16.msra.mxu0 %v907
    %2141 = vmatpush.bf16.msra.mxu0 %v903
    %2142 = vmatpush.bf16.msra.mxu0 %v899
    %2143 = vmatpush.bf16.msra.mxu0 %v895
    %2144 = vmatpush.bf16.msra.mxu0 %v891
    %2145 = vmatpush.bf16.msra.mxu0 %v887
    %2146 = vmatpush.bf16.msra.mxu0 %v883
    %2147 = vmatmul.bf16.gmra.mxu0 %v2138
    %v2148 = vpop.f32.mrf.mxu0
    %v2149 = vadd.f32 %v97, %v2148
    %v2150 = vpop.f32.mrf.mxu0
    %2151 = vdwg.mxu0
    %2152 = vmatpush.bf16.msra.mxu0 %v943
    %2153 = vmatpush.bf16.msra.mxu0 %v939
    %2154 = vmatpush.bf16.msra.mxu0 %v935
    %2155 = vmatpush.bf16.msra.mxu0 %v931
    %2156 = vmatpush.bf16.msra.mxu0 %v927
    %2157 = vmatpush.bf16.msra.mxu0 %v923
    %2158 = vmatpush.bf16.msra.mxu0 %v919
    %2159 = vmatpush.bf16.msra.mxu0 %v915
    %2160 = vmatmul.bf16.gmra.mxu0 %v2014
    %v2161 = vpop.f32.mrf.mxu0
    %v2162 = vadd.f32 %v2149, %v2161
    %v2163 = vpop.f32.mrf.mxu0
    %2164 = vdwg.mxu0
    %2165 = vmatpush.bf16.msra.mxu0 %v912
    %2166 = vmatpush.bf16.msra.mxu0 %v908
    %2167 = vmatpush.bf16.msra.mxu0 %v904
    %2168 = vmatpush.bf16.msra.mxu0 %v900
    %2169 = vmatpush.bf16.msra.mxu0 %v896
    %2170 = vmatpush.bf16.msra.mxu0 %v892
    %2171 = vmatpush.bf16.msra.mxu0 %v888
    %2172 = vmatpush.bf16.msra.mxu0 %v884
    %2173 = vmatmul.bf16.gmra.mxu0 %v2138
    %v2174 = vpop.f32.mrf.mxu0
    %v2175 = vadd.f32 %v98, %v2174
    %v2176 = vpop.f32.mrf.mxu0
    %2177 = vdwg.mxu0
    %2178 = vmatpush.bf16.msra.mxu0 %v944
    %2179 = vmatpush.bf16.msra.mxu0 %v940
    %2180 = vmatpush.bf16.msra.mxu0 %v936
    %2181 = vmatpush.bf16.msra.mxu0 %v932
    %2182 = vmatpush.bf16.msra.mxu0 %v928
    %2183 = vmatpush.bf16.msra.mxu0 %v924
    %2184 = vmatpush.bf16.msra.mxu0 %v920
    %2185 = vmatpush.bf16.msra.mxu0 %v916
    %2186 = vmatmul.bf16.gmra.mxu0 %v2014
    %v2187 = vpop.f32.mrf.mxu0
    %v2188 = vadd.f32 %v2175, %v2187
    %v2189 = vpop.f32.mrf.mxu0
    %2190 = vdwg.mxu0
    %2191 = vmatpush.bf16.msra.mxu0 %v913
    %2192 = vmatpush.bf16.msra.mxu0 %v909
    %2193 = vmatpush.bf16.msra.mxu0 %v905
    %2194 = vmatpush.bf16.msra.mxu0 %v901
    %2195 = vmatpush.bf16.msra.mxu0 %v897
    %2196 = vmatpush.bf16.msra.mxu0 %v893
    %2197 = vmatpush.bf16.msra.mxu0 %v889
    %2198 = vmatpush.bf16.msra.mxu0 %v885
    %2199 = vmatmul.bf16.gmra.mxu0 %v2138
    %v2200 = vpop.f32.mrf.mxu0
    %v2201 = vadd.f32 %v99, %v2200
    %v2202 = vpop.f32.mrf.mxu0
    %2203 = vdwg.mxu0
    %2204 = vmatpush.bf16.msra.mxu0 %v945
    %2205 = vmatpush.bf16.msra.mxu0 %v941
    %2206 = vmatpush.bf16.msra.mxu0 %v937
    %2207 = vmatpush.bf16.msra.mxu0 %v933
    %2208 = vmatpush.bf16.msra.mxu0 %v929
    %2209 = vmatpush.bf16.msra.mxu0 %v925
    %2210 = vmatpush.bf16.msra.mxu0 %v921
    %2211 = vmatpush.bf16.msra.mxu0 %v917
    %2212 = vmatmul.bf16.gmra.mxu0 %v2014
    %v2213 = vpop.f32.mrf.mxu0
    %v2214 = vadd.f32 %v2201, %v2213
    %v2215 = vpop.f32.mrf.mxu0
    %2216 = vdwg.mxu0
    %2217 = vmatpush.bf16.msra.mxu0 %v914
    %2218 = vmatpush.bf16.msra.mxu0 %v910
    %2219 = vmatpush.bf16.msra.mxu0 %v906
    %2220 = vmatpush.bf16.msra.mxu0 %v902
    %2221 = vmatpush.bf16.msra.mxu0 %v898
    %2222 = vmatpush.bf16.msra.mxu0 %v894
    %2223 = vmatpush.bf16.msra.mxu0 %v890
    %2224 = vmatpush.bf16.msra.mxu0 %v886
    %2225 = vmatmul.bf16.gmra.mxu0 %v2138
    %v2226 = vpop.f32.mrf.mxu0
    %v2227 = vadd.f32 %v100, %v2226
    %v2228 = vpop.f32.mrf.mxu0
    %2229 = vdwg.mxu0
    %2230 = vmatpush.bf16.msra.mxu0 %v946
    %2231 = vmatpush.bf16.msra.mxu0 %v942
    %2232 = vmatpush.bf16.msra.mxu0 %v938
    %2233 = vmatpush.bf16.msra.mxu0 %v934
    %2234 = vmatpush.bf16.msra.mxu0 %v930
    %2235 = vmatpush.bf16.msra.mxu0 %v926
    %2236 = vmatpush.bf16.msra.mxu0 %v922
    %2237 = vmatpush.bf16.msra.mxu0 %v918
    %2238 = vmatmul.bf16.gmra.mxu0 %v2014
    %v2239 = vpop.f32.mrf.mxu0
    %v2240 = vadd.f32 %v2227, %v2239
    %v2241 = vpop.f32.mrf.mxu0
    %2242 = vdwg.mxu0
    %v2243 = vmul.f32 %v2162, 0.5
    %v2244 = vmul.f32 %v2188, 0.5
    %v2245 = vmul.f32 %v2214, 0.5
    %v2246 = vtanh.pop %v2243
    %v2247 = vtanh.pop %v2244
    %v2248 = vtanh.pop %v2245
    %v2249 = vmul.f32 %v2246, 0.5
    %v2250 = vmul.f32 %v2247, 0.5
    %v2251 = vmul.f32 %v2248, 0.5
    %v2252 = vadd.f32 %v2249, 0.5
    %v2253 = vadd.f32 %v2250, 0.5
    %v2254 = vadd.f32 %v2251, 0.5
    %v2255 = vtanh.pop %v2240
    %v2256 = vmul.f32 %v2253, %v1886
    %v2257 = vmul.f32 %v2252, %v2255
    %v2258 = vadd.f32 %v2256, %v2257
    %v2259 = vtanh.pop %v2258
    %v2260 = vmul.f32 %v2254, %v2259
    %s2261 = scalar_lea.vmem [#allocation2], 24
    %v2262 = vld [vmem:[%s2261] sm:$0xff]
    %v2263 = vpack.c.bf16 %v2262, %v2262
    %2264 = vmatpush.bf16.msra.mxu0 %v403
    %2265 = vmatpush.bf16.msra.mxu0 %v399
    %2266 = vmatpush.bf16.msra.mxu0 %v395
    %2267 = vmatpush.bf16.msra.mxu0 %v391
    %2268 = vmatpush.bf16.msra.mxu0 %v387
    %2269 = vmatpush.bf16.msra.mxu0 %v383
    %2270 = vmatpush.bf16.msra.mxu0 %v379
    %2271 = vmatpush.bf16.msra.mxu0 %v375
    %2272 = vmatmul.bf16.gmra.mxu0 %v2263
    %v2273 = vpop.f32.mrf.mxu0
    %v2274 = vadd.f32 %v86, %v2273
    %v2275 = vpop.f32.mrf.mxu0
    %2276 = vdwg.mxu0
    %2277 = vmatpush.bf16.msra.mxu0 %v435
    %2278 = vmatpush.bf16.msra.mxu0 %v431
    %2279 = vmatpush.bf16.msra.mxu0 %v427
    %2280 = vmatpush.bf16.msra.mxu0 %v423
    %2281 = vmatpush.bf16.msra.mxu0 %v419
    %2282 = vmatpush.bf16.msra.mxu0 %v415
    %2283 = vmatpush.bf16.msra.mxu0 %v411
    %2284 = vmatpush.bf16.msra.mxu0 %v407
    %2285 = vmatmul.bf16.gmra.mxu0 %v2138
    %v2286 = vpop.f32.mrf.mxu0
    %v2287 = vadd.f32 %v2274, %v2286
    %v2288 = vpop.f32.mrf.mxu0
    %2289 = vdwg.mxu0
    %2290 = vmatpush.bf16.msra.mxu0 %v404
    %2291 = vmatpush.bf16.msra.mxu0 %v400
    %2292 = vmatpush.bf16.msra.mxu0 %v396
    %2293 = vmatpush.bf16.msra.mxu0 %v392
    %2294 = vmatpush.bf16.msra.mxu0 %v388
    %2295 = vmatpush.bf16.msra.mxu0 %v384
    %2296 = vmatpush.bf16.msra.mxu0 %v380
    %2297 = vmatpush.bf16.msra.mxu0 %v376
    %2298 = vmatmul.bf16.gmra.mxu0 %v2263
    %v2299 = vpop.f32.mrf.mxu0
    %v2300 = vadd.f32 %v87, %v2299
    %v2301 = vpop.f32.mrf.mxu0
    %2302 = vdwg.mxu0
    %2303 = vmatpush.bf16.msra.mxu0 %v436
    %2304 = vmatpush.bf16.msra.mxu0 %v432
    %2305 = vmatpush.bf16.msra.mxu0 %v428
    %2306 = vmatpush.bf16.msra.mxu0 %v424
    %2307 = vmatpush.bf16.msra.mxu0 %v420
    %2308 = vmatpush.bf16.msra.mxu0 %v416
    %2309 = vmatpush.bf16.msra.mxu0 %v412
    %2310 = vmatpush.bf16.msra.mxu0 %v408
    %2311 = vmatmul.bf16.gmra.mxu0 %v2138
    %v2312 = vpop.f32.mrf.mxu0
    %v2313 = vadd.f32 %v2300, %v2312
    %v2314 = vpop.f32.mrf.mxu0
    %2315 = vdwg.mxu0
    %2316 = vmatpush.bf16.msra.mxu0 %v405
    %2317 = vmatpush.bf16.msra.mxu0 %v401
    %2318 = vmatpush.bf16.msra.mxu0 %v397
    %2319 = vmatpush.bf16.msra.mxu0 %v393
    %2320 = vmatpush.bf16.msra.mxu0 %v389
    %2321 = vmatpush.bf16.msra.mxu0 %v385
    %2322 = vmatpush.bf16.msra.mxu0 %v381
    %2323 = vmatpush.bf16.msra.mxu0 %v377
    %2324 = vmatmul.bf16.gmra.mxu0 %v2263
    %v2325 = vpop.f32.mrf.mxu0
    %v2326 = vadd.f32 %v88, %v2325
    %v2327 = vpop.f32.mrf.mxu0
    %2328 = vdwg.mxu0
    %2329 = vmatpush.bf16.msra.mxu0 %v437
    %2330 = vmatpush.bf16.msra.mxu0 %v433
    %2331 = vmatpush.bf16.msra.mxu0 %v429
    %2332 = vmatpush.bf16.msra.mxu0 %v425
    %2333 = vmatpush.bf16.msra.mxu0 %v421
    %2334 = vmatpush.bf16.msra.mxu0 %v417
    %2335 = vmatpush.bf16.msra.mxu0 %v413
    %2336 = vmatpush.bf16.msra.mxu0 %v409
    %2337 = vmatmul.bf16.gmra.mxu0 %v2138
    %v2338 = vpop.f32.mrf.mxu0
    %v2339 = vadd.f32 %v2326, %v2338
    %v2340 = vpop.f32.mrf.mxu0
    %2341 = vdwg.mxu0
    %2342 = vmatpush.bf16.msra.mxu0 %v406
    %2343 = vmatpush.bf16.msra.mxu0 %v402
    %2344 = vmatpush.bf16.msra.mxu0 %v398
    %2345 = vmatpush.bf16.msra.mxu0 %v394
    %2346 = vmatpush.bf16.msra.mxu0 %v390
    %2347 = vmatpush.bf16.msra.mxu0 %v386
    %2348 = vmatpush.bf16.msra.mxu0 %v382
    %2349 = vmatpush.bf16.msra.mxu0 %v378
    %2350 = vmatmul.bf16.gmra.mxu0 %v2263
    %v2351 = vpop.f32.mrf.mxu0
    %v2352 = vadd.f32 %v89, %v2351
    %v2353 = vpop.f32.mrf.mxu0
    %2354 = vdwg.mxu0
    %2355 = vmatpush.bf16.msra.mxu0 %v438
    %2356 = vmatpush.bf16.msra.mxu0 %v434
    %2357 = vmatpush.bf16.msra.mxu0 %v430
    %2358 = vmatpush.bf16.msra.mxu0 %v426
    %2359 = vmatpush.bf16.msra.mxu0 %v422
    %2360 = vmatpush.bf16.msra.mxu0 %v418
    %2361 = vmatpush.bf16.msra.mxu0 %v414
    %2362 = vmatpush.bf16.msra.mxu0 %v410
    %2363 = vmatmul.bf16.gmra.mxu0 %v2138
    %v2364 = vpop.f32.mrf.mxu0
    %v2365 = vadd.f32 %v2352, %v2364
    %v2366 = vpop.f32.mrf.mxu0
    %2367 = vdwg.mxu0
    %v2368 = vmul.f32 %v2287, 0.5
    %v2369 = vmul.f32 %v2313, 0.5
    %v2370 = vmul.f32 %v2339, 0.5
    %v2371 = vtanh.pop %v2368
    %v2372 = vtanh.pop %v2369
    %v2373 = vtanh.pop %v2370
    %v2374 = vmul.f32 %v2371, 0.5
    %v2375 = vmul.f32 %v2372, 0.5
    %v2376 = vmul.f32 %v2373, 0.5
    %v2377 = vadd.f32 %v2374, 0.5
    %v2378 = vadd.f32 %v2375, 0.5
    %v2379 = vadd.f32 %v2376, 0.5
    %v2380 = vtanh.pop %v2365
    %v2381 = vmul.f32 %v2378, %v2011
    %v2382 = vmul.f32 %v2377, %v2380
    %v2383 = vadd.f32 %v2381, %v2382
    %v2384 = vtanh.pop %v2383
    %v2385 = vmul.f32 %v2379, %v2384
    %v2386 = vpack.c.bf16 %v2260, %v2260
    %v2387 = vpack.c.bf16 %v2137, %v2137
    %2388 = vmatpush.bf16.msra.mxu0 %v1544
    %2389 = vmatpush.bf16.msra.mxu0 %v1540
    %2390 = vmatpush.bf16.msra.mxu0 %v1536
    %2391 = vmatpush.bf16.msra.mxu0 %v1532
    %2392 = vmatpush.bf16.msra.mxu0 %v1528
    %2393 = vmatpush.bf16.msra.mxu0 %v1524
    %2394 = vmatpush.bf16.msra.mxu0 %v1520
    %2395 = vmatpush.bf16.msra.mxu0 %v1516
    %2396 = vmatmul.bf16.gmra.mxu0 %v2386
    %v2397 = vpop.f32.mrf.mxu0
    %v2398 = vadd.f32 %v108, %v2397
    %v2399 = vpop.f32.mrf.mxu0
    %2400 = vdwg.mxu0
    %2401 = vmatpush.bf16.msra.mxu0 %v1576
    %2402 = vmatpush.bf16.msra.mxu0 %v1572
    %2403 = vmatpush.bf16.msra.mxu0 %v1568
    %2404 = vmatpush.bf16.msra.mxu0 %v1564
    %2405 = vmatpush.bf16.msra.mxu0 %v1560
    %2406 = vmatpush.bf16.msra.mxu0 %v1556
    %2407 = vmatpush.bf16.msra.mxu0 %v1552
    %2408 = vmatpush.bf16.msra.mxu0 %v1548
    %2409 = vmatmul.bf16.gmra.mxu0 %v2387
    %v2410 = vpop.f32.mrf.mxu0
    %v2411 = vadd.f32 %v2398, %v2410
    %v2412 = vpop.f32.mrf.mxu0
    %2413 = vdwg.mxu0
    %2414 = vmatpush.bf16.msra.mxu0 %v1545
    %2415 = vmatpush.bf16.msra.mxu0 %v1541
    %2416 = vmatpush.bf16.msra.mxu0 %v1537
    %2417 = vmatpush.bf16.msra.mxu0 %v1533
    %2418 = vmatpush.bf16.msra.mxu0 %v1529
    %2419 = vmatpush.bf16.msra.mxu0 %v1525
    %2420 = vmatpush.bf16.msra.mxu0 %v1521
    %2421 = vmatpush.bf16.msra.mxu0 %v1517
    %2422 = vmatmul.bf16.gmra.mxu0 %v2386
    %v2423 = vpop.f32.mrf.mxu0
    %v2424 = vadd.f32 %v109, %v2423
    %v2425 = vpop.f32.mrf.mxu0
    %2426 = vdwg.mxu0
    %2427 = vmatpush.bf16.msra.mxu0 %v1577
    %2428 = vmatpush.bf16.msra.mxu0 %v1573
    %2429 = vmatpush.bf16.msra.mxu0 %v1569
    %2430 = vmatpush.bf16.msra.mxu0 %v1565
    %2431 = vmatpush.bf16.msra.mxu0 %v1561
    %2432 = vmatpush.bf16.msra.mxu0 %v1557
    %2433 = vmatpush.bf16.msra.mxu0 %v1553
    %2434 = vmatpush.bf16.msra.mxu0 %v1549
    %2435 = vmatmul.bf16.gmra.mxu0 %v2387
    %v2436 = vpop.f32.mrf.mxu0
    %v2437 = vadd.f32 %v2424, %v2436
    %v2438 = vpop.f32.mrf.mxu0
    %2439 = vdwg.mxu0
    %2440 = vmatpush.bf16.msra.mxu0 %v1546
    %2441 = vmatpush.bf16.msra.mxu0 %v1542
    %2442 = vmatpush.bf16.msra.mxu0 %v1538
    %2443 = vmatpush.bf16.msra.mxu0 %v1534
    %2444 = vmatpush.bf16.msra.mxu0 %v1530
    %2445 = vmatpush.bf16.msra.mxu0 %v1526
    %2446 = vmatpush.bf16.msra.mxu0 %v1522
    %2447 = vmatpush.bf16.msra.mxu0 %v1518
    %2448 = vmatmul.bf16.gmra.mxu0 %v2386
    %v2449 = vpop.f32.mrf.mxu0
    %v2450 = vadd.f32 %v110, %v2449
    %v2451 = vpop.f32.mrf.mxu0
    %2452 = vdwg.mxu0
    %2453 = vmatpush.bf16.msra.mxu0 %v1578
    %2454 = vmatpush.bf16.msra.mxu0 %v1574
    %2455 = vmatpush.bf16.msra.mxu0 %v1570
    %2456 = vmatpush.bf16.msra.mxu0 %v1566
    %2457 = vmatpush.bf16.msra.mxu0 %v1562
    %2458 = vmatpush.bf16.msra.mxu0 %v1558
    %2459 = vmatpush.bf16.msra.mxu0 %v1554
    %2460 = vmatpush.bf16.msra.mxu0 %v1550
    %2461 = vmatmul.bf16.gmra.mxu0 %v2387
    %v2462 = vpop.f32.mrf.mxu0
    %v2463 = vadd.f32 %v2450, %v2462
    %v2464 = vpop.f32.mrf.mxu0
    %2465 = vdwg.mxu0
    %2466 = vmatpush.bf16.msra.mxu0 %v1547
    %2467 = vmatpush.bf16.msra.mxu0 %v1543
    %2468 = vmatpush.bf16.msra.mxu0 %v1539
    %2469 = vmatpush.bf16.msra.mxu0 %v1535
    %2470 = vmatpush.bf16.msra.mxu0 %v1531
    %2471 = vmatpush.bf16.msra.mxu0 %v1527
    %2472 = vmatpush.bf16.msra.mxu0 %v1523
    %2473 = vmatpush.bf16.msra.mxu0 %v1519
    %2474 = vmatmul.bf16.gmra.mxu0 %v2386
    %v2475 = vpop.f32.mrf.mxu0
    %v2476 = vadd.f32 %v111, %v2475
    %v2477 = vpop.f32.mrf.mxu0
    %2478 = vdwg.mxu0
    %2479 = vmatpush.bf16.msra.mxu0 %v1579
    %2480 = vmatpush.bf16.msra.mxu0 %v1575
    %2481 = vmatpush.bf16.msra.mxu0 %v1571
    %2482 = vmatpush.bf16.msra.mxu0 %v1567
    %2483 = vmatpush.bf16.msra.mxu0 %v1563
    %2484 = vmatpush.bf16.msra.mxu0 %v1559
    %2485 = vmatpush.bf16.msra.mxu0 %v1555
    %2486 = vmatpush.bf16.msra.mxu0 %v1551
    %2487 = vmatmul.bf16.gmra.mxu0 %v2387
    %v2488 = vpop.f32.mrf.mxu0
    %v2489 = vadd.f32 %v2476, %v2488
    %v2490 = vpop.f32.mrf.mxu0
    %2491 = vdwg.mxu0
    %v2492 = vmul.f32 %v2411, 0.5
    %v2493 = vmul.f32 %v2437, 0.5
    %v2494 = vmul.f32 %v2463, 0.5
    %v2495 = vtanh.pop %v2492
    %v2496 = vtanh.pop %v2493
    %v2497 = vtanh.pop %v2494
    %v2498 = vmul.f32 %v2495, 0.5
    %v2499 = vmul.f32 %v2496, 0.5
    %v2500 = vmul.f32 %v2497, 0.5
    %v2501 = vadd.f32 %v2498, 0.5
    %v2502 = vadd.f32 %v2499, 0.5
    %v2503 = vadd.f32 %v2500, 0.5
    %v2504 = vtanh.pop %v2489
    %v2505 = vmul.f32 %v2502, %v2135
    %v2506 = vmul.f32 %v2501, %v2504
    %v2507 = vadd.f32 %v2505, %v2506
    %v2508 = vtanh.pop %v2507
    %v2509 = vmul.f32 %v2503, %v2508
    %v2510 = vpack.c.bf16 %v2385, %v2385
    %2511 = vmatpush.bf16.msra.mxu0 %v911
    %2512 = vmatpush.bf16.msra.mxu0 %v907
    %2513 = vmatpush.bf16.msra.mxu0 %v903
    %2514 = vmatpush.bf16.msra.mxu0 %v899
    %2515 = vmatpush.bf16.msra.mxu0 %v895
    %2516 = vmatpush.bf16.msra.mxu0 %v891
    %2517 = vmatpush.bf16.msra.mxu0 %v887
    %2518 = vmatpush.bf16.msra.mxu0 %v883
    %2519 = vmatmul.bf16.gmra.mxu0 %v2510
    %v2520 = vpop.f32.mrf.mxu0
    %v2521 = vadd.f32 %v97, %v2520
    %v2522 = vpop.f32.mrf.mxu0
    %2523 = vdwg.mxu0
    %2524 = vmatpush.bf16.msra.mxu0 %v943
    %2525 = vmatpush.bf16.msra.mxu0 %v939
    %2526 = vmatpush.bf16.msra.mxu0 %v935
    %2527 = vmatpush.bf16.msra.mxu0 %v931
    %2528 = vmatpush.bf16.msra.mxu0 %v927
    %2529 = vmatpush.bf16.msra.mxu0 %v923
    %2530 = vmatpush.bf16.msra.mxu0 %v919
    %2531 = vmatpush.bf16.msra.mxu0 %v915
    %2532 = vmatmul.bf16.gmra.mxu0 %v2386
    %v2533 = vpop.f32.mrf.mxu0
    %v2534 = vadd.f32 %v2521, %v2533
    %v2535 = vpop.f32.mrf.mxu0
    %2536 = vdwg.mxu0
    %2537 = vmatpush.bf16.msra.mxu0 %v912
    %2538 = vmatpush.bf16.msra.mxu0 %v908
    %2539 = vmatpush.bf16.msra.mxu0 %v904
    %2540 = vmatpush.bf16.msra.mxu0 %v900
    %2541 = vmatpush.bf16.msra.mxu0 %v896
    %2542 = vmatpush.bf16.msra.mxu0 %v892
    %2543 = vmatpush.bf16.msra.mxu0 %v888
    %2544 = vmatpush.bf16.msra.mxu0 %v884
    %2545 = vmatmul.bf16.gmra.mxu0 %v2510
    %v2546 = vpop.f32.mrf.mxu0
    %v2547 = vadd.f32 %v98, %v2546
    %v2548 = vpop.f32.mrf.mxu0
    %2549 = vdwg.mxu0
    %2550 = vmatpush.bf16.msra.mxu0 %v944
    %2551 = vmatpush.bf16.msra.mxu0 %v940
    %2552 = vmatpush.bf16.msra.mxu0 %v936
    %2553 = vmatpush.bf16.msra.mxu0 %v932
    %2554 = vmatpush.bf16.msra.mxu0 %v928
    %2555 = vmatpush.bf16.msra.mxu0 %v924
    %2556 = vmatpush.bf16.msra.mxu0 %v920
    %2557 = vmatpush.bf16.msra.mxu0 %v916
    %2558 = vmatmul.bf16.gmra.mxu0 %v2386
    %v2559 = vpop.f32.mrf.mxu0
    %v2560 = vadd.f32 %v2547, %v2559
    %v2561 = vpop.f32.mrf.mxu0
    %2562 = vdwg.mxu0
    %2563 = vmatpush.bf16.msra.mxu0 %v913
    %2564 = vmatpush.bf16.msra.mxu0 %v909
    %2565 = vmatpush.bf16.msra.mxu0 %v905
    %2566 = vmatpush.bf16.msra.mxu0 %v901
    %2567 = vmatpush.bf16.msra.mxu0 %v897
    %2568 = vmatpush.bf16.msra.mxu0 %v893
    %2569 = vmatpush.bf16.msra.mxu0 %v889
    %2570 = vmatpush.bf16.msra.mxu0 %v885
    %2571 = vmatmul.bf16.gmra.mxu0 %v2510
    %v2572 = vpop.f32.mrf.mxu0
    %v2573 = vadd.f32 %v99, %v2572
    %v2574 = vpop.f32.mrf.mxu0
    %2575 = vdwg.mxu0
    %2576 = vmatpush.bf16.msra.mxu0 %v945
    %2577 = vmatpush.bf16.msra.mxu0 %v941
    %2578 = vmatpush.bf16.msra.mxu0 %v937
    %2579 = vmatpush.bf16.msra.mxu0 %v933
    %2580 = vmatpush.bf16.msra.mxu0 %v929
    %2581 = vmatpush.bf16.msra.mxu0 %v925
    %2582 = vmatpush.bf16.msra.mxu0 %v921
    %2583 = vmatpush.bf16.msra.mxu0 %v917
    %2584 = vmatmul.bf16.gmra.mxu0 %v2386
    %v2585 = vpop.f32.mrf.mxu0
    %v2586 = vadd.f32 %v2573, %v2585
    %v2587 = vpop.f32.mrf.mxu0
    %2588 = vdwg.mxu0
    %2589 = vmatpush.bf16.msra.mxu0 %v914
    %2590 = vmatpush.bf16.msra.mxu0 %v910
    %2591 = vmatpush.bf16.msra.mxu0 %v906
    %2592 = vmatpush.bf16.msra.mxu0 %v902
    %2593 = vmatpush.bf16.msra.mxu0 %v898
    %2594 = vmatpush.bf16.msra.mxu0 %v894
    %2595 = vmatpush.bf16.msra.mxu0 %v890
    %2596 = vmatpush.bf16.msra.mxu0 %v886
    %2597 = vmatmul.bf16.gmra.mxu0 %v2510
    %v2598 = vpop.f32.mrf.mxu0
    %v2599 = vadd.f32 %v100, %v2598
    %v2600 = vpop.f32.mrf.mxu0
    %2601 = vdwg.mxu0
    %2602 = vmatpush.bf16.msra.mxu0 %v946
    %2603 = vmatpush.bf16.msra.mxu0 %v942
    %2604 = vmatpush.bf16.msra.mxu0 %v938
    %2605 = vmatpush.bf16.msra.mxu0 %v934
    %2606 = vmatpush.bf16.msra.mxu0 %v930
    %2607 = vmatpush.bf16.msra.mxu0 %v926
    %2608 = vmatpush.bf16.msra.mxu0 %v922
    %2609 = vmatpush.bf16.msra.mxu0 %v918
    %2610 = vmatmul.bf16.gmra.mxu0 %v2386
    %v2611 = vpop.f32.mrf.mxu0
    %v2612 = vadd.f32 %v2599, %v2611
    %v2613 = vpop.f32.mrf.mxu0
    %2614 = vdwg.mxu0
    %v2615 = vmul.f32 %v2534, 0.5
    %v2616 = vmul.f32 %v2560, 0.5
    %v2617 = vmul.f32 %v2586, 0.5
    %v2618 = vtanh.pop %v2615
    %v2619 = vtanh.pop %v2616
    %v2620 = vtanh.pop %v2617
    %v2621 = vmul.f32 %v2618, 0.5
    %v2622 = vmul.f32 %v2619, 0.5
    %v2623 = vmul.f32 %v2620, 0.5
    %v2624 = vadd.f32 %v2621, 0.5
    %v2625 = vadd.f32 %v2622, 0.5
    %v2626 = vadd.f32 %v2623, 0.5
    %v2627 = vtanh.pop %v2612
    %v2628 = vmul.f32 %v2625, %v2258
    %v2629 = vmul.f32 %v2624, %v2627
    %v2630 = vadd.f32 %v2628, %v2629
    %v2631 = vtanh.pop %v2630
    %v2632 = vmul.f32 %v2626, %v2631
    %s2633 = scalar_lea.vmem [#allocation2], 32
    %v2634 = vld [vmem:[%s2633] sm:$0xff]
    %v2635 = vpack.c.bf16 %v2634, %v2634
    %2636 = vmatpush.bf16.msra.mxu0 %v403
    %2637 = vmatpush.bf16.msra.mxu0 %v399
    %2638 = vmatpush.bf16.msra.mxu0 %v395
    %2639 = vmatpush.bf16.msra.mxu0 %v391
    %2640 = vmatpush.bf16.msra.mxu0 %v387
    %2641 = vmatpush.bf16.msra.mxu0 %v383
    %2642 = vmatpush.bf16.msra.mxu0 %v379
    %2643 = vmatpush.bf16.msra.mxu0 %v375
    %2644 = vmatmul.bf16.gmra.mxu0 %v2635
    %v2645 = vpop.f32.mrf.mxu0
    %v2646 = vadd.f32 %v86, %v2645
    %v2647 = vpop.f32.mrf.mxu0
    %2648 = vdwg.mxu0
    %2649 = vmatpush.bf16.msra.mxu0 %v435
    %2650 = vmatpush.bf16.msra.mxu0 %v431
    %2651 = vmatpush.bf16.msra.mxu0 %v427
    %2652 = vmatpush.bf16.msra.mxu0 %v423
    %2653 = vmatpush.bf16.msra.mxu0 %v419
    %2654 = vmatpush.bf16.msra.mxu0 %v415
    %2655 = vmatpush.bf16.msra.mxu0 %v411
    %2656 = vmatpush.bf16.msra.mxu0 %v407
    %2657 = vmatmul.bf16.gmra.mxu0 %v2510
    %v2658 = vpop.f32.mrf.mxu0
    %v2659 = vadd.f32 %v2646, %v2658
    %v2660 = vpop.f32.mrf.mxu0
    %2661 = vdwg.mxu0
    %2662 = vmatpush.bf16.msra.mxu0 %v404
    %2663 = vmatpush.bf16.msra.mxu0 %v400
    %2664 = vmatpush.bf16.msra.mxu0 %v396
    %2665 = vmatpush.bf16.msra.mxu0 %v392
    %2666 = vmatpush.bf16.msra.mxu0 %v388
    %2667 = vmatpush.bf16.msra.mxu0 %v384
    %2668 = vmatpush.bf16.msra.mxu0 %v380
    %2669 = vmatpush.bf16.msra.mxu0 %v376
    %2670 = vmatmul.bf16.gmra.mxu0 %v2635
    %v2671 = vpop.f32.mrf.mxu0
    %v2672 = vadd.f32 %v87, %v2671
    %v2673 = vpop.f32.mrf.mxu0
    %2674 = vdwg.mxu0
    %2675 = vmatpush.bf16.msra.mxu0 %v436
    %2676 = vmatpush.bf16.msra.mxu0 %v432
    %2677 = vmatpush.bf16.msra.mxu0 %v428
    %2678 = vmatpush.bf16.msra.mxu0 %v424
    %2679 = vmatpush.bf16.msra.mxu0 %v420
    %2680 = vmatpush.bf16.msra.mxu0 %v416
    %2681 = vmatpush.bf16.msra.mxu0 %v412
    %2682 = vmatpush.bf16.msra.mxu0 %v408
    %2683 = vmatmul.bf16.gmra.mxu0 %v2510
    %v2684 = vpop.f32.mrf.mxu0
    %v2685 = vadd.f32 %v2672, %v2684
    %v2686 = vpop.f32.mrf.mxu0
    %2687 = vdwg.mxu0
    %2688 = vmatpush.bf16.msra.mxu0 %v405
    %2689 = vmatpush.bf16.msra.mxu0 %v401
    %2690 = vmatpush.bf16.msra.mxu0 %v397
    %2691 = vmatpush.bf16.msra.mxu0 %v393
    %2692 = vmatpush.bf16.msra.mxu0 %v389
    %2693 = vmatpush.bf16.msra.mxu0 %v385
    %2694 = vmatpush.bf16.msra.mxu0 %v381
    %2695 = vmatpush.bf16.msra.mxu0 %v377
    %2696 = vmatmul.bf16.gmra.mxu0 %v2635
    %v2697 = vpop.f32.mrf.mxu0
    %v2698 = vadd.f32 %v88, %v2697
    %v2699 = vpop.f32.mrf.mxu0
    %2700 = vdwg.mxu0
    %2701 = vmatpush.bf16.msra.mxu0 %v437
    %2702 = vmatpush.bf16.msra.mxu0 %v433
    %2703 = vmatpush.bf16.msra.mxu0 %v429
    %2704 = vmatpush.bf16.msra.mxu0 %v425
    %2705 = vmatpush.bf16.msra.mxu0 %v421
    %2706 = vmatpush.bf16.msra.mxu0 %v417
    %2707 = vmatpush.bf16.msra.mxu0 %v413
    %2708 = vmatpush.bf16.msra.mxu0 %v409
    %2709 = vmatmul.bf16.gmra.mxu0 %v2510
    %v2710 = vpop.f32.mrf.mxu0
    %v2711 = vadd.f32 %v2698, %v2710
    %v2712 = vpop.f32.mrf.mxu0
    %2713 = vdwg.mxu0
    %2714 = vmatpush.bf16.msra.mxu0 %v406
    %2715 = vmatpush.bf16.msra.mxu0 %v402
    %2716 = vmatpush.bf16.msra.mxu0 %v398
    %2717 = vmatpush.bf16.msra.mxu0 %v394
    %2718 = vmatpush.bf16.msra.mxu0 %v390
    %2719 = vmatpush.bf16.msra.mxu0 %v386
    %2720 = vmatpush.bf16.msra.mxu0 %v382
    %2721 = vmatpush.bf16.msra.mxu0 %v378
    %2722 = vmatmul.bf16.gmra.mxu0 %v2635
    %v2723 = vpop.f32.mrf.mxu0
    %v2724 = vadd.f32 %v89, %v2723
    %v2725 = vpop.f32.mrf.mxu0
    %2726 = vdwg.mxu0
    %2727 = vmatpush.bf16.msra.mxu0 %v438
    %2728 = vmatpush.bf16.msra.mxu0 %v434
    %2729 = vmatpush.bf16.msra.mxu0 %v430
    %2730 = vmatpush.bf16.msra.mxu0 %v426
    %2731 = vmatpush.bf16.msra.mxu0 %v422
    %2732 = vmatpush.bf16.msra.mxu0 %v418
    %2733 = vmatpush.bf16.msra.mxu0 %v414
    %2734 = vmatpush.bf16.msra.mxu0 %v410
    %2735 = vmatmul.bf16.gmra.mxu0 %v2510
    %v2736 = vpop.f32.mrf.mxu0
    %v2737 = vadd.f32 %v2724, %v2736
    %v2738 = vpop.f32.mrf.mxu0
    %2739 = vdwg.mxu0
    %v2740 = vmul.f32 %v2659, 0.5
    %v2741 = vmul.f32 %v2685, 0.5
    %v2742 = vmul.f32 %v2711, 0.5
    %v2743 = vtanh.pop %v2740
    %v2744 = vtanh.pop %v2741
    %v2745 = vtanh.pop %v2742
    %v2746 = vmul.f32 %v2743, 0.5
    %v2747 = vmul.f32 %v2744, 0.5
    %v2748 = vmul.f32 %v2745, 0.5
    %v2749 = vadd.f32 %v2746, 0.5
    %v2750 = vadd.f32 %v2747, 0.5
    %v2751 = vadd.f32 %v2748, 0.5
    %v2752 = vtanh.pop %v2737
    %v2753 = vmul.f32 %v2750, %v2383
    %v2754 = vmul.f32 %v2749, %v2752
    %v2755 = vadd.f32 %v2753, %v2754
    %v2756 = vtanh.pop %v2755
    %v2757 = vmul.f32 %v2751, %v2756
    %v2758 = vpack.c.bf16 %v2632, %v2632
    %v2759 = vpack.c.bf16 %v2509, %v2509
    %2760 = vmatpush.bf16.msra.mxu0 %v1544
    %2761 = vmatpush.bf16.msra.mxu0 %v1540
    %2762 = vmatpush.bf16.msra.mxu0 %v1536
    %2763 = vmatpush.bf16.msra.mxu0 %v1532
    %2764 = vmatpush.bf16.msra.mxu0 %v1528
    %2765 = vmatpush.bf16.msra.mxu0 %v1524
    %2766 = vmatpush.bf16.msra.mxu0 %v1520
    %2767 = vmatpush.bf16.msra.mxu0 %v1516
    %2768 = vmatmul.bf16.gmra.mxu0 %v2758
    %v2769 = vpop.f32.mrf.mxu0
    %v2770 = vadd.f32 %v108, %v2769
    %v2771 = vpop.f32.mrf.mxu0
    %2772 = vdwg.mxu0
    %2773 = vmatpush.bf16.msra.mxu0 %v1576
    %2774 = vmatpush.bf16.msra.mxu0 %v1572
    %2775 = vmatpush.bf16.msra.mxu0 %v1568
    %2776 = vmatpush.bf16.msra.mxu0 %v1564
    %2777 = vmatpush.bf16.msra.mxu0 %v1560
    %2778 = vmatpush.bf16.msra.mxu0 %v1556
    %2779 = vmatpush.bf16.msra.mxu0 %v1552
    %2780 = vmatpush.bf16.msra.mxu0 %v1548
    %2781 = vmatmul.bf16.gmra.mxu0 %v2759
    %v2782 = vpop.f32.mrf.mxu0
    %v2783 = vadd.f32 %v2770, %v2782
    %v2784 = vpop.f32.mrf.mxu0
    %2785 = vdwg.mxu0
    %2786 = vmatpush.bf16.msra.mxu0 %v1545
    %2787 = vmatpush.bf16.msra.mxu0 %v1541
    %2788 = vmatpush.bf16.msra.mxu0 %v1537
    %2789 = vmatpush.bf16.msra.mxu0 %v1533
    %2790 = vmatpush.bf16.msra.mxu0 %v1529
    %2791 = vmatpush.bf16.msra.mxu0 %v1525
    %2792 = vmatpush.bf16.msra.mxu0 %v1521
    %2793 = vmatpush.bf16.msra.mxu0 %v1517
    %2794 = vmatmul.bf16.gmra.mxu0 %v2758
    %v2795 = vpop.f32.mrf.mxu0
    %v2796 = vadd.f32 %v109, %v2795
    %v2797 = vpop.f32.mrf.mxu0
    %2798 = vdwg.mxu0
    %2799 = vmatpush.bf16.msra.mxu0 %v1577
    %2800 = vmatpush.bf16.msra.mxu0 %v1573
    %2801 = vmatpush.bf16.msra.mxu0 %v1569
    %2802 = vmatpush.bf16.msra.mxu0 %v1565
    %2803 = vmatpush.bf16.msra.mxu0 %v1561
    %2804 = vmatpush.bf16.msra.mxu0 %v1557
    %2805 = vmatpush.bf16.msra.mxu0 %v1553
    %2806 = vmatpush.bf16.msra.mxu0 %v1549
    %2807 = vmatmul.bf16.gmra.mxu0 %v2759
    %v2808 = vpop.f32.mrf.mxu0
    %v2809 = vadd.f32 %v2796, %v2808
    %v2810 = vpop.f32.mrf.mxu0
    %2811 = vdwg.mxu0
    %2812 = vmatpush.bf16.msra.mxu0 %v1546
    %2813 = vmatpush.bf16.msra.mxu0 %v1542
    %2814 = vmatpush.bf16.msra.mxu0 %v1538
    %2815 = vmatpush.bf16.msra.mxu0 %v1534
    %2816 = vmatpush.bf16.msra.mxu0 %v1530
    %2817 = vmatpush.bf16.msra.mxu0 %v1526
    %2818 = vmatpush.bf16.msra.mxu0 %v1522
    %2819 = vmatpush.bf16.msra.mxu0 %v1518
    %2820 = vmatmul.bf16.gmra.mxu0 %v2758
    %v2821 = vpop.f32.mrf.mxu0
    %v2822 = vadd.f32 %v110, %v2821
    %v2823 = vpop.f32.mrf.mxu0
    %2824 = vdwg.mxu0
    %2825 = vmatpush.bf16.msra.mxu0 %v1578
    %2826 = vmatpush.bf16.msra.mxu0 %v1574
    %2827 = vmatpush.bf16.msra.mxu0 %v1570
    %2828 = vmatpush.bf16.msra.mxu0 %v1566
    %2829 = vmatpush.bf16.msra.mxu0 %v1562
    %2830 = vmatpush.bf16.msra.mxu0 %v1558
    %2831 = vmatpush.bf16.msra.mxu0 %v1554
    %2832 = vmatpush.bf16.msra.mxu0 %v1550
    %2833 = vmatmul.bf16.gmra.mxu0 %v2759
    %v2834 = vpop.f32.mrf.mxu0
    %v2835 = vadd.f32 %v2822, %v2834
    %v2836 = vpop.f32.mrf.mxu0
    %2837 = vdwg.mxu0
    %2838 = vmatpush.bf16.msra.mxu0 %v1547
    %2839 = vmatpush.bf16.msra.mxu0 %v1543
    %2840 = vmatpush.bf16.msra.mxu0 %v1539
    %2841 = vmatpush.bf16.msra.mxu0 %v1535
    %2842 = vmatpush.bf16.msra.mxu0 %v1531
    %2843 = vmatpush.bf16.msra.mxu0 %v1527
    %2844 = vmatpush.bf16.msra.mxu0 %v1523
    %2845 = vmatpush.bf16.msra.mxu0 %v1519
    %2846 = vmatmul.bf16.gmra.mxu0 %v2758
    %v2847 = vpop.f32.mrf.mxu0
    %v2848 = vadd.f32 %v111, %v2847
    %v2849 = vpop.f32.mrf.mxu0
    %2850 = vdwg.mxu0
    %2851 = vmatpush.bf16.msra.mxu0 %v1579
    %2852 = vmatpush.bf16.msra.mxu0 %v1575
    %2853 = vmatpush.bf16.msra.mxu0 %v1571
    %2854 = vmatpush.bf16.msra.mxu0 %v1567
    %2855 = vmatpush.bf16.msra.mxu0 %v1563
    %2856 = vmatpush.bf16.msra.mxu0 %v1559
    %2857 = vmatpush.bf16.msra.mxu0 %v1555
    %2858 = vmatpush.bf16.msra.mxu0 %v1551
    %2859 = vmatmul.bf16.gmra.mxu0 %v2759
    %v2860 = vpop.f32.mrf.mxu0
    %v2861 = vadd.f32 %v2848, %v2860
    %v2862 = vpop.f32.mrf.mxu0
    %2863 = vdwg.mxu0
    %v2864 = vmul.f32 %v2783, 0.5
    %v2865 = vmul.f32 %v2809, 0.5
    %v2866 = vmul.f32 %v2835, 0.5
    %v2867 = vtanh.pop %v2864
    %v2868 = vtanh.pop %v2865
    %v2869 = vtanh.pop %v2866
    %v2870 = vmul.f32 %v2867, 0.5
    %v2871 = vmul.f32 %v2868, 0.5
    %v2872 = vmul.f32 %v2869, 0.5
    %v2873 = vadd.f32 %v2870, 0.5
    %v2874 = vadd.f32 %v2871, 0.5
    %v2875 = vadd.f32 %v2872, 0.5
    %v2876 = vtanh.pop %v2861
    %v2877 = vmul.f32 %v2874, %v2507
    %v2878 = vmul.f32 %v2873, %v2876
    %v2879 = vadd.f32 %v2877, %v2878
    %v2880 = vtanh.pop %v2879
    %v2881 = vmul.f32 %v2875, %v2880
    %v2882 = vpack.c.bf16 %v2757, %v2757
    %2883 = vmatpush.bf16.msra.mxu0 %v911
    %2884 = vmatpush.bf16.msra.mxu0 %v907
    %2885 = vmatpush.bf16.msra.mxu0 %v903
    %2886 = vmatpush.bf16.msra.mxu0 %v899
    %2887 = vmatpush.bf16.msra.mxu0 %v895
    %2888 = vmatpush.bf16.msra.mxu0 %v891
    %2889 = vmatpush.bf16.msra.mxu0 %v887
    %2890 = vmatpush.bf16.msra.mxu0 %v883
    %2891 = vmatmul.bf16.gmra.mxu0 %v2882
    %v2892 = vpop.f32.mrf.mxu0
    %v2893 = vadd.f32 %v97, %v2892
    %v2894 = vpop.f32.mrf.mxu0
    %2895 = vdwg.mxu0
    %2896 = vmatpush.bf16.msra.mxu0 %v943
    %2897 = vmatpush.bf16.msra.mxu0 %v939
    %2898 = vmatpush.bf16.msra.mxu0 %v935
    %2899 = vmatpush.bf16.msra.mxu0 %v931
    %2900 = vmatpush.bf16.msra.mxu0 %v927
    %2901 = vmatpush.bf16.msra.mxu0 %v923
    %2902 = vmatpush.bf16.msra.mxu0 %v919
    %2903 = vmatpush.bf16.msra.mxu0 %v915
    %2904 = vmatmul.bf16.gmra.mxu0 %v2758
    %v2905 = vpop.f32.mrf.mxu0
    %v2906 = vadd.f32 %v2893, %v2905
    %v2907 = vpop.f32.mrf.mxu0
    %2908 = vdwg.mxu0
    %2909 = vmatpush.bf16.msra.mxu0 %v912
    %2910 = vmatpush.bf16.msra.mxu0 %v908
    %2911 = vmatpush.bf16.msra.mxu0 %v904
    %2912 = vmatpush.bf16.msra.mxu0 %v900
    %2913 = vmatpush.bf16.msra.mxu0 %v896
    %2914 = vmatpush.bf16.msra.mxu0 %v892
    %2915 = vmatpush.bf16.msra.mxu0 %v888
    %2916 = vmatpush.bf16.msra.mxu0 %v884
    %2917 = vmatmul.bf16.gmra.mxu0 %v2882
    %v2918 = vpop.f32.mrf.mxu0
    %v2919 = vadd.f32 %v98, %v2918
    %v2920 = vpop.f32.mrf.mxu0
    %2921 = vdwg.mxu0
    %2922 = vmatpush.bf16.msra.mxu0 %v944
    %2923 = vmatpush.bf16.msra.mxu0 %v940
    %2924 = vmatpush.bf16.msra.mxu0 %v936
    %2925 = vmatpush.bf16.msra.mxu0 %v932
    %2926 = vmatpush.bf16.msra.mxu0 %v928
    %2927 = vmatpush.bf16.msra.mxu0 %v924
    %2928 = vmatpush.bf16.msra.mxu0 %v920
    %2929 = vmatpush.bf16.msra.mxu0 %v916
    %2930 = vmatmul.bf16.gmra.mxu0 %v2758
    %v2931 = vpop.f32.mrf.mxu0
    %v2932 = vadd.f32 %v2919, %v2931
    %v2933 = vpop.f32.mrf.mxu0
    %2934 = vdwg.mxu0
    %2935 = vmatpush.bf16.msra.mxu0 %v913
    %2936 = vmatpush.bf16.msra.mxu0 %v909
    %2937 = vmatpush.bf16.msra.mxu0 %v905
    %2938 = vmatpush.bf16.msra.mxu0 %v901
    %2939 = vmatpush.bf16.msra.mxu0 %v897
    %2940 = vmatpush.bf16.msra.mxu0 %v893
    %2941 = vmatpush.bf16.msra.mxu0 %v889
    %2942 = vmatpush.bf16.msra.mxu0 %v885
    %2943 = vmatmul.bf16.gmra.mxu0 %v2882
    %v2944 = vpop.f32.mrf.mxu0
    %v2945 = vadd.f32 %v99, %v2944
    %v2946 = vpop.f32.mrf.mxu0
    %2947 = vdwg.mxu0
    %2948 = vmatpush.bf16.msra.mxu0 %v945
    %2949 = vmatpush.bf16.msra.mxu0 %v941
    %2950 = vmatpush.bf16.msra.mxu0 %v937
    %2951 = vmatpush.bf16.msra.mxu0 %v933
    %2952 = vmatpush.bf16.msra.mxu0 %v929
    %2953 = vmatpush.bf16.msra.mxu0 %v925
    %2954 = vmatpush.bf16.msra.mxu0 %v921
    %2955 = vmatpush.bf16.msra.mxu0 %v917
    %2956 = vmatmul.bf16.gmra.mxu0 %v2758
    %v2957 = vpop.f32.mrf.mxu0
    %v2958 = vadd.f32 %v2945, %v2957
    %v2959 = vpop.f32.mrf.mxu0
    %2960 = vdwg.mxu0
    %2961 = vmatpush.bf16.msra.mxu0 %v914
    %2962 = vmatpush.bf16.msra.mxu0 %v910
    %2963 = vmatpush.bf16.msra.mxu0 %v906
    %2964 = vmatpush.bf16.msra.mxu0 %v902
    %2965 = vmatpush.bf16.msra.mxu0 %v898
    %2966 = vmatpush.bf16.msra.mxu0 %v894
    %2967 = vmatpush.bf16.msra.mxu0 %v890
    %2968 = vmatpush.bf16.msra.mxu0 %v886
    %2969 = vmatmul.bf16.gmra.mxu0 %v2882
    %v2970 = vpop.f32.mrf.mxu0
    %v2971 = vadd.f32 %v100, %v2970
    %v2972 = vpop.f32.mrf.mxu0
    %2973 = vdwg.mxu0
    %2974 = vmatpush.bf16.msra.mxu0 %v946
    %2975 = vmatpush.bf16.msra.mxu0 %v942
    %2976 = vmatpush.bf16.msra.mxu0 %v938
    %2977 = vmatpush.bf16.msra.mxu0 %v934
    %2978 = vmatpush.bf16.msra.mxu0 %v930
    %2979 = vmatpush.bf16.msra.mxu0 %v926
    %2980 = vmatpush.bf16.msra.mxu0 %v922
    %2981 = vmatpush.bf16.msra.mxu0 %v918
    %2982 = vmatmul.bf16.gmra.mxu0 %v2758
    %v2983 = vpop.f32.mrf.mxu0
    %v2984 = vadd.f32 %v2971, %v2983
    %v2985 = vpop.f32.mrf.mxu0
    %2986 = vdwg.mxu0
    %v2987 = vmul.f32 %v2906, 0.5
    %v2988 = vmul.f32 %v2932, 0.5
    %v2989 = vmul.f32 %v2958, 0.5
    %v2990 = vtanh.pop %v2987
    %v2991 = vtanh.pop %v2988
    %v2992 = vtanh.pop %v2989
    %v2993 = vmul.f32 %v2990, 0.5
    %v2994 = vmul.f32 %v2991, 0.5
    %v2995 = vmul.f32 %v2992, 0.5
    %v2996 = vadd.f32 %v2993, 0.5
    %v2997 = vadd.f32 %v2994, 0.5
    %v2998 = vadd.f32 %v2995, 0.5
    %v2999 = vtanh.pop %v2984
    %v3000 = vmul.f32 %v2997, %v2630
    %v3001 = vmul.f32 %v2996, %v2999
    %v3002 = vadd.f32 %v3000, %v3001
    %v3003 = vtanh.pop %v3002
    %v3004 = vmul.f32 %v2998, %v3003
    %s3005 = scalar_lea.vmem [#allocation2], 40
    %v3006 = vld [vmem:[%s3005] sm:$0xff]
    %v3007 = vpack.c.bf16 %v3006, %v3006
    %3008 = vmatpush.bf16.msra.mxu0 %v403
    %3009 = vmatpush.bf16.msra.mxu0 %v399
    %3010 = vmatpush.bf16.msra.mxu0 %v395
    %3011 = vmatpush.bf16.msra.mxu0 %v391
    %3012 = vmatpush.bf16.msra.mxu0 %v387
    %3013 = vmatpush.bf16.msra.mxu0 %v383
    %3014 = vmatpush.bf16.msra.mxu0 %v379
    %3015 = vmatpush.bf16.msra.mxu0 %v375
    %3016 = vmatmul.bf16.gmra.mxu0 %v3007
    %v3017 = vpop.f32.mrf.mxu0
    %v3018 = vadd.f32 %v86, %v3017
    %v3019 = vpop.f32.mrf.mxu0
    %3020 = vdwg.mxu0
    %3021 = vmatpush.bf16.msra.mxu0 %v435
    %3022 = vmatpush.bf16.msra.mxu0 %v431
    %3023 = vmatpush.bf16.msra.mxu0 %v427
    %3024 = vmatpush.bf16.msra.mxu0 %v423
    %3025 = vmatpush.bf16.msra.mxu0 %v419
    %3026 = vmatpush.bf16.msra.mxu0 %v415
    %3027 = vmatpush.bf16.msra.mxu0 %v411
    %3028 = vmatpush.bf16.msra.mxu0 %v407
    %3029 = vmatmul.bf16.gmra.mxu0 %v2882
    %v3030 = vpop.f32.mrf.mxu0
    %v3031 = vadd.f32 %v3018, %v3030
    %v3032 = vpop.f32.mrf.mxu0
    %3033 = vdwg.mxu0
    %3034 = vmatpush.bf16.msra.mxu0 %v404
    %3035 = vmatpush.bf16.msra.mxu0 %v400
    %3036 = vmatpush.bf16.msra.mxu0 %v396
    %3037 = vmatpush.bf16.msra.mxu0 %v392
    %3038 = vmatpush.bf16.msra.mxu0 %v388
    %3039 = vmatpush.bf16.msra.mxu0 %v384
    %3040 = vmatpush.bf16.msra.mxu0 %v380
    %3041 = vmatpush.bf16.msra.mxu0 %v376
    %3042 = vmatmul.bf16.gmra.mxu0 %v3007
    %v3043 = vpop.f32.mrf.mxu0
    %v3044 = vadd.f32 %v87, %v3043
    %v3045 = vpop.f32.mrf.mxu0
    %3046 = vdwg.mxu0
    %3047 = vmatpush.bf16.msra.mxu0 %v436
    %3048 = vmatpush.bf16.msra.mxu0 %v432
    %3049 = vmatpush.bf16.msra.mxu0 %v428
    %3050 = vmatpush.bf16.msra.mxu0 %v424
    %3051 = vmatpush.bf16.msra.mxu0 %v420
    %3052 = vmatpush.bf16.msra.mxu0 %v416
    %3053 = vmatpush.bf16.msra.mxu0 %v412
    %3054 = vmatpush.bf16.msra.mxu0 %v408
    %3055 = vmatmul.bf16.gmra.mxu0 %v2882
    %v3056 = vpop.f32.mrf.mxu0
    %v3057 = vadd.f32 %v3044, %v3056
    %v3058 = vpop.f32.mrf.mxu0
    %3059 = vdwg.mxu0
    %3060 = vmatpush.bf16.msra.mxu0 %v405
    %3061 = vmatpush.bf16.msra.mxu0 %v401
    %3062 = vmatpush.bf16.msra.mxu0 %v397
    %3063 = vmatpush.bf16.msra.mxu0 %v393
    %3064 = vmatpush.bf16.msra.mxu0 %v389
    %3065 = vmatpush.bf16.msra.mxu0 %v385
    %3066 = vmatpush.bf16.msra.mxu0 %v381
    %3067 = vmatpush.bf16.msra.mxu0 %v377
    %3068 = vmatmul.bf16.gmra.mxu0 %v3007
    %v3069 = vpop.f32.mrf.mxu0
    %v3070 = vadd.f32 %v88, %v3069
    %v3071 = vpop.f32.mrf.mxu0
    %3072 = vdwg.mxu0
    %3073 = vmatpush.bf16.msra.mxu0 %v437
    %3074 = vmatpush.bf16.msra.mxu0 %v433
    %3075 = vmatpush.bf16.msra.mxu0 %v429
    %3076 = vmatpush.bf16.msra.mxu0 %v425
    %3077 = vmatpush.bf16.msra.mxu0 %v421
    %3078 = vmatpush.bf16.msra.mxu0 %v417
    %3079 = vmatpush.bf16.msra.mxu0 %v413
    %3080 = vmatpush.bf16.msra.mxu0 %v409
    %3081 = vmatmul.bf16.gmra.mxu0 %v2882
    %v3082 = vpop.f32.mrf.mxu0
    %v3083 = vadd.f32 %v3070, %v3082
    %v3084 = vpop.f32.mrf.mxu0
    %3085 = vdwg.mxu0
    %3086 = vmatpush.bf16.msra.mxu0 %v406
    %3087 = vmatpush.bf16.msra.mxu0 %v402
    %3088 = vmatpush.bf16.msra.mxu0 %v398
    %3089 = vmatpush.bf16.msra.mxu0 %v394
    %3090 = vmatpush.bf16.msra.mxu0 %v390
    %3091 = vmatpush.bf16.msra.mxu0 %v386
    %3092 = vmatpush.bf16.msra.mxu0 %v382
    %3093 = vmatpush.bf16.msra.mxu0 %v378
    %3094 = vmatmul.bf16.gmra.mxu0 %v3007
    %v3095 = vpop.f32.mrf.mxu0
    %v3096 = vadd.f32 %v89, %v3095
    %v3097 = vpop.f32.mrf.mxu0
    %3098 = vdwg.mxu0
    %3099 = vmatpush.bf16.msra.mxu0 %v438
    %3100 = vmatpush.bf16.msra.mxu0 %v434
    %3101 = vmatpush.bf16.msra.mxu0 %v430
    %3102 = vmatpush.bf16.msra.mxu0 %v426
    %3103 = vmatpush.bf16.msra.mxu0 %v422
    %3104 = vmatpush.bf16.msra.mxu0 %v418
    %3105 = vmatpush.bf16.msra.mxu0 %v414
    %3106 = vmatpush.bf16.msra.mxu0 %v410
    %3107 = vmatmul.bf16.gmra.mxu0 %v2882
    %v3108 = vpop.f32.mrf.mxu0
    %v3109 = vadd.f32 %v3096, %v3108
    %v3110 = vpop.f32.mrf.mxu0
    %3111 = vdwg.mxu0
    %v3112 = vmul.f32 %v3031, 0.5
    %v3113 = vmul.f32 %v3057, 0.5
    %v3114 = vmul.f32 %v3083, 0.5
    %v3115 = vtanh.pop %v3112
    %v3116 = vtanh.pop %v3113
    %v3117 = vtanh.pop %v3114
    %v3118 = vmul.f32 %v3115, 0.5
    %v3119 = vmul.f32 %v3116, 0.5
    %v3120 = vmul.f32 %v3117, 0.5
    %v3121 = vadd.f32 %v3118, 0.5
    %v3122 = vadd.f32 %v3119, 0.5
    %v3123 = vadd.f32 %v3120, 0.5
    %v3124 = vtanh.pop %v3109
    %v3125 = vmul.f32 %v3122, %v2755
    %v3126 = vmul.f32 %v3121, %v3124
    %v3127 = vadd.f32 %v3125, %v3126
    %v3128 = vtanh.pop %v3127
    %v3129 = vmul.f32 %v3123, %v3128
    %v3130 = vpack.c.bf16 %v3004, %v3004
    %v3131 = vpack.c.bf16 %v2881, %v2881
    %3132 = vmatpush.bf16.msra.mxu0 %v1544
    %3133 = vmatpush.bf16.msra.mxu0 %v1540
    %3134 = vmatpush.bf16.msra.mxu0 %v1536
    %3135 = vmatpush.bf16.msra.mxu0 %v1532
    %3136 = vmatpush.bf16.msra.mxu0 %v1528
    %3137 = vmatpush.bf16.msra.mxu0 %v1524
    %3138 = vmatpush.bf16.msra.mxu0 %v1520
    %3139 = vmatpush.bf16.msra.mxu0 %v1516
    %3140 = vmatmul.bf16.gmra.mxu0 %v3130
    %v3141 = vpop.f32.mrf.mxu0
    %v3142 = vadd.f32 %v108, %v3141
    %v3143 = vpop.f32.mrf.mxu0
    %3144 = vdwg.mxu0
    %3145 = vmatpush.bf16.msra.mxu0 %v1576
    %3146 = vmatpush.bf16.msra.mxu0 %v1572
    %3147 = vmatpush.bf16.msra.mxu0 %v1568
    %3148 = vmatpush.bf16.msra.mxu0 %v1564
    %3149 = vmatpush.bf16.msra.mxu0 %v1560
    %3150 = vmatpush.bf16.msra.mxu0 %v1556
    %3151 = vmatpush.bf16.msra.mxu0 %v1552
    %3152 = vmatpush.bf16.msra.mxu0 %v1548
    %3153 = vmatmul.bf16.gmra.mxu0 %v3131
    %v3154 = vpop.f32.mrf.mxu0
    %v3155 = vadd.f32 %v3142, %v3154
    %v3156 = vpop.f32.mrf.mxu0
    %3157 = vdwg.mxu0
    %3158 = vmatpush.bf16.msra.mxu0 %v1545
    %3159 = vmatpush.bf16.msra.mxu0 %v1541
    %3160 = vmatpush.bf16.msra.mxu0 %v1537
    %3161 = vmatpush.bf16.msra.mxu0 %v1533
    %3162 = vmatpush.bf16.msra.mxu0 %v1529
    %3163 = vmatpush.bf16.msra.mxu0 %v1525
    %3164 = vmatpush.bf16.msra.mxu0 %v1521
    %3165 = vmatpush.bf16.msra.mxu0 %v1517
    %3166 = vmatmul.bf16.gmra.mxu0 %v3130
    %v3167 = vpop.f32.mrf.mxu0
    %v3168 = vadd.f32 %v109, %v3167
    %v3169 = vpop.f32.mrf.mxu0
    %3170 = vdwg.mxu0
    %3171 = vmatpush.bf16.msra.mxu0 %v1577
    %3172 = vmatpush.bf16.msra.mxu0 %v1573
    %3173 = vmatpush.bf16.msra.mxu0 %v1569
    %3174 = vmatpush.bf16.msra.mxu0 %v1565
    %3175 = vmatpush.bf16.msra.mxu0 %v1561
    %3176 = vmatpush.bf16.msra.mxu0 %v1557
    %3177 = vmatpush.bf16.msra.mxu0 %v1553
    %3178 = vmatpush.bf16.msra.mxu0 %v1549
    %3179 = vmatmul.bf16.gmra.mxu0 %v3131
    %v3180 = vpop.f32.mrf.mxu0
    %v3181 = vadd.f32 %v3168, %v3180
    %v3182 = vpop.f32.mrf.mxu0
    %3183 = vdwg.mxu0
    %3184 = vmatpush.bf16.msra.mxu0 %v1546
    %3185 = vmatpush.bf16.msra.mxu0 %v1542
    %3186 = vmatpush.bf16.msra.mxu0 %v1538
    %3187 = vmatpush.bf16.msra.mxu0 %v1534
    %3188 = vmatpush.bf16.msra.mxu0 %v1530
    %3189 = vmatpush.bf16.msra.mxu0 %v1526
    %3190 = vmatpush.bf16.msra.mxu0 %v1522
    %3191 = vmatpush.bf16.msra.mxu0 %v1518
    %3192 = vmatmul.bf16.gmra.mxu0 %v3130
    %v3193 = vpop.f32.mrf.mxu0
    %v3194 = vadd.f32 %v110, %v3193
    %v3195 = vpop.f32.mrf.mxu0
    %3196 = vdwg.mxu0
    %3197 = vmatpush.bf16.msra.mxu0 %v1578
    %3198 = vmatpush.bf16.msra.mxu0 %v1574
    %3199 = vmatpush.bf16.msra.mxu0 %v1570
    %3200 = vmatpush.bf16.msra.mxu0 %v1566
    %3201 = vmatpush.bf16.msra.mxu0 %v1562
    %3202 = vmatpush.bf16.msra.mxu0 %v1558
    %3203 = vmatpush.bf16.msra.mxu0 %v1554
    %3204 = vmatpush.bf16.msra.mxu0 %v1550
    %3205 = vmatmul.bf16.gmra.mxu0 %v3131
    %v3206 = vpop.f32.mrf.mxu0
    %v3207 = vadd.f32 %v3194, %v3206
    %v3208 = vpop.f32.mrf.mxu0
    %3209 = vdwg.mxu0
    %3210 = vmatpush.bf16.msra.mxu0 %v1547
    %3211 = vmatpush.bf16.msra.mxu0 %v1543
    %3212 = vmatpush.bf16.msra.mxu0 %v1539
    %3213 = vmatpush.bf16.msra.mxu0 %v1535
    %3214 = vmatpush.bf16.msra.mxu0 %v1531
    %3215 = vmatpush.bf16.msra.mxu0 %v1527
    %3216 = vmatpush.bf16.msra.mxu0 %v1523
    %3217 = vmatpush.bf16.msra.mxu0 %v1519
    %3218 = vmatmul.bf16.gmra.mxu0 %v3130
    %v3219 = vpop.f32.mrf.mxu0
    %v3220 = vadd.f32 %v111, %v3219
    %v3221 = vpop.f32.mrf.mxu0
    %3222 = vdwg.mxu0
    %3223 = vmatpush.bf16.msra.mxu0 %v1579
    %3224 = vmatpush.bf16.msra.mxu0 %v1575
    %3225 = vmatpush.bf16.msra.mxu0 %v1571
    %3226 = vmatpush.bf16.msra.mxu0 %v1567
    %3227 = vmatpush.bf16.msra.mxu0 %v1563
    %3228 = vmatpush.bf16.msra.mxu0 %v1559
    %3229 = vmatpush.bf16.msra.mxu0 %v1555
    %3230 = vmatpush.bf16.msra.mxu0 %v1551
    %3231 = vmatmul.bf16.gmra.mxu0 %v3131
    %v3232 = vpop.f32.mrf.mxu0
    %v3233 = vadd.f32 %v3220, %v3232
    %v3234 = vpop.f32.mrf.mxu0
    %3235 = vdwg.mxu0
    %v3236 = vmul.f32 %v3155, 0.5
    %v3237 = vmul.f32 %v3181, 0.5
    %v3238 = vmul.f32 %v3207, 0.5
    %v3239 = vtanh.pop %v3236
    %v3240 = vtanh.pop %v3237
    %v3241 = vtanh.pop %v3238
    %v3242 = vmul.f32 %v3239, 0.5
    %v3243 = vmul.f32 %v3240, 0.5
    %v3244 = vmul.f32 %v3241, 0.5
    %v3245 = vadd.f32 %v3242, 0.5
    %v3246 = vadd.f32 %v3243, 0.5
    %v3247 = vadd.f32 %v3244, 0.5
    %v3248 = vtanh.pop %v3233
    %v3249 = vmul.f32 %v3246, %v2879
    %v3250 = vmul.f32 %v3245, %v3248
    %v3251 = vadd.f32 %v3249, %v3250
    %v3252 = vtanh.pop %v3251
    %v3253 = vmul.f32 %v3247, %v3252
    %v3254 = vpack.c.bf16 %v3129, %v3129
    %3255 = vmatpush.bf16.msra.mxu0 %v911
    %3256 = vmatpush.bf16.msra.mxu0 %v907
    %3257 = vmatpush.bf16.msra.mxu0 %v903
    %3258 = vmatpush.bf16.msra.mxu0 %v899
    %3259 = vmatpush.bf16.msra.mxu0 %v895
    %3260 = vmatpush.bf16.msra.mxu0 %v891
    %3261 = vmatpush.bf16.msra.mxu0 %v887
    %3262 = vmatpush.bf16.msra.mxu0 %v883
    %3263 = vmatmul.bf16.gmra.mxu0 %v3254
    %v3264 = vpop.f32.mrf.mxu0
    %v3265 = vadd.f32 %v97, %v3264
    %v3266 = vpop.f32.mrf.mxu0
    %3267 = vdwg.mxu0
    %3268 = vmatpush.bf16.msra.mxu0 %v943
    %3269 = vmatpush.bf16.msra.mxu0 %v939
    %3270 = vmatpush.bf16.msra.mxu0 %v935
    %3271 = vmatpush.bf16.msra.mxu0 %v931
    %3272 = vmatpush.bf16.msra.mxu0 %v927
    %3273 = vmatpush.bf16.msra.mxu0 %v923
    %3274 = vmatpush.bf16.msra.mxu0 %v919
    %3275 = vmatpush.bf16.msra.mxu0 %v915
    %3276 = vmatmul.bf16.gmra.mxu0 %v3130
    %v3277 = vpop.f32.mrf.mxu0
    %v3278 = vadd.f32 %v3265, %v3277
    %v3279 = vpop.f32.mrf.mxu0
    %3280 = vdwg.mxu0
    %3281 = vmatpush.bf16.msra.mxu0 %v912
    %3282 = vmatpush.bf16.msra.mxu0 %v908
    %3283 = vmatpush.bf16.msra.mxu0 %v904
    %3284 = vmatpush.bf16.msra.mxu0 %v900
    %3285 = vmatpush.bf16.msra.mxu0 %v896
    %3286 = vmatpush.bf16.msra.mxu0 %v892
    %3287 = vmatpush.bf16.msra.mxu0 %v888
    %3288 = vmatpush.bf16.msra.mxu0 %v884
    %3289 = vmatmul.bf16.gmra.mxu0 %v3254
    %v3290 = vpop.f32.mrf.mxu0
    %v3291 = vadd.f32 %v98, %v3290
    %v3292 = vpop.f32.mrf.mxu0
    %3293 = vdwg.mxu0
    %3294 = vmatpush.bf16.msra.mxu0 %v944
    %3295 = vmatpush.bf16.msra.mxu0 %v940
    %3296 = vmatpush.bf16.msra.mxu0 %v936
    %3297 = vmatpush.bf16.msra.mxu0 %v932
    %3298 = vmatpush.bf16.msra.mxu0 %v928
    %3299 = vmatpush.bf16.msra.mxu0 %v924
    %3300 = vmatpush.bf16.msra.mxu0 %v920
    %3301 = vmatpush.bf16.msra.mxu0 %v916
    %3302 = vmatmul.bf16.gmra.mxu0 %v3130
    %v3303 = vpop.f32.mrf.mxu0
    %v3304 = vadd.f32 %v3291, %v3303
    %v3305 = vpop.f32.mrf.mxu0
    %3306 = vdwg.mxu0
    %3307 = vmatpush.bf16.msra.mxu0 %v913
    %3308 = vmatpush.bf16.msra.mxu0 %v909
    %3309 = vmatpush.bf16.msra.mxu0 %v905
    %3310 = vmatpush.bf16.msra.mxu0 %v901
    %3311 = vmatpush.bf16.msra.mxu0 %v897
    %3312 = vmatpush.bf16.msra.mxu0 %v893
    %3313 = vmatpush.bf16.msra.mxu0 %v889
    %3314 = vmatpush.bf16.msra.mxu0 %v885
    %3315 = vmatmul.bf16.gmra.mxu0 %v3254
    %v3316 = vpop.f32.mrf.mxu0
    %v3317 = vadd.f32 %v99, %v3316
    %v3318 = vpop.f32.mrf.mxu0
    %3319 = vdwg.mxu0
    %3320 = vmatpush.bf16.msra.mxu0 %v945
    %3321 = vmatpush.bf16.msra.mxu0 %v941
    %3322 = vmatpush.bf16.msra.mxu0 %v937
    %3323 = vmatpush.bf16.msra.mxu0 %v933
    %3324 = vmatpush.bf16.msra.mxu0 %v929
    %3325 = vmatpush.bf16.msra.mxu0 %v925
    %3326 = vmatpush.bf16.msra.mxu0 %v921
    %3327 = vmatpush.bf16.msra.mxu0 %v917
    %3328 = vmatmul.bf16.gmra.mxu0 %v3130
    %v3329 = vpop.f32.mrf.mxu0
    %v3330 = vadd.f32 %v3317, %v3329
    %v3331 = vpop.f32.mrf.mxu0
    %3332 = vdwg.mxu0
    %3333 = vmatpush.bf16.msra.mxu0 %v914
    %3334 = vmatpush.bf16.msra.mxu0 %v910
    %3335 = vmatpush.bf16.msra.mxu0 %v906
    %3336 = vmatpush.bf16.msra.mxu0 %v902
    %3337 = vmatpush.bf16.msra.mxu0 %v898
    %3338 = vmatpush.bf16.msra.mxu0 %v894
    %3339 = vmatpush.bf16.msra.mxu0 %v890
    %3340 = vmatpush.bf16.msra.mxu0 %v886
    %3341 = vmatmul.bf16.gmra.mxu0 %v3254
    %v3342 = vpop.f32.mrf.mxu0
    %v3343 = vadd.f32 %v100, %v3342
    %v3344 = vpop.f32.mrf.mxu0
    %3345 = vdwg.mxu0
    %3346 = vmatpush.bf16.msra.mxu0 %v946
    %3347 = vmatpush.bf16.msra.mxu0 %v942
    %3348 = vmatpush.bf16.msra.mxu0 %v938
    %3349 = vmatpush.bf16.msra.mxu0 %v934
    %3350 = vmatpush.bf16.msra.mxu0 %v930
    %3351 = vmatpush.bf16.msra.mxu0 %v926
    %3352 = vmatpush.bf16.msra.mxu0 %v922
    %3353 = vmatpush.bf16.msra.mxu0 %v918
    %3354 = vmatmul.bf16.gmra.mxu0 %v3130
    %v3355 = vpop.f32.mrf.mxu0
    %v3356 = vadd.f32 %v3343, %v3355
    %v3357 = vpop.f32.mrf.mxu0
    %3358 = vdwg.mxu0
    %v3359 = vmul.f32 %v3278, 0.5
    %v3360 = vmul.f32 %v3304, 0.5
    %v3361 = vmul.f32 %v3330, 0.5
    %v3362 = vtanh.pop %v3359
    %v3363 = vtanh.pop %v3360
    %v3364 = vtanh.pop %v3361
    %v3365 = vmul.f32 %v3362, 0.5
    %v3366 = vmul.f32 %v3363, 0.5
    %v3367 = vmul.f32 %v3364, 0.5
    %v3368 = vadd.f32 %v3365, 0.5
    %v3369 = vadd.f32 %v3366, 0.5
    %v3370 = vadd.f32 %v3367, 0.5
    %v3371 = vtanh.pop %v3356
    %v3372 = vmul.f32 %v3369, %v3002
    %v3373 = vmul.f32 %v3368, %v3371
    %v3374 = vadd.f32 %v3372, %v3373
    %v3375 = vtanh.pop %v3374
    %v3376 = vmul.f32 %v3370, %v3375
    %s3377 = scalar_lea.vmem [#allocation2], 48
    %v3378 = vld [vmem:[%s3377] sm:$0xff]
    %v3379 = vpack.c.bf16 %v3378, %v3378
    %3380 = vmatpush.bf16.msra.mxu0 %v403
    %3381 = vmatpush.bf16.msra.mxu0 %v399
    %3382 = vmatpush.bf16.msra.mxu0 %v395
    %3383 = vmatpush.bf16.msra.mxu0 %v391
    %3384 = vmatpush.bf16.msra.mxu0 %v387
    %3385 = vmatpush.bf16.msra.mxu0 %v383
    %3386 = vmatpush.bf16.msra.mxu0 %v379
    %3387 = vmatpush.bf16.msra.mxu0 %v375
    %3388 = vmatmul.bf16.gmra.mxu0 %v3379
    %v3389 = vpop.f32.mrf.mxu0
    %v3390 = vadd.f32 %v86, %v3389
    %v3391 = vpop.f32.mrf.mxu0
    %3392 = vdwg.mxu0
    %3393 = vmatpush.bf16.msra.mxu0 %v435
    %3394 = vmatpush.bf16.msra.mxu0 %v431
    %3395 = vmatpush.bf16.msra.mxu0 %v427
    %3396 = vmatpush.bf16.msra.mxu0 %v423
    %3397 = vmatpush.bf16.msra.mxu0 %v419
    %3398 = vmatpush.bf16.msra.mxu0 %v415
    %3399 = vmatpush.bf16.msra.mxu0 %v411
    %3400 = vmatpush.bf16.msra.mxu0 %v407
    %3401 = vmatmul.bf16.gmra.mxu0 %v3254
    %v3402 = vpop.f32.mrf.mxu0
    %v3403 = vadd.f32 %v3390, %v3402
    %v3404 = vpop.f32.mrf.mxu0
    %3405 = vdwg.mxu0
    %3406 = vmatpush.bf16.msra.mxu0 %v404
    %3407 = vmatpush.bf16.msra.mxu0 %v400
    %3408 = vmatpush.bf16.msra.mxu0 %v396
    %3409 = vmatpush.bf16.msra.mxu0 %v392
    %3410 = vmatpush.bf16.msra.mxu0 %v388
    %3411 = vmatpush.bf16.msra.mxu0 %v384
    %3412 = vmatpush.bf16.msra.mxu0 %v380
    %3413 = vmatpush.bf16.msra.mxu0 %v376
    %3414 = vmatmul.bf16.gmra.mxu0 %v3379
    %v3415 = vpop.f32.mrf.mxu0
    %v3416 = vadd.f32 %v87, %v3415
    %v3417 = vpop.f32.mrf.mxu0
    %3418 = vdwg.mxu0
    %3419 = vmatpush.bf16.msra.mxu0 %v436
    %3420 = vmatpush.bf16.msra.mxu0 %v432
    %3421 = vmatpush.bf16.msra.mxu0 %v428
    %3422 = vmatpush.bf16.msra.mxu0 %v424
    %3423 = vmatpush.bf16.msra.mxu0 %v420
    %3424 = vmatpush.bf16.msra.mxu0 %v416
    %3425 = vmatpush.bf16.msra.mxu0 %v412
    %3426 = vmatpush.bf16.msra.mxu0 %v408
    %3427 = vmatmul.bf16.gmra.mxu0 %v3254
    %v3428 = vpop.f32.mrf.mxu0
    %v3429 = vadd.f32 %v3416, %v3428
    %v3430 = vpop.f32.mrf.mxu0
    %3431 = vdwg.mxu0
    %3432 = vmatpush.bf16.msra.mxu0 %v405
    %3433 = vmatpush.bf16.msra.mxu0 %v401
    %3434 = vmatpush.bf16.msra.mxu0 %v397
    %3435 = vmatpush.bf16.msra.mxu0 %v393
    %3436 = vmatpush.bf16.msra.mxu0 %v389
    %3437 = vmatpush.bf16.msra.mxu0 %v385
    %3438 = vmatpush.bf16.msra.mxu0 %v381
    %3439 = vmatpush.bf16.msra.mxu0 %v377
    %3440 = vmatmul.bf16.gmra.mxu0 %v3379
    %v3441 = vpop.f32.mrf.mxu0
    %v3442 = vadd.f32 %v88, %v3441
    %v3443 = vpop.f32.mrf.mxu0
    %3444 = vdwg.mxu0
    %3445 = vmatpush.bf16.msra.mxu0 %v437
    %3446 = vmatpush.bf16.msra.mxu0 %v433
    %3447 = vmatpush.bf16.msra.mxu0 %v429
    %3448 = vmatpush.bf16.msra.mxu0 %v425
    %3449 = vmatpush.bf16.msra.mxu0 %v421
    %3450 = vmatpush.bf16.msra.mxu0 %v417
    %3451 = vmatpush.bf16.msra.mxu0 %v413
    %3452 = vmatpush.bf16.msra.mxu0 %v409
    %3453 = vmatmul.bf16.gmra.mxu0 %v3254
    %v3454 = vpop.f32.mrf.mxu0
    %v3455 = vadd.f32 %v3442, %v3454
    %v3456 = vpop.f32.mrf.mxu0
    %3457 = vdwg.mxu0
    %3458 = vmatpush.bf16.msra.mxu0 %v406
    %3459 = vmatpush.bf16.msra.mxu0 %v402
    %3460 = vmatpush.bf16.msra.mxu0 %v398
    %3461 = vmatpush.bf16.msra.mxu0 %v394
    %3462 = vmatpush.bf16.msra.mxu0 %v390
    %3463 = vmatpush.bf16.msra.mxu0 %v386
    %3464 = vmatpush.bf16.msra.mxu0 %v382
    %3465 = vmatpush.bf16.msra.mxu0 %v378
    %3466 = vmatmul.bf16.gmra.mxu0 %v3379
    %v3467 = vpop.f32.mrf.mxu0
    %v3468 = vadd.f32 %v89, %v3467
    %v3469 = vpop.f32.mrf.mxu0
    %3470 = vdwg.mxu0
    %3471 = vmatpush.bf16.msra.mxu0 %v438
    %3472 = vmatpush.bf16.msra.mxu0 %v434
    %3473 = vmatpush.bf16.msra.mxu0 %v430
    %3474 = vmatpush.bf16.msra.mxu0 %v426
    %3475 = vmatpush.bf16.msra.mxu0 %v422
    %3476 = vmatpush.bf16.msra.mxu0 %v418
    %3477 = vmatpush.bf16.msra.mxu0 %v414
    %3478 = vmatpush.bf16.msra.mxu0 %v410
    %3479 = vmatmul.bf16.gmra.mxu0 %v3254
    %v3480 = vpop.f32.mrf.mxu0
    %v3481 = vadd.f32 %v3468, %v3480
    %v3482 = vpop.f32.mrf.mxu0
    %3483 = vdwg.mxu0
    %v3484 = vmul.f32 %v3403, 0.5
    %v3485 = vmul.f32 %v3429, 0.5
    %v3486 = vmul.f32 %v3455, 0.5
    %v3487 = vtanh.pop %v3484
    %v3488 = vtanh.pop %v3485
    %v3489 = vtanh.pop %v3486
    %v3490 = vmul.f32 %v3487, 0.5
    %v3491 = vmul.f32 %v3488, 0.5
    %v3492 = vmul.f32 %v3489, 0.5
    %v3493 = vadd.f32 %v3490, 0.5
    %v3494 = vadd.f32 %v3491, 0.5
    %v3495 = vadd.f32 %v3492, 0.5
    %v3496 = vtanh.pop %v3481
    %v3497 = vmul.f32 %v3494, %v3127
    %v3498 = vmul.f32 %v3493, %v3496
    %v3499 = vadd.f32 %v3497, %v3498
    %v3500 = vtanh.pop %v3499
    %v3501 = vmul.f32 %v3495, %v3500
    %v3502 = vpack.c.bf16 %v3376, %v3376
    %v3503 = vpack.c.bf16 %v3253, %v3253
    %3504 = vmatpush.bf16.msra.mxu0 %v1544
    %3505 = vmatpush.bf16.msra.mxu0 %v1540
    %3506 = vmatpush.bf16.msra.mxu0 %v1536
    %3507 = vmatpush.bf16.msra.mxu0 %v1532
    %3508 = vmatpush.bf16.msra.mxu0 %v1528
    %3509 = vmatpush.bf16.msra.mxu0 %v1524
    %3510 = vmatpush.bf16.msra.mxu0 %v1520
    %3511 = vmatpush.bf16.msra.mxu0 %v1516
    %3512 = vmatmul.bf16.gmra.mxu0 %v3502
    %v3513 = vpop.f32.mrf.mxu0
    %v3514 = vadd.f32 %v108, %v3513
    %v3515 = vpop.f32.mrf.mxu0
    %3516 = vdwg.mxu0
    %3517 = vmatpush.bf16.msra.mxu0 %v1576
    %3518 = vmatpush.bf16.msra.mxu0 %v1572
    %3519 = vmatpush.bf16.msra.mxu0 %v1568
    %3520 = vmatpush.bf16.msra.mxu0 %v1564
    %3521 = vmatpush.bf16.msra.mxu0 %v1560
    %3522 = vmatpush.bf16.msra.mxu0 %v1556
    %3523 = vmatpush.bf16.msra.mxu0 %v1552
    %3524 = vmatpush.bf16.msra.mxu0 %v1548
    %3525 = vmatmul.bf16.gmra.mxu0 %v3503
    %v3526 = vpop.f32.mrf.mxu0
    %v3527 = vadd.f32 %v3514, %v3526
    %v3528 = vpop.f32.mrf.mxu0
    %3529 = vdwg.mxu0
    %3530 = vmatpush.bf16.msra.mxu0 %v1545
    %3531 = vmatpush.bf16.msra.mxu0 %v1541
    %3532 = vmatpush.bf16.msra.mxu0 %v1537
    %3533 = vmatpush.bf16.msra.mxu0 %v1533
    %3534 = vmatpush.bf16.msra.mxu0 %v1529
    %3535 = vmatpush.bf16.msra.mxu0 %v1525
    %3536 = vmatpush.bf16.msra.mxu0 %v1521
    %3537 = vmatpush.bf16.msra.mxu0 %v1517
    %3538 = vmatmul.bf16.gmra.mxu0 %v3502
    %v3539 = vpop.f32.mrf.mxu0
    %v3540 = vadd.f32 %v109, %v3539
    %v3541 = vpop.f32.mrf.mxu0
    %3542 = vdwg.mxu0
    %3543 = vmatpush.bf16.msra.mxu0 %v1577
    %3544 = vmatpush.bf16.msra.mxu0 %v1573
    %3545 = vmatpush.bf16.msra.mxu0 %v1569
    %3546 = vmatpush.bf16.msra.mxu0 %v1565
    %3547 = vmatpush.bf16.msra.mxu0 %v1561
    %3548 = vmatpush.bf16.msra.mxu0 %v1557
    %3549 = vmatpush.bf16.msra.mxu0 %v1553
    %3550 = vmatpush.bf16.msra.mxu0 %v1549
    %3551 = vmatmul.bf16.gmra.mxu0 %v3503
    %v3552 = vpop.f32.mrf.mxu0
    %v3553 = vadd.f32 %v3540, %v3552
    %v3554 = vpop.f32.mrf.mxu0
    %3555 = vdwg.mxu0
    %3556 = vmatpush.bf16.msra.mxu0 %v1546
    %3557 = vmatpush.bf16.msra.mxu0 %v1542
    %3558 = vmatpush.bf16.msra.mxu0 %v1538
    %3559 = vmatpush.bf16.msra.mxu0 %v1534
    %3560 = vmatpush.bf16.msra.mxu0 %v1530
    %3561 = vmatpush.bf16.msra.mxu0 %v1526
    %3562 = vmatpush.bf16.msra.mxu0 %v1522
    %3563 = vmatpush.bf16.msra.mxu0 %v1518
    %3564 = vmatmul.bf16.gmra.mxu0 %v3502
    %v3565 = vpop.f32.mrf.mxu0
    %v3566 = vadd.f32 %v110, %v3565
    %v3567 = vpop.f32.mrf.mxu0
    %3568 = vdwg.mxu0
    %3569 = vmatpush.bf16.msra.mxu0 %v1578
    %3570 = vmatpush.bf16.msra.mxu0 %v1574
    %3571 = vmatpush.bf16.msra.mxu0 %v1570
    %3572 = vmatpush.bf16.msra.mxu0 %v1566
    %3573 = vmatpush.bf16.msra.mxu0 %v1562
    %3574 = vmatpush.bf16.msra.mxu0 %v1558
    %3575 = vmatpush.bf16.msra.mxu0 %v1554
    %3576 = vmatpush.bf16.msra.mxu0 %v1550
    %3577 = vmatmul.bf16.gmra.mxu0 %v3503
    %v3578 = vpop.f32.mrf.mxu0
    %v3579 = vadd.f32 %v3566, %v3578
    %v3580 = vpop.f32.mrf.mxu0
    %3581 = vdwg.mxu0
    %3582 = vmatpush.bf16.msra.mxu0 %v1547
    %3583 = vmatpush.bf16.msra.mxu0 %v1543
    %3584 = vmatpush.bf16.msra.mxu0 %v1539
    %3585 = vmatpush.bf16.msra.mxu0 %v1535
    %3586 = vmatpush.bf16.msra.mxu0 %v1531
    %3587 = vmatpush.bf16.msra.mxu0 %v1527
    %3588 = vmatpush.bf16.msra.mxu0 %v1523
    %3589 = vmatpush.bf16.msra.mxu0 %v1519
    %3590 = vmatmul.bf16.gmra.mxu0 %v3502
    %v3591 = vpop.f32.mrf.mxu0
    %v3592 = vadd.f32 %v111, %v3591
    %v3593 = vpop.f32.mrf.mxu0
    %3594 = vdwg.mxu0
    %3595 = vmatpush.bf16.msra.mxu0 %v1579
    %3596 = vmatpush.bf16.msra.mxu0 %v1575
    %3597 = vmatpush.bf16.msra.mxu0 %v1571
    %3598 = vmatpush.bf16.msra.mxu0 %v1567
    %3599 = vmatpush.bf16.msra.mxu0 %v1563
    %3600 = vmatpush.bf16.msra.mxu0 %v1559
    %3601 = vmatpush.bf16.msra.mxu0 %v1555
    %3602 = vmatpush.bf16.msra.mxu0 %v1551
    %3603 = vmatmul.bf16.gmra.mxu0 %v3503
    %v3604 = vpop.f32.mrf.mxu0
    %v3605 = vadd.f32 %v3592, %v3604
    %v3606 = vpop.f32.mrf.mxu0
    %3607 = vdwg.mxu0
    %v3608 = vmul.f32 %v3527, 0.5
    %v3609 = vmul.f32 %v3553, 0.5
    %v3610 = vmul.f32 %v3579, 0.5
    %v3611 = vtanh.pop %v3608
    %v3612 = vtanh.pop %v3609
    %v3613 = vtanh.pop %v3610
    %v3614 = vmul.f32 %v3611, 0.5
    %v3615 = vmul.f32 %v3612, 0.5
    %v3616 = vmul.f32 %v3613, 0.5
    %v3617 = vadd.f32 %v3614, 0.5
    %v3618 = vadd.f32 %v3615, 0.5
    %v3619 = vadd.f32 %v3616, 0.5
    %v3620 = vtanh.pop %v3605
    %v3621 = vmul.f32 %v3618, %v3251
    %v3622 = vmul.f32 %v3617, %v3620
    %v3623 = vadd.f32 %v3621, %v3622
    %v3624 = vtanh.pop %v3623
    %v3625 = vmul.f32 %v3619, %v3624
    %v3626 = vpack.c.bf16 %v3501, %v3501
    %3627 = vmatpush.bf16.msra.mxu0 %v911
    %3628 = vmatpush.bf16.msra.mxu0 %v907
    %3629 = vmatpush.bf16.msra.mxu0 %v903
    %3630 = vmatpush.bf16.msra.mxu0 %v899
    %3631 = vmatpush.bf16.msra.mxu0 %v895
    %3632 = vmatpush.bf16.msra.mxu0 %v891
    %3633 = vmatpush.bf16.msra.mxu0 %v887
    %3634 = vmatpush.bf16.msra.mxu0 %v883
    %3635 = vmatmul.bf16.gmra.mxu0 %v3626
    %v3636 = vpop.f32.mrf.mxu0
    %v3637 = vadd.f32 %v97, %v3636
    %v3638 = vpop.f32.mrf.mxu0
    %3639 = vdwg.mxu0
    %3640 = vmatpush.bf16.msra.mxu0 %v943
    %3641 = vmatpush.bf16.msra.mxu0 %v939
    %3642 = vmatpush.bf16.msra.mxu0 %v935
    %3643 = vmatpush.bf16.msra.mxu0 %v931
    %3644 = vmatpush.bf16.msra.mxu0 %v927
    %3645 = vmatpush.bf16.msra.mxu0 %v923
    %3646 = vmatpush.bf16.msra.mxu0 %v919
    %3647 = vmatpush.bf16.msra.mxu0 %v915
    %3648 = vmatmul.bf16.gmra.mxu0 %v3502
    %v3649 = vpop.f32.mrf.mxu0
    %v3650 = vadd.f32 %v3637, %v3649
    %v3651 = vpop.f32.mrf.mxu0
    %3652 = vdwg.mxu0
    %3653 = vmatpush.bf16.msra.mxu0 %v912
    %3654 = vmatpush.bf16.msra.mxu0 %v908
    %3655 = vmatpush.bf16.msra.mxu0 %v904
    %3656 = vmatpush.bf16.msra.mxu0 %v900
    %3657 = vmatpush.bf16.msra.mxu0 %v896
    %3658 = vmatpush.bf16.msra.mxu0 %v892
    %3659 = vmatpush.bf16.msra.mxu0 %v888
    %3660 = vmatpush.bf16.msra.mxu0 %v884
    %3661 = vmatmul.bf16.gmra.mxu0 %v3626
    %v3662 = vpop.f32.mrf.mxu0
    %v3663 = vadd.f32 %v98, %v3662
    %v3664 = vpop.f32.mrf.mxu0
    %3665 = vdwg.mxu0
    %3666 = vmatpush.bf16.msra.mxu0 %v944
    %3667 = vmatpush.bf16.msra.mxu0 %v940
    %3668 = vmatpush.bf16.msra.mxu0 %v936
    %3669 = vmatpush.bf16.msra.mxu0 %v932
    %3670 = vmatpush.bf16.msra.mxu0 %v928
    %3671 = vmatpush.bf16.msra.mxu0 %v924
    %3672 = vmatpush.bf16.msra.mxu0 %v920
    %3673 = vmatpush.bf16.msra.mxu0 %v916
    %3674 = vmatmul.bf16.gmra.mxu0 %v3502
    %v3675 = vpop.f32.mrf.mxu0
    %v3676 = vadd.f32 %v3663, %v3675
    %v3677 = vpop.f32.mrf.mxu0
    %3678 = vdwg.mxu0
    %3679 = vmatpush.bf16.msra.mxu0 %v913
    %3680 = vmatpush.bf16.msra.mxu0 %v909
    %3681 = vmatpush.bf16.msra.mxu0 %v905
    %3682 = vmatpush.bf16.msra.mxu0 %v901
    %3683 = vmatpush.bf16.msra.mxu0 %v897
    %3684 = vmatpush.bf16.msra.mxu0 %v893
    %3685 = vmatpush.bf16.msra.mxu0 %v889
    %3686 = vmatpush.bf16.msra.mxu0 %v885
    %3687 = vmatmul.bf16.gmra.mxu0 %v3626
    %v3688 = vpop.f32.mrf.mxu0
    %v3689 = vadd.f32 %v99, %v3688
    %v3690 = vpop.f32.mrf.mxu0
    %3691 = vdwg.mxu0
    %3692 = vmatpush.bf16.msra.mxu0 %v945
    %3693 = vmatpush.bf16.msra.mxu0 %v941
    %3694 = vmatpush.bf16.msra.mxu0 %v937
    %3695 = vmatpush.bf16.msra.mxu0 %v933
    %3696 = vmatpush.bf16.msra.mxu0 %v929
    %3697 = vmatpush.bf16.msra.mxu0 %v925
    %3698 = vmatpush.bf16.msra.mxu0 %v921
    %3699 = vmatpush.bf16.msra.mxu0 %v917
    %3700 = vmatmul.bf16.gmra.mxu0 %v3502
    %v3701 = vpop.f32.mrf.mxu0
    %v3702 = vadd.f32 %v3689, %v3701
    %v3703 = vpop.f32.mrf.mxu0
    %3704 = vdwg.mxu0
    %3705 = vmatpush.bf16.msra.mxu0 %v914
    %3706 = vmatpush.bf16.msra.mxu0 %v910
    %3707 = vmatpush.bf16.msra.mxu0 %v906
    %3708 = vmatpush.bf16.msra.mxu0 %v902
    %3709 = vmatpush.bf16.msra.mxu0 %v898
    %3710 = vmatpush.bf16.msra.mxu0 %v894
    %3711 = vmatpush.bf16.msra.mxu0 %v890
    %3712 = vmatpush.bf16.msra.mxu0 %v886
    %3713 = vmatmul.bf16.gmra.mxu0 %v3626
    %v3714 = vpop.f32.mrf.mxu0
    %v3715 = vadd.f32 %v100, %v3714
    %v3716 = vpop.f32.mrf.mxu0
    %3717 = vdwg.mxu0
    %3718 = vmatpush.bf16.msra.mxu0 %v946
    %3719 = vmatpush.bf16.msra.mxu0 %v942
    %3720 = vmatpush.bf16.msra.mxu0 %v938
    %3721 = vmatpush.bf16.msra.mxu0 %v934
    %3722 = vmatpush.bf16.msra.mxu0 %v930
    %3723 = vmatpush.bf16.msra.mxu0 %v926
    %3724 = vmatpush.bf16.msra.mxu0 %v922
    %3725 = vmatpush.bf16.msra.mxu0 %v918
    %3726 = vmatmul.bf16.gmra.mxu0 %v3502
    %v3727 = vpop.f32.mrf.mxu0
    %v3728 = vadd.f32 %v3715, %v3727
    %v3729 = vpop.f32.mrf.mxu0
    %3730 = vdwg.mxu0
    %v3731 = vmul.f32 %v3650, 0.5
    %v3732 = vmul.f32 %v3676, 0.5
    %v3733 = vmul.f32 %v3702, 0.5
    %v3734 = vtanh.pop %v3731
    %v3735 = vtanh.pop %v3732
    %v3736 = vtanh.pop %v3733
    %v3737 = vmul.f32 %v3734, 0.5
    %v3738 = vmul.f32 %v3735, 0.5
    %v3739 = vmul.f32 %v3736, 0.5
    %v3740 = vadd.f32 %v3737, 0.5
    %v3741 = vadd.f32 %v3738, 0.5
    %v3742 = vadd.f32 %v3739, 0.5
    %v3743 = vtanh.pop %v3728
    %v3744 = vmul.f32 %v3741, %v3374
    %v3745 = vmul.f32 %v3740, %v3743
    %v3746 = vadd.f32 %v3744, %v3745
    %v3747 = vtanh.pop %v3746
    %v3748 = vmul.f32 %v3742, %v3747
    %s3749 = scalar_lea.vmem [#allocation2], 56
    %v3750 = vld [vmem:[%s3749] sm:$0xff]
    %v3751 = vpack.c.bf16 %v3750, %v3750
    %3752 = vmatpush.bf16.msra.mxu0 %v403
    %3753 = vmatpush.bf16.msra.mxu0 %v399
    %3754 = vmatpush.bf16.msra.mxu0 %v395
    %3755 = vmatpush.bf16.msra.mxu0 %v391
    %3756 = vmatpush.bf16.msra.mxu0 %v387
    %3757 = vmatpush.bf16.msra.mxu0 %v383
    %3758 = vmatpush.bf16.msra.mxu0 %v379
    %3759 = vmatpush.bf16.msra.mxu0 %v375
    %3760 = vmatmul.bf16.gmra.mxu0 %v3751
    %v3761 = vpop.f32.mrf.mxu0
    %v3762 = vadd.f32 %v86, %v3761
    %v3763 = vpop.f32.mrf.mxu0
    %3764 = vdwg.mxu0
    %3765 = vmatpush.bf16.msra.mxu0 %v435
    %3766 = vmatpush.bf16.msra.mxu0 %v431
    %3767 = vmatpush.bf16.msra.mxu0 %v427
    %3768 = vmatpush.bf16.msra.mxu0 %v423
    %3769 = vmatpush.bf16.msra.mxu0 %v419
    %3770 = vmatpush.bf16.msra.mxu0 %v415
    %3771 = vmatpush.bf16.msra.mxu0 %v411
    %3772 = vmatpush.bf16.msra.mxu0 %v407
    %3773 = vmatmul.bf16.gmra.mxu0 %v3626
    %v3774 = vpop.f32.mrf.mxu0
    %v3775 = vadd.f32 %v3762, %v3774
    %v3776 = vpop.f32.mrf.mxu0
    %3777 = vdwg.mxu0
    %3778 = vmatpush.bf16.msra.mxu0 %v404
    %3779 = vmatpush.bf16.msra.mxu0 %v400
    %3780 = vmatpush.bf16.msra.mxu0 %v396
    %3781 = vmatpush.bf16.msra.mxu0 %v392
    %3782 = vmatpush.bf16.msra.mxu0 %v388
    %3783 = vmatpush.bf16.msra.mxu0 %v384
    %3784 = vmatpush.bf16.msra.mxu0 %v380
    %3785 = vmatpush.bf16.msra.mxu0 %v376
    %3786 = vmatmul.bf16.gmra.mxu0 %v3751
    %v3787 = vpop.f32.mrf.mxu0
    %v3788 = vadd.f32 %v87, %v3787
    %v3789 = vpop.f32.mrf.mxu0
    %3790 = vdwg.mxu0
    %3791 = vmatpush.bf16.msra.mxu0 %v436
    %3792 = vmatpush.bf16.msra.mxu0 %v432
    %3793 = vmatpush.bf16.msra.mxu0 %v428
    %3794 = vmatpush.bf16.msra.mxu0 %v424
    %3795 = vmatpush.bf16.msra.mxu0 %v420
    %3796 = vmatpush.bf16.msra.mxu0 %v416
    %3797 = vmatpush.bf16.msra.mxu0 %v412
    %3798 = vmatpush.bf16.msra.mxu0 %v408
    %3799 = vmatmul.bf16.gmra.mxu0 %v3626
    %v3800 = vpop.f32.mrf.mxu0
    %v3801 = vadd.f32 %v3788, %v3800
    %v3802 = vpop.f32.mrf.mxu0
    %3803 = vdwg.mxu0
    %3804 = vmatpush.bf16.msra.mxu0 %v405
    %3805 = vmatpush.bf16.msra.mxu0 %v401
    %3806 = vmatpush.bf16.msra.mxu0 %v397
    %3807 = vmatpush.bf16.msra.mxu0 %v393
    %3808 = vmatpush.bf16.msra.mxu0 %v389
    %3809 = vmatpush.bf16.msra.mxu0 %v385
    %3810 = vmatpush.bf16.msra.mxu0 %v381
    %3811 = vmatpush.bf16.msra.mxu0 %v377
    %3812 = vmatmul.bf16.gmra.mxu0 %v3751
    %v3813 = vpop.f32.mrf.mxu0
    %v3814 = vadd.f32 %v88, %v3813
    %v3815 = vpop.f32.mrf.mxu0
    %3816 = vdwg.mxu0
    %3817 = vmatpush.bf16.msra.mxu0 %v437
    %3818 = vmatpush.bf16.msra.mxu0 %v433
    %3819 = vmatpush.bf16.msra.mxu0 %v429
    %3820 = vmatpush.bf16.msra.mxu0 %v425
    %3821 = vmatpush.bf16.msra.mxu0 %v421
    %3822 = vmatpush.bf16.msra.mxu0 %v417
    %3823 = vmatpush.bf16.msra.mxu0 %v413
    %3824 = vmatpush.bf16.msra.mxu0 %v409
    %3825 = vmatmul.bf16.gmra.mxu0 %v3626
    %v3826 = vpop.f32.mrf.mxu0
    %v3827 = vadd.f32 %v3814, %v3826
    %v3828 = vpop.f32.mrf.mxu0
    %3829 = vdwg.mxu0
    %3830 = vmatpush.bf16.msra.mxu0 %v406
    %3831 = vmatpush.bf16.msra.mxu0 %v402
    %3832 = vmatpush.bf16.msra.mxu0 %v398
    %3833 = vmatpush.bf16.msra.mxu0 %v394
    %3834 = vmatpush.bf16.msra.mxu0 %v390
    %3835 = vmatpush.bf16.msra.mxu0 %v386
    %3836 = vmatpush.bf16.msra.mxu0 %v382
    %3837 = vmatpush.bf16.msra.mxu0 %v378
    %3838 = vmatmul.bf16.gmra.mxu0 %v3751
    %v3839 = vpop.f32.mrf.mxu0
    %v3840 = vadd.f32 %v89, %v3839
    %v3841 = vpop.f32.mrf.mxu0
    %3842 = vdwg.mxu0
    %3843 = vmatpush.bf16.msra.mxu0 %v438
    %3844 = vmatpush.bf16.msra.mxu0 %v434
    %3845 = vmatpush.bf16.msra.mxu0 %v430
    %3846 = vmatpush.bf16.msra.mxu0 %v426
    %3847 = vmatpush.bf16.msra.mxu0 %v422
    %3848 = vmatpush.bf16.msra.mxu0 %v418
    %3849 = vmatpush.bf16.msra.mxu0 %v414
    %3850 = vmatpush.bf16.msra.mxu0 %v410
    %3851 = vmatmul.bf16.gmra.mxu0 %v3626
    %v3852 = vpop.f32.mrf.mxu0
    %v3853 = vadd.f32 %v3840, %v3852
    %v3854 = vpop.f32.mrf.mxu0
    %3855 = vdwg.mxu0
    %v3856 = vmul.f32 %v3775, 0.5
    %v3857 = vmul.f32 %v3801, 0.5
    %v3858 = vmul.f32 %v3827, 0.5
    %v3859 = vtanh.pop %v3856
    %v3860 = vtanh.pop %v3857
    %v3861 = vtanh.pop %v3858
    %v3862 = vmul.f32 %v3859, 0.5
    %v3863 = vmul.f32 %v3860, 0.5
    %v3864 = vmul.f32 %v3861, 0.5
    %v3865 = vadd.f32 %v3862, 0.5
    %v3866 = vadd.f32 %v3863, 0.5
    %v3867 = vadd.f32 %v3864, 0.5
    %v3868 = vtanh.pop %v3853
    %v3869 = vmul.f32 %v3866, %v3499
    %v3870 = vmul.f32 %v3865, %v3868
    %v3871 = vadd.f32 %v3869, %v3870
    %v3872 = vtanh.pop %v3871
    %v3873 = vmul.f32 %v3867, %v3872
    %v3874 = vpack.c.bf16 %v3748, %v3748
    %v3875 = vpack.c.bf16 %v3625, %v3625
    %3876 = vmatpush.bf16.msra.mxu0 %v1544
    %3877 = vmatpush.bf16.msra.mxu0 %v1540
    %3878 = vmatpush.bf16.msra.mxu0 %v1536
    %3879 = vmatpush.bf16.msra.mxu0 %v1532
    %3880 = vmatpush.bf16.msra.mxu0 %v1528
    %3881 = vmatpush.bf16.msra.mxu0 %v1524
    %3882 = vmatpush.bf16.msra.mxu0 %v1520
    %3883 = vmatpush.bf16.msra.mxu0 %v1516
    %3884 = vmatmul.bf16.gmra.mxu0 %v3874
    %v3885 = vpop.f32.mrf.mxu0
    %v3886 = vadd.f32 %v108, %v3885
    %v3887 = vpop.f32.mrf.mxu0
    %3888 = vdwg.mxu0
    %3889 = vmatpush.bf16.msra.mxu0 %v1576
    %3890 = vmatpush.bf16.msra.mxu0 %v1572
    %3891 = vmatpush.bf16.msra.mxu0 %v1568
    %3892 = vmatpush.bf16.msra.mxu0 %v1564
    %3893 = vmatpush.bf16.msra.mxu0 %v1560
    %3894 = vmatpush.bf16.msra.mxu0 %v1556
    %3895 = vmatpush.bf16.msra.mxu0 %v1552
    %3896 = vmatpush.bf16.msra.mxu0 %v1548
    %3897 = vmatmul.bf16.gmra.mxu0 %v3875
    %v3898 = vpop.f32.mrf.mxu0
    %v3899 = vadd.f32 %v3886, %v3898
    %v3900 = vpop.f32.mrf.mxu0
    %3901 = vdwg.mxu0
    %3902 = vmatpush.bf16.msra.mxu0 %v1545
    %3903 = vmatpush.bf16.msra.mxu0 %v1541
    %3904 = vmatpush.bf16.msra.mxu0 %v1537
    %3905 = vmatpush.bf16.msra.mxu0 %v1533
    %3906 = vmatpush.bf16.msra.mxu0 %v1529
    %3907 = vmatpush.bf16.msra.mxu0 %v1525
    %3908 = vmatpush.bf16.msra.mxu0 %v1521
    %3909 = vmatpush.bf16.msra.mxu0 %v1517
    %3910 = vmatmul.bf16.gmra.mxu0 %v3874
    %v3911 = vpop.f32.mrf.mxu0
    %v3912 = vadd.f32 %v109, %v3911
    %v3913 = vpop.f32.mrf.mxu0
    %3914 = vdwg.mxu0
    %3915 = vmatpush.bf16.msra.mxu0 %v1577
    %3916 = vmatpush.bf16.msra.mxu0 %v1573
    %3917 = vmatpush.bf16.msra.mxu0 %v1569
    %3918 = vmatpush.bf16.msra.mxu0 %v1565
    %3919 = vmatpush.bf16.msra.mxu0 %v1561
    %3920 = vmatpush.bf16.msra.mxu0 %v1557
    %3921 = vmatpush.bf16.msra.mxu0 %v1553
    %3922 = vmatpush.bf16.msra.mxu0 %v1549
    %3923 = vmatmul.bf16.gmra.mxu0 %v3875
    %v3924 = vpop.f32.mrf.mxu0
    %v3925 = vadd.f32 %v3912, %v3924
    %v3926 = vpop.f32.mrf.mxu0
    %3927 = vdwg.mxu0
    %3928 = vmatpush.bf16.msra.mxu0 %v1546
    %3929 = vmatpush.bf16.msra.mxu0 %v1542
    %3930 = vmatpush.bf16.msra.mxu0 %v1538
    %3931 = vmatpush.bf16.msra.mxu0 %v1534
    %3932 = vmatpush.bf16.msra.mxu0 %v1530
    %3933 = vmatpush.bf16.msra.mxu0 %v1526
    %3934 = vmatpush.bf16.msra.mxu0 %v1522
    %3935 = vmatpush.bf16.msra.mxu0 %v1518
    %3936 = vmatmul.bf16.gmra.mxu0 %v3874
    %v3937 = vpop.f32.mrf.mxu0
    %v3938 = vadd.f32 %v110, %v3937
    %v3939 = vpop.f32.mrf.mxu0
    %3940 = vdwg.mxu0
    %3941 = vmatpush.bf16.msra.mxu0 %v1578
    %3942 = vmatpush.bf16.msra.mxu0 %v1574
    %3943 = vmatpush.bf16.msra.mxu0 %v1570
    %3944 = vmatpush.bf16.msra.mxu0 %v1566
    %3945 = vmatpush.bf16.msra.mxu0 %v1562
    %3946 = vmatpush.bf16.msra.mxu0 %v1558
    %3947 = vmatpush.bf16.msra.mxu0 %v1554
    %3948 = vmatpush.bf16.msra.mxu0 %v1550
    %3949 = vmatmul.bf16.gmra.mxu0 %v3875
    %v3950 = vpop.f32.mrf.mxu0
    %v3951 = vadd.f32 %v3938, %v3950
    %v3952 = vpop.f32.mrf.mxu0
    %3953 = vdwg.mxu0
    %3954 = vmatpush.bf16.msra.mxu0 %v1547
    %3955 = vmatpush.bf16.msra.mxu0 %v1543
    %3956 = vmatpush.bf16.msra.mxu0 %v1539
    %3957 = vmatpush.bf16.msra.mxu0 %v1535
    %3958 = vmatpush.bf16.msra.mxu0 %v1531
    %3959 = vmatpush.bf16.msra.mxu0 %v1527
    %3960 = vmatpush.bf16.msra.mxu0 %v1523
    %3961 = vmatpush.bf16.msra.mxu0 %v1519
    %3962 = vmatmul.bf16.gmra.mxu0 %v3874
    %v3963 = vpop.f32.mrf.mxu0
    %v3964 = vadd.f32 %v111, %v3963
    %v3965 = vpop.f32.mrf.mxu0
    %3966 = vdwg.mxu0
    %3967 = vmatpush.bf16.msra.mxu0 %v1579
    %3968 = vmatpush.bf16.msra.mxu0 %v1575
    %3969 = vmatpush.bf16.msra.mxu0 %v1571
    %3970 = vmatpush.bf16.msra.mxu0 %v1567
    %3971 = vmatpush.bf16.msra.mxu0 %v1563
    %3972 = vmatpush.bf16.msra.mxu0 %v1559
    %3973 = vmatpush.bf16.msra.mxu0 %v1555
    %3974 = vmatpush.bf16.msra.mxu0 %v1551
    %3975 = vmatmul.bf16.gmra.mxu0 %v3875
    %v3976 = vpop.f32.mrf.mxu0
    %v3977 = vadd.f32 %v3964, %v3976
    %v3978 = vpop.f32.mrf.mxu0
    %3979 = vdwg.mxu0
    %v3980 = vmul.f32 %v3899, 0.5
    %v3981 = vmul.f32 %v3925, 0.5
    %v3982 = vmul.f32 %v3951, 0.5
    %v3983 = vtanh.pop %v3980
    %v3984 = vtanh.pop %v3981
    %v3985 = vtanh.pop %v3982
    %v3986 = vmul.f32 %v3983, 0.5
    %v3987 = vmul.f32 %v3984, 0.5
    %v3988 = vmul.f32 %v3985, 0.5
    %v3989 = vadd.f32 %v3986, 0.5
    %v3990 = vadd.f32 %v3987, 0.5
    %v3991 = vadd.f32 %v3988, 0.5
    %v3992 = vtanh.pop %v3977
    %v3993 = vmul.f32 %v3990, %v3623
    %v3994 = vmul.f32 %v3989, %v3992
    %v3995 = vadd.f32 %v3993, %v3994
    %v3996 = vtanh.pop %v3995
    %v3997 = vmul.f32 %v3991, %v3996
    %v3998 = vpack.c.bf16 %v3873, %v3873
    %3999 = vmatpush.bf16.msra.mxu0 %v911
    %4000 = vmatpush.bf16.msra.mxu0 %v907
    %4001 = vmatpush.bf16.msra.mxu0 %v903
    %4002 = vmatpush.bf16.msra.mxu0 %v899
    %4003 = vmatpush.bf16.msra.mxu0 %v895
    %4004 = vmatpush.bf16.msra.mxu0 %v891
    %4005 = vmatpush.bf16.msra.mxu0 %v887
    %4006 = vmatpush.bf16.msra.mxu0 %v883
    %4007 = vmatmul.bf16.gmra.mxu0 %v3998
    %v4008 = vpop.f32.mrf.mxu0
    %v4009 = vadd.f32 %v97, %v4008
    %v4010 = vpop.f32.mrf.mxu0
    %4011 = vdwg.mxu0
    %4012 = vmatpush.bf16.msra.mxu0 %v943
    %4013 = vmatpush.bf16.msra.mxu0 %v939
    %4014 = vmatpush.bf16.msra.mxu0 %v935
    %4015 = vmatpush.bf16.msra.mxu0 %v931
    %4016 = vmatpush.bf16.msra.mxu0 %v927
    %4017 = vmatpush.bf16.msra.mxu0 %v923
    %4018 = vmatpush.bf16.msra.mxu0 %v919
    %4019 = vmatpush.bf16.msra.mxu0 %v915
    %4020 = vmatmul.bf16.gmra.mxu0 %v3874
    %v4021 = vpop.f32.mrf.mxu0
    %v4022 = vadd.f32 %v4009, %v4021
    %v4023 = vpop.f32.mrf.mxu0
    %4024 = vdwg.mxu0
    %4025 = vmatpush.bf16.msra.mxu0 %v912
    %4026 = vmatpush.bf16.msra.mxu0 %v908
    %4027 = vmatpush.bf16.msra.mxu0 %v904
    %4028 = vmatpush.bf16.msra.mxu0 %v900
    %4029 = vmatpush.bf16.msra.mxu0 %v896
    %4030 = vmatpush.bf16.msra.mxu0 %v892
    %4031 = vmatpush.bf16.msra.mxu0 %v888
    %4032 = vmatpush.bf16.msra.mxu0 %v884
    %4033 = vmatmul.bf16.gmra.mxu0 %v3998
    %v4034 = vpop.f32.mrf.mxu0
    %v4035 = vadd.f32 %v98, %v4034
    %v4036 = vpop.f32.mrf.mxu0
    %4037 = vdwg.mxu0
    %4038 = vmatpush.bf16.msra.mxu0 %v944
    %4039 = vmatpush.bf16.msra.mxu0 %v940
    %4040 = vmatpush.bf16.msra.mxu0 %v936
    %4041 = vmatpush.bf16.msra.mxu0 %v932
    %4042 = vmatpush.bf16.msra.mxu0 %v928
    %4043 = vmatpush.bf16.msra.mxu0 %v924
    %4044 = vmatpush.bf16.msra.mxu0 %v920
    %4045 = vmatpush.bf16.msra.mxu0 %v916
    %4046 = vmatmul.bf16.gmra.mxu0 %v3874
    %v4047 = vpop.f32.mrf.mxu0
    %v4048 = vadd.f32 %v4035, %v4047
    %v4049 = vpop.f32.mrf.mxu0
    %4050 = vdwg.mxu0
    %4051 = vmatpush.bf16.msra.mxu0 %v913
    %4052 = vmatpush.bf16.msra.mxu0 %v909
    %4053 = vmatpush.bf16.msra.mxu0 %v905
    %4054 = vmatpush.bf16.msra.mxu0 %v901
    %4055 = vmatpush.bf16.msra.mxu0 %v897
    %4056 = vmatpush.bf16.msra.mxu0 %v893
    %4057 = vmatpush.bf16.msra.mxu0 %v889
    %4058 = vmatpush.bf16.msra.mxu0 %v885
    %4059 = vmatmul.bf16.gmra.mxu0 %v3998
    %v4060 = vpop.f32.mrf.mxu0
    %v4061 = vadd.f32 %v99, %v4060
    %v4062 = vpop.f32.mrf.mxu0
    %4063 = vdwg.mxu0
    %4064 = vmatpush.bf16.msra.mxu0 %v945
    %4065 = vmatpush.bf16.msra.mxu0 %v941
    %4066 = vmatpush.bf16.msra.mxu0 %v937
    %4067 = vmatpush.bf16.msra.mxu0 %v933
    %4068 = vmatpush.bf16.msra.mxu0 %v929
    %4069 = vmatpush.bf16.msra.mxu0 %v925
    %4070 = vmatpush.bf16.msra.mxu0 %v921
    %4071 = vmatpush.bf16.msra.mxu0 %v917
    %4072 = vmatmul.bf16.gmra.mxu0 %v3874
    %v4073 = vpop.f32.mrf.mxu0
    %v4074 = vadd.f32 %v4061, %v4073
    %v4075 = vpop.f32.mrf.mxu0
    %4076 = vdwg.mxu0
    %4077 = vmatpush.bf16.msra.mxu0 %v914
    %4078 = vmatpush.bf16.msra.mxu0 %v910
    %4079 = vmatpush.bf16.msra.mxu0 %v906
    %4080 = vmatpush.bf16.msra.mxu0 %v902
    %4081 = vmatpush.bf16.msra.mxu0 %v898
    %4082 = vmatpush.bf16.msra.mxu0 %v894
    %4083 = vmatpush.bf16.msra.mxu0 %v890
    %4084 = vmatpush.bf16.msra.mxu0 %v886
    %4085 = vmatmul.bf16.gmra.mxu0 %v3998
    %v4086 = vpop.f32.mrf.mxu0
    %v4087 = vadd.f32 %v100, %v4086
    %v4088 = vpop.f32.mrf.mxu0
    %4089 = vdwg.mxu0
    %4090 = vmatpush.bf16.msra.mxu0 %v946
    %4091 = vmatpush.bf16.msra.mxu0 %v942
    %4092 = vmatpush.bf16.msra.mxu0 %v938
    %4093 = vmatpush.bf16.msra.mxu0 %v934
    %4094 = vmatpush.bf16.msra.mxu0 %v930
    %4095 = vmatpush.bf16.msra.mxu0 %v926
    %4096 = vmatpush.bf16.msra.mxu0 %v922
    %4097 = vmatpush.bf16.msra.mxu0 %v918
    %4098 = vmatmul.bf16.gmra.mxu0 %v3874
    %v4099 = vpop.f32.mrf.mxu0
    %v4100 = vadd.f32 %v4087, %v4099
    %v4101 = vpop.f32.mrf.mxu0
    %4102 = vdwg.mxu0
    %v4103 = vmul.f32 %v4022, 0.5
    %v4104 = vmul.f32 %v4048, 0.5
    %v4105 = vmul.f32 %v4074, 0.5
    %v4106 = vtanh.pop %v4103
    %v4107 = vtanh.pop %v4104
    %v4108 = vtanh.pop %v4105
    %v4109 = vmul.f32 %v4106, 0.5
    %v4110 = vmul.f32 %v4107, 0.5
    %v4111 = vmul.f32 %v4108, 0.5
    %v4112 = vadd.f32 %v4109, 0.5
    %v4113 = vadd.f32 %v4110, 0.5
    %v4114 = vadd.f32 %v4111, 0.5
    %v4115 = vtanh.pop %v4100
    %v4116 = vmul.f32 %v4113, %v3746
    %v4117 = vmul.f32 %v4112, %v4115
    %v4118 = vadd.f32 %v4116, %v4117
    %v4119 = vtanh.pop %v4118
    %v4120 = vmul.f32 %v4114, %v4119
    %v4121 = vpack.c.bf16 %v4120, %v4120
    %v4122 = vpack.c.bf16 %v3997, %v3997
    %4123 = vmatpush.bf16.msra.mxu0 %v1544
    %4124 = vmatpush.bf16.msra.mxu0 %v1540
    %4125 = vmatpush.bf16.msra.mxu0 %v1536
    %4126 = vmatpush.bf16.msra.mxu0 %v1532
    %4127 = vmatpush.bf16.msra.mxu0 %v1528
    %4128 = vmatpush.bf16.msra.mxu0 %v1524
    %4129 = vmatpush.bf16.msra.mxu0 %v1520
    %4130 = vmatpush.bf16.msra.mxu0 %v1516
    %4131 = vmatmul.bf16.gmra.mxu0 %v4121
    %v4132 = vpop.f32.mrf.mxu0
    %v4133 = vadd.f32 %v108, %v4132
    %v4134 = vpop.f32.mrf.mxu0
    %4135 = vdwg.mxu0
    %4136 = vmatpush.bf16.msra.mxu0 %v1576
    %4137 = vmatpush.bf16.msra.mxu0 %v1572
    %4138 = vmatpush.bf16.msra.mxu0 %v1568
    %4139 = vmatpush.bf16.msra.mxu0 %v1564
    %4140 = vmatpush.bf16.msra.mxu0 %v1560
    %4141 = vmatpush.bf16.msra.mxu0 %v1556
    %4142 = vmatpush.bf16.msra.mxu0 %v1552
    %4143 = vmatpush.bf16.msra.mxu0 %v1548
    %4144 = vmatmul.bf16.gmra.mxu0 %v4122
    %v4145 = vpop.f32.mrf.mxu0
    %v4146 = vadd.f32 %v4133, %v4145
    %v4147 = vpop.f32.mrf.mxu0
    %4148 = vdwg.mxu0
    %4149 = vmatpush.bf16.msra.mxu0 %v1545
    %4150 = vmatpush.bf16.msra.mxu0 %v1541
    %4151 = vmatpush.bf16.msra.mxu0 %v1537
    %4152 = vmatpush.bf16.msra.mxu0 %v1533
    %4153 = vmatpush.bf16.msra.mxu0 %v1529
    %4154 = vmatpush.bf16.msra.mxu0 %v1525
    %4155 = vmatpush.bf16.msra.mxu0 %v1521
    %4156 = vmatpush.bf16.msra.mxu0 %v1517
    %4157 = vmatmul.bf16.gmra.mxu0 %v4121
    %v4158 = vpop.f32.mrf.mxu0
    %v4159 = vadd.f32 %v109, %v4158
    %v4160 = vpop.f32.mrf.mxu0
    %4161 = vdwg.mxu0
    %4162 = vmatpush.bf16.msra.mxu0 %v1577
    %4163 = vmatpush.bf16.msra.mxu0 %v1573
    %4164 = vmatpush.bf16.msra.mxu0 %v1569
    %4165 = vmatpush.bf16.msra.mxu0 %v1565
    %4166 = vmatpush.bf16.msra.mxu0 %v1561
    %4167 = vmatpush.bf16.msra.mxu0 %v1557
    %4168 = vmatpush.bf16.msra.mxu0 %v1553
    %4169 = vmatpush.bf16.msra.mxu0 %v1549
    %4170 = vmatmul.bf16.gmra.mxu0 %v4122
    %v4171 = vpop.f32.mrf.mxu0
    %v4172 = vadd.f32 %v4159, %v4171
    %v4173 = vpop.f32.mrf.mxu0
    %4174 = vdwg.mxu0
    %4175 = vmatpush.bf16.msra.mxu0 %v1546
    %4176 = vmatpush.bf16.msra.mxu0 %v1542
    %4177 = vmatpush.bf16.msra.mxu0 %v1538
    %4178 = vmatpush.bf16.msra.mxu0 %v1534
    %4179 = vmatpush.bf16.msra.mxu0 %v1530
    %4180 = vmatpush.bf16.msra.mxu0 %v1526
    %4181 = vmatpush.bf16.msra.mxu0 %v1522
    %4182 = vmatpush.bf16.msra.mxu0 %v1518
    %4183 = vmatmul.bf16.gmra.mxu0 %v4121
    %v4184 = vpop.f32.mrf.mxu0
    %v4185 = vadd.f32 %v110, %v4184
    %v4186 = vpop.f32.mrf.mxu0
    %4187 = vdwg.mxu0
    %4188 = vmatpush.bf16.msra.mxu0 %v1578
    %4189 = vmatpush.bf16.msra.mxu0 %v1574
    %4190 = vmatpush.bf16.msra.mxu0 %v1570
    %4191 = vmatpush.bf16.msra.mxu0 %v1566
    %4192 = vmatpush.bf16.msra.mxu0 %v1562
    %4193 = vmatpush.bf16.msra.mxu0 %v1558
    %4194 = vmatpush.bf16.msra.mxu0 %v1554
    %4195 = vmatpush.bf16.msra.mxu0 %v1550
    %4196 = vmatmul.bf16.gmra.mxu0 %v4122
    %v4197 = vpop.f32.mrf.mxu0
    %v4198 = vadd.f32 %v4185, %v4197
    %v4199 = vpop.f32.mrf.mxu0
    %4200 = vdwg.mxu0
    %4201 = vmatpush.bf16.msra.mxu0 %v1547
    %4202 = vmatpush.bf16.msra.mxu0 %v1543
    %4203 = vmatpush.bf16.msra.mxu0 %v1539
    %4204 = vmatpush.bf16.msra.mxu0 %v1535
    %4205 = vmatpush.bf16.msra.mxu0 %v1531
    %4206 = vmatpush.bf16.msra.mxu0 %v1527
    %4207 = vmatpush.bf16.msra.mxu0 %v1523
    %4208 = vmatpush.bf16.msra.mxu0 %v1519
    %4209 = vmatmul.bf16.gmra.mxu0 %v4121
    %v4210 = vpop.f32.mrf.mxu0
    %v4211 = vadd.f32 %v111, %v4210
    %v4212 = vpop.f32.mrf.mxu0
    %4213 = vdwg.mxu0
    %4214 = vmatpush.bf16.msra.mxu0 %v1579
    %4215 = vmatpush.bf16.msra.mxu0 %v1575
    %4216 = vmatpush.bf16.msra.mxu0 %v1571
    %4217 = vmatpush.bf16.msra.mxu0 %v1567
    %4218 = vmatpush.bf16.msra.mxu0 %v1563
    %4219 = vmatpush.bf16.msra.mxu0 %v1559
    %4220 = vmatpush.bf16.msra.mxu0 %v1555
    %4221 = vmatpush.bf16.msra.mxu0 %v1551
    %4222 = vmatmul.bf16.gmra.mxu0 %v4122
    %v4223 = vpop.f32.mrf.mxu0
    %v4224 = vadd.f32 %v4211, %v4223
    %v4225 = vpop.f32.mrf.mxu0
    %4226 = vdwg.mxu0
    %v4227 = vmul.f32 %v4146, 0.5
    %v4228 = vmul.f32 %v4172, 0.5
    %v4229 = vmul.f32 %v4198, 0.5
    %v4230 = vtanh.pop %v4227
    %v4231 = vtanh.pop %v4228
    %v4232 = vtanh.pop %v4229
    %v4233 = vmul.f32 %v4230, 0.5
    %v4234 = vmul.f32 %v4231, 0.5
    %v4235 = vmul.f32 %v4232, 0.5
    %v4236 = vadd.f32 %v4233, 0.5
    %v4237 = vadd.f32 %v4234, 0.5
    %v4238 = vadd.f32 %v4235, 0.5
    %v4239 = vtanh.pop %v4224
    %v4240 = vmul.f32 %v4237, %v3995
    %v4241 = vmul.f32 %v4236, %v4239
    %v4242 = vadd.f32 %v4240, %v4241
    %v4243 = vtanh.pop %v4242
    %v4244 = vmul.f32 %v4238, %v4243
    %v4245 = vpack.c.bf16 %v4244, %v4244
    %v4246 = vld [vmem:[#allocation8] sm:$0xf]
    %v4247 = vld [vmem:[#allocation8 + $0x4] sm:$0xf]
    %v4248 = vld [vmem:[#allocation8 + $0x8] sm:$0xf]
    %v4249 = vld [vmem:[#allocation8 + $0xc] sm:$0xf]
    %v4250 = vld [vmem:[#allocation8 + $0x10] sm:$0xf]
    %v4251 = vld [vmem:[#allocation8 + $0x14] sm:$0xf]
    %v4252 = vld [vmem:[#allocation8 + $0x18] sm:$0xf]
    %v4253 = vld [vmem:[#allocation8 + $0x1c] sm:$0xf]
    %v4254 = vld [vmem:[#allocation8 + $0x20] sm:$0xf]
    %v4255 = vld [vmem:[#allocation8 + $0x24] sm:$0xf]
    %v4256 = vld [vmem:[#allocation8 + $0x28] sm:$0xf]
    %v4257 = vld [vmem:[#allocation8 + $0x2c] sm:$0xf]
    %v4258 = vld [vmem:[#allocation8 + $0x30] sm:$0xf]
    %v4259 = vld [vmem:[#allocation8 + $0x34] sm:$0xf]
    %v4260 = vld [vmem:[#allocation8 + $0x38] sm:$0xf]
    %v4261 = vld [vmem:[#allocation8 + $0x3c] sm:$0xf]
    %v4262 = vld [vmem:[%s4] sm:$0x1]
    %v4264 = vperm.slane %v4262, 0
    %v4282 = vunpack.c.l.b16 %v4246
    %v4283 = vunpack.c.l.b16 %v4247
    %v4284 = vunpack.c.l.b16 %v4248
    %v4285 = vunpack.c.l.b16 %v4249
    %v4286 = vunpack.c.l.b16 %v4250
    %v4287 = vunpack.c.l.b16 %v4251
    %v4288 = vunpack.c.l.b16 %v4252
    %v4289 = vunpack.c.l.b16 %v4253
    %v4290 = vunpack.c.l.b16 %v4254
    %v4291 = vunpack.c.l.b16 %v4255
    %v4292 = vunpack.c.l.b16 %v4256
    %v4293 = vunpack.c.l.b16 %v4257
    %v4294 = vunpack.c.l.b16 %v4258
    %v4295 = vunpack.c.l.b16 %v4259
    %v4296 = vunpack.c.l.b16 %v4260
    %v4297 = vunpack.c.l.b16 %v4261
    %v4298 = vpack.c.b16 %v4283, %v4282
    %v4299 = vpack.c.b16 %v4285, %v4284
    %v4300 = vpack.c.b16 %v4287, %v4286
    %v4301 = vpack.c.b16 %v4289, %v4288
    %v4302 = vpack.c.b16 %v4291, %v4290
    %v4303 = vpack.c.b16 %v4293, %v4292
    %v4304 = vpack.c.b16 %v4295, %v4294
    %v4305 = vpack.c.b16 %v4297, %v4296
    %4314 = vmatpush.bf16.msra.mxu0 %v4305
    %4315 = vmatpush.bf16.msra.mxu0 %v4304
    %4316 = vmatpush.bf16.msra.mxu0 %v4303
    %4317 = vmatpush.bf16.msra.mxu0 %v4302
    %4318 = vmatpush.bf16.msra.mxu0 %v4301
    %4319 = vmatpush.bf16.msra.mxu0 %v4300
    %4320 = vmatpush.bf16.msra.mxu0 %v4299
    %4321 = vmatpush.bf16.msra.mxu0 %v4298
    %4322 = vmatmul.bf16.gmra.mxu0 %v4245
    %v4323 = vpop.f32.mrf.mxu0
    %v4324 = vadd.f32 %v4264, %v4323
    %v4325 = vpop.f32.mrf.mxu0
    %4326 = vdwg.mxu0
    %4327 = vst [vmem:[#allocation10] sm:$0xff] %v4324
    // Predicated region
    $region38: #{tpu_custom_call.1} parent=1 // pred_check
      _
    $region39: #{tpu_custom_call.1} parent=1 // pred_check_branch
      %4329 = sbr.rel (0) target = $region41
    $region40: #{tpu_custom_call.1} parent=1 // pred_region
      %4331 = vsyncadd [#allocation4], 0
      %s4333 = sshll.u32 [#allocation10], 4
      %s4334 = int_to_ptr.vmem [resolvable:$true] %s4333
      %s4335 = sshll.u32 %s5, 4
      %s4336 = int_to_ptr.hbm [resolvable:$true] %s4335
      %4338 = dma.vmem_to_hbm [thread:$0]  %s4334, 128, %s4336, [#allocation4]
    $region41: #{tpu_custom_call.1} parent=1 // pred_fallthru
      _
    // Predicated region
    $region42: #{tpu_custom_call.1} parent=1 // pred_check
      _
    $region43: #{tpu_custom_call.1} parent=1 // pred_check_branch
      %4340 = sbr.rel (0) target = $region45
    $region44: #{tpu_custom_call.1} parent=1 // pred_region
      %4342 = dma.done [#allocation4], 128
    $region45: #{tpu_custom_call.1} parent=1 // pred_fallthru
      _
    %4343 = vsyncpa [#allocation3], 1
    %4344 = vsyncpa [#allocation6], 1
    %4345 = vsyncpa [#allocation9], 1
    %4346 = vsyncpa [#allocation4], 1

</llo_original>
